<compile_context>
chip_gen: v5e
topology: v5e:2x2
jax: 0.10.0
libtpu: 0.0.40
codegen_flags: <defaults>
</compile_context>

<pallas_src>
import functools

import jax
import jax.numpy as jnp
import numpy as np
from jax.experimental import pallas as pl
from jax.experimental.pallas import tpu as pltpu

NEG_SLOPE = 0.01  # F.leaky_relu default negative_slope


# ---------------------------------------------------------------------------
# Fused Pallas kernel: one (batch, TS-frame chunk) output per grid step
# ---------------------------------------------------------------------------
def _glconv_kernel(x_main_ref, x_prev_ref, x_next_ref, w_ref, mg_ref, ml_ref,
                   o_ref, xpad_ref, col_g_ref, *extra_scratch,
                   C, Cout, W, HW, TS, PAD, fm_sign, shared_all):
    """Fused GLConv for one (n, frame-chunk) grid step.

    x_main_ref : [C, TS*HW]          bf16  the TS frames of this chunk
    x_prev_ref : [C, HW]             bf16  frame s0-1 (clamped index)
    x_next_ref : [C, HW]             bf16  frame s0+TS (clamped index)
    w_ref      : [3, 2*Cout, 9*C]    bf16  per-kh bands, [global; local] stacked
    mg_ref     : [9, HW]             f32   global-conv spatial tap masks
    ml_ref     : [9, HW]             f32   local-conv spatial tap masks
    o_ref      : [Cout, TS*OW]             OW = HW, or 2*HW when fm_sign
    xpad_ref   : [(TS+2)*C, HW+2*PAD] bf16 scratch, lane-padded frame stack
    col_g_ref  : [9*C, TS*HW]        bf16  scratch, one im2col kh-band
    extra_scratch: (col_l_ref,) only when the local conv needs its own bands.
    """
    col_l_ref = col_g_ref if shared_all else extra_scratch[0]
    chunk = pl.program_id(1)
    n_chunks = pl.num_programs(1)
    f32 = jnp.float32

    # ---- Stage frames into the lane-padded stack (band f <-> frame s0+f-1).
    # Only the interiors are written; the PAD margins stay uninitialized and
    # are discarded by the selects below (never read into the result).
    for t in range(TS):
        xpad_ref[pl.ds((t + 1) * C, C), pl.ds(PAD, HW)] = \
            x_main_ref[:, pl.ds(t * HW, HW)]

    @pl.when(chunk == 0)                            # depth zero-pad (front)
    def _():
        xpad_ref[pl.ds(0, C), pl.ds(PAD, HW)] = jnp.zeros((C, HW),
                                                          xpad_ref.dtype)

    @pl.when(chunk > 0)
    def _():
        xpad_ref[pl.ds(0, C), pl.ds(PAD, HW)] = x_prev_ref[...]

    @pl.when(chunk == n_chunks - 1)                 # depth zero-pad (back)
    def _():
        xpad_ref[pl.ds((TS + 1) * C, C), pl.ds(PAD, HW)] = \
            jnp.zeros((C, HW), xpad_ref.dtype)

    @pl.when(chunk < n_chunks - 1)
    def _():
        xpad_ref[pl.ds((TS + 1) * C, C), pl.ds(PAD, HW)] = x_next_ref[...]

    # ---- Banded im2col + matmuls: one 9*C-row band per kh.
    acc_g = None
    acc_l = None
    for kh in range(3):
        # kh == 1 has dh == 0, so the H-chunk (local) mask equals the global
        # mask; with halving == 0 every band is shared.
        shared = shared_all or kh == 1
        for kw in range(3):
            tap = kh * 3 + kw
            d = (kh - 1) * W + (kw - 1)
            m_g = mg_ref[pl.ds(tap, 1), :] > 0.5            # [1, HW] bool
            m_l = None if shared else (ml_ref[pl.ds(tap, 1), :] > 0.5)
            for t in range(TS):
                # Shifted window for output frame t: rows are (ks, ci) of the
                # frames s0+t-1 .. s0+t+1, already contiguous in xpad.
                win = xpad_ref[pl.ds(t * C, 3 * C), pl.ds(PAD + d, HW)]
                col_g_ref[pl.ds(kw * 3 * C, 3 * C), pl.ds(t * HW, HW)] = \
                    jnp.where(m_g, win, 0)
                if not shared:
                    col_l_ref[pl.ds(kw * 3 * C, 3 * C), pl.ds(t * HW, HW)] = \
                        jnp.where(m_l, win, 0)

        w_band = w_ref[kh]                                   # [2*Cout, 9*C]
        if shared:
            r = jnp.dot(w_band, col_g_ref[...], preferred_element_type=f32)
            part_g, part_l = r[:Cout, :], r[Cout:, :]
        else:
            part_g = jnp.dot(w_band[:Cout, :], col_g_ref[...],
                             preferred_element_type=f32)
            part_l = jnp.dot(w_band[Cout:, :], col_l_ref[...],
                             preferred_element_type=f32)
        acc_g = part_g if acc_g is None else acc_g + part_g
        acc_l = part_l if acc_l is None else acc_l + part_l

    # ---- Fused leaky_relu epilogue (+ add, or the H-concat for fm_sign).
    def lrelu(v):
        return jnp.where(v >= 0, v, NEG_SLOPE * v)

    out_g = lrelu(acc_g)
    out_l = lrelu(acc_l)
    if fm_sign:
        # TODO(synk): if HW % 128 != 0 the local-half store is a masked,
        # lane-unaligned vst; pad HW to a 128 multiple (or emit two outputs)
        # for those shapes.
        for t in range(TS):
            o_ref[:, pl.ds(2 * t * HW, HW)] = \
                out_g[:, t * HW:(t + 1) * HW].astype(o_ref.dtype)
            o_ref[:, pl.ds(2 * t * HW + HW, HW)] = \
                out_l[:, t * HW:(t + 1) * HW].astype(o_ref.dtype)
    else:
        o_ref[...] = (out_g + out_l).astype(o_ref.dtype)


# ---------------------------------------------------------------------------
# Wrapper
# ---------------------------------------------------------------------------
def _build_masks(H, W, split):
    """0/1 masks [9, H*W]: 1 iff the (kh-1, kw-1)-shifted sample stays inside
    the (possibly H-chunked) zero-padded frame."""
    hh = np.arange(H * W) // W
    ww = np.arange(H * W) % W
    masks = np.zeros((9, H * W), np.float32)
    for kh in range(3):
        for kw in range(3):
            dh, dw = kh - 1, kw - 1
            ok_w = (ww + dw >= 0) & (ww + dw < W)
            ok_h = ((hh % split) + dh >= 0) & ((hh % split) + dh < split)
            masks[kh * 3 + kw] = (ok_w & ok_h).astype(np.float32)
    return jnp.asarray(masks)


@functools.partial(jax.jit,
                   static_argnames=("halving", "fm_sign", "out_dtype", "ts_max"))
def glconv_forward(x, w_global, w_local, *, halving, fm_sign,
                   out_dtype=jnp.bfloat16, ts_max=4):
    """x: [n, c, s, h, w] (PyTorch NCDHW); weights: [cout, cin, 3, 3, 3]."""
    N, C, S, H, W = x.shape
    Cout = w_global.shape[0]
    HW = H * W
    PAD = ((W + 1 + 127) // 128) * 128       # lane padding for the tap windows
    cdt = jnp.bfloat16                       # MXU operand dtype (f32 accumulate)
    out_dt = jnp.dtype(out_dtype)

    if halving == 0:
        split = H
    else:
        # TODO(synk): torch.split also supports a ragged last chunk; here H
        # must divide evenly (true for the GaitGL configs).
        assert H % (2 ** halving) == 0, "H must be divisible by 2**halving"
        split = H // (2 ** halving)
    shared_all = (split == H)                # local masks == global masks

    OW = 2 * HW if fm_sign else HW

    # ---- Pick TS (frames per grid step) against an explicit VMEM budget.
    def vmem_bytes(ts):
        n_col = 1 if shared_all else 2
        col = n_col * 9 * C * ts * HW * 2                      # im2col bands
        xpad = (ts + 2) * C * (HW + 2 * PAD) * 2               # frame stack
        acc = 2 * Cout * ts * HW * 4                           # f32 accumulators
        blocks = 2 * (C * ts * HW * 2                          # main frames
                      + 2 * C * HW * 2                         # halo frames
                      + Cout * ts * OW * out_dt.itemsize       # output block
                      + 3 * 2 * Cout * 9 * C * 2               # weights
                      + 2 * 9 * HW * 4)                        # masks
        return col + xpad + acc + blocks

    budget = 40 * 1024 * 1024       # keeps deep layers inside v7x's 64 MiB VMEM
    TS = 1
    for cand in range(min(ts_max, S), 0, -1):
        if S % cand == 0 and vmem_bytes(cand) <= budget:
            TS = cand
            break
    n_chunks = S // TS
    vmem_limit = int(min(max(vmem_bytes(TS) * 1.3 + (2 << 20), 32 << 20),
                         96 << 20))

    # Free reshapes only (no transpose / pad): the trailing singleton keeps the
    # last-two block dims at full extent; the minor dim stays lane-dense.
    x_cast = x.astype(cdt)
    x_main = x_cast.reshape(N, C, n_chunks, 1, TS * HW)
    x_frames = x_cast.reshape(N, C, S, 1, HW)

    # [Cout, Cin, ks, kh, kw] -> per-kh bands with (kw, ks, ci) row ordering,
    # then stack [global; local] along Cout (one operand, better MXU M fill).
    def band_mat(w):
        return jnp.transpose(w, (3, 0, 4, 2, 1)).reshape(3, Cout,
                                                         9 * C).astype(cdt)
    w_stack = jnp.concatenate([band_mat(w_global), band_mat(w_local)], axis=1)

    mask_g = _build_masks(H, W, H)        # global conv: full-H zero padding
    mask_l = _build_masks(H, W, split)    # local conv: per-chunk zero padding

    kernel = functools.partial(
        _glconv_kernel, C=C, Cout=Cout, W=W, HW=HW, TS=TS, PAD=PAD,
        fm_sign=fm_sign, shared_all=shared_all)

    in_specs = [
        # TS frames of this chunk, read once (read amplification (TS+2)/TS).
        pl.BlockSpec((None, C, None, None, TS * HW),
                     lambda n, c: (n, 0, c, 0, 0)),
        # Depth halo s0-1 (clamped; zeroed in-kernel on the first chunk).
        pl.BlockSpec((None, C, None, None, HW),
                     lambda n, c: (n, 0, jnp.maximum(c * TS - 1, 0), 0, 0)),
        # Depth halo s0+TS (clamped; zeroed in-kernel on the last chunk).
        pl.BlockSpec((None, C, None, None, HW),
                     lambda n, c: (n, 0, jnp.minimum(c * TS + TS, S - 1), 0, 0)),
        pl.BlockSpec((3, 2 * Cout, 9 * C), lambda n, c: (0, 0, 0)),
        pl.BlockSpec((9, HW), lambda n, c: (0, 0)),
        pl.BlockSpec((9, HW), lambda n, c: (0, 0)),
    ]
    scratch_shapes = [
        pltpu.VMEM(((TS + 2) * C, HW + 2 * PAD), cdt),   # padded frame stack
        pltpu.VMEM((9 * C, TS * HW), cdt),               # im2col band (shared/global)
    ]
    if not shared_all:
        scratch_shapes.append(pltpu.VMEM((9 * C, TS * HW), cdt))  # local band

    out = pl.pallas_call(
        kernel,
        out_shape=jax.ShapeDtypeStruct((N, Cout, n_chunks, 1, TS * OW), out_dt),
        grid_spec=pltpu.PrefetchScalarGridSpec(
            num_scalar_prefetch=0,
            grid=(N, n_chunks),
            in_specs=in_specs,
            out_specs=pl.BlockSpec((None, Cout, None, None, TS * OW),
                                   lambda n, c: (n, 0, c, 0, 0)),
            scratch_shapes=scratch_shapes,
        ),
        compiler_params=pltpu.CompilerParams(
            dimension_semantics=("parallel", "parallel"),
            vmem_limit_bytes=vmem_limit,
        ),
    )(x_main, x_frames, x_frames, w_stack, mask_g, mask_l)

    out_h = 2 * H if fm_sign else H
    return out.reshape(N, Cout, S, out_h, W)   # free reshape, PyTorch layout


# ---------------------------------------------------------------------------
# Module (parameters + forward glue)
# ---------------------------------------------------------------------------
class GLConvPallas:
    """Pallas TPU re-implementation of GaitGL's GLConv (forward only)."""

    def __init__(self, in_channels, out_channels, halving, fm_sign=False, *, key):
        self.halving = halving
        self.fm_sign = fm_sign
        self.in_channels = in_channels
        self.out_channels = out_channels
        kg, kl = jax.random.split(key)
        fan_in = in_channels * 27
        bound = 1.0 / (fan_in ** 0.5)
        wshape = (out_channels, in_channels, 3, 3, 3)   # PyTorch OIDHW, bias=False
        self.w_global = jax.random.uniform(kg, wshape, jnp.float32, -bound, bound)
        self.w_local = jax.random.uniform(kl, wshape, jnp.float32, -bound, bound)

    def __call__(self, x):
        return glconv_forward(x, self.w_global, self.w_local,
                              halving=self.halving, fm_sign=self.fm_sign)


# ---------------------------------------------------------------------------
# Pure-JAX reference (same semantics as the PyTorch module)
# ---------------------------------------------------------------------------
def _ref_conv3d(x, w):
    return jax.lax.conv_general_dilated(
        x, w, window_strides=(1, 1, 1),
        padding=((1, 1), (1, 1), (1, 1)),
        dimension_numbers=("NCDHW", "OIDHW", "NCDHW"),
        precision=jax.lax.Precision.HIGHEST)


def ref_glconv(x, wg, wl, halving, fm_sign):
    def lrelu(v):
        return jnp.where(v >= 0, v, NEG_SLOPE * v)

    gob = _ref_conv3d(x, wg)
    if halving == 0:
        lcl = _ref_conv3d(x, wl)
    else:
        chunks = jnp.split(x, 2 ** halving, axis=3)
        lcl = jnp.concatenate([_ref_conv3d(c, wl) for c in chunks], axis=3)
    if not fm_sign:
        return lrelu(gob) + lrelu(lcl)
    return lrelu(jnp.concatenate([gob, lcl], axis=3))


# ---------------------------------------------------------------------------
if __name__ == "__main__":
    key = jax.random.PRNGKey(0)
    N, C, OUT_C, H, W = 2, 4, 8, 16, 16

    configs = [
        dict(halving=1, fm_sign=False, S=12),  # TS=4 chunking, interior chunk
        dict(halving=2, fm_sign=True,  S=8),   # fm_sign H-concat path
        dict(halving=0, fm_sign=False, S=5),   # fully-shared im2col, TS=1 path
    ]
    for i, cfg in enumerate(configs):
        kx, kwt = jax.random.split(jax.random.fold_in(key, i))
        x = jax.random.normal(kx, (N, C, cfg["S"], H, W), jnp.float32)
        mod = GLConvPallas(C, OUT_C, cfg["halving"], cfg["fm_sign"], key=kwt)

        out = jax.block_until_ready(mod(x))
        ref = ref_glconv(x, mod.w_global, mod.w_local,
                         cfg["halving"], cfg["fm_sign"])
        assert out.shape == ref.shape, (cfg, out.shape, ref.shape)
        err = float(jnp.max(jnp.abs(out.astype(jnp.float32) - ref)))
        scale = float(jnp.max(jnp.abs(ref))) + 1e-6
        assert err / scale < 2e-2, f"{cfg}: rel err {err / scale}"

    print("KERNEL_OK")
</pallas_src>

<mosaic_0001>
module attributes {stable_mosaic.version = 11 : i64} {
  func.func @_glconv_kernel(%arg0: i32, %arg1: i32, %arg2: memref<1x4x1x1x1024xbf16, #tpu.memory_space<vmem>>, %arg3: memref<1x4x1x1x256xbf16, #tpu.memory_space<vmem>>, %arg4: memref<1x4x1x1x256xbf16, #tpu.memory_space<vmem>>, %arg5: memref<3x16x36xbf16, #tpu.memory_space<vmem>>, %arg6: memref<9x256xf32, #tpu.memory_space<vmem>>, %arg7: memref<9x256xf32, #tpu.memory_space<vmem>>, %arg8: memref<1x8x1x1x1024xbf16, #tpu.memory_space<vmem>>, %arg9: memref<24x512xbf16, #tpu.memory_space<vmem>>, %arg10: memref<36x1024xbf16, #tpu.memory_space<vmem>>, %arg11: memref<36x1024xbf16, #tpu.memory_space<vmem>>) attributes {dimension_semantics = [#tpu.dimension_semantics<parallel>, #tpu.dimension_semantics<parallel>], iteration_bounds = array<i64: 2, 3>, scalar_prefetch = 0 : i64, scratch_operands = 3 : i64, tpu.core_type = #tpu.core_type<tc>, window_params = [{transform_indices = @transform_0, window_bounds = array<i64: 1, 4, 1, 1, 1024>}, {transform_indices = @transform_1, window_bounds = array<i64: 1, 4, 1, 1, 256>}, {transform_indices = @transform_2, window_bounds = array<i64: 1, 4, 1, 1, 256>}, {pipeline_mode = #tpu.pipeline_mode<synchronous>, transform_indices = @transform_3, window_bounds = array<i64: 3, 16, 36>}, {pipeline_mode = #tpu.pipeline_mode<synchronous>, transform_indices = @transform_4, window_bounds = array<i64: 9, 256>}, {pipeline_mode = #tpu.pipeline_mode<synchronous>, transform_indices = @transform_5, window_bounds = array<i64: 9, 256>}, {transform_indices = @transform_6, window_bounds = array<i64: 1, 8, 1, 1, 1024>}]} {
    %c0 = arith.constant 0 : index
    %c0_0 = arith.constant 0 : index
    %c0_1 = arith.constant 0 : index
    %c0_2 = arith.constant 0 : index
    %c0_3 = arith.constant 0 : index
    %0 = vector.load %arg2[%c0, %c0_0, %c0_1, %c0_2, %c0_3] : memref<1x4x1x1x1024xbf16, #tpu.memory_space<vmem>>, vector<1x4x1x1x256xbf16>
    %1 = vector.shape_cast %0 : vector<1x4x1x1x256xbf16> to vector<4x256xbf16>
    %c4 = arith.constant 4 : index
    %c128 = arith.constant 128 : index
    %2 = vector.load %arg9[%c4, %c128] : memref<24x512xbf16, #tpu.memory_space<vmem>>, vector<4x256xbf16>
    tpu.vector_store %arg9[%c4, %c128], %1 {strides = array<i32>} : memref<24x512xbf16, #tpu.memory_space<vmem>>, vector<4x256xbf16>,
    %c0_4 = arith.constant 0 : index
    %c0_5 = arith.constant 0 : index
    %c0_6 = arith.constant 0 : index
    %c0_7 = arith.constant 0 : index
    %c256 = arith.constant 256 : index
    %3 = vector.load %arg2[%c0_4, %c0_5, %c0_6, %c0_7, %c256] : memref<1x4x1x1x1024xbf16, #tpu.memory_space<vmem>>, vector<1x4x1x1x256xbf16>
    %4 = vector.shape_cast %3 : vector<1x4x1x1x256xbf16> to vector<4x256xbf16>
    %c8 = arith.constant 8 : index
    %c128_8 = arith.constant 128 : index
    %5 = vector.load %arg9[%c8, %c128_8] : memref<24x512xbf16, #tpu.memory_space<vmem>>, vector<4x256xbf16>
    tpu.vector_store %arg9[%c8, %c128_8], %4 {strides = array<i32>} : memref<24x512xbf16, #tpu.memory_space<vmem>>, vector<4x256xbf16>,
    %c0_9 = arith.constant 0 : index
    %c0_10 = arith.constant 0 : index
    %c0_11 = arith.constant 0 : index
    %c0_12 = arith.constant 0 : index
    %c512 = arith.constant 512 : index
    %6 = vector.load %arg2[%c0_9, %c0_10, %c0_11, %c0_12, %c512] : memref<1x4x1x1x1024xbf16, #tpu.memory_space<vmem>>, vector<1x4x1x1x256xbf16>
    %7 = vector.shape_cast %6 : vector<1x4x1x1x256xbf16> to vector<4x256xbf16>
    %c12 = arith.constant 12 : index
    %c128_13 = arith.constant 128 : index
    %8 = vector.load %arg9[%c12, %c128_13] : memref<24x512xbf16, #tpu.memory_space<vmem>>, vector<4x256xbf16>
    tpu.vector_store %arg9[%c12, %c128_13], %7 {strides = array<i32>} : memref<24x512xbf16, #tpu.memory_space<vmem>>, vector<4x256xbf16>,
    %c0_14 = arith.constant 0 : index
    %c0_15 = arith.constant 0 : index
    %c0_16 = arith.constant 0 : index
    %c0_17 = arith.constant 0 : index
    %c768 = arith.constant 768 : index
    %9 = vector.load %arg2[%c0_14, %c0_15, %c0_16, %c0_17, %c768] : memref<1x4x1x1x1024xbf16, #tpu.memory_space<vmem>>, vector<1x4x1x1x256xbf16>
    %10 = vector.shape_cast %9 : vector<1x4x1x1x256xbf16> to vector<4x256xbf16>
    %c16 = arith.constant 16 : index
    %c128_18 = arith.constant 128 : index
    %11 = vector.load %arg9[%c16, %c128_18] : memref<24x512xbf16, #tpu.memory_space<vmem>>, vector<4x256xbf16>
    tpu.vector_store %arg9[%c16, %c128_18], %10 {strides = array<i32>} : memref<24x512xbf16, #tpu.memory_space<vmem>>, vector<4x256xbf16>,
    %c0_i32 = arith.constant 0 : i32
    %12 = arith.cmpi eq, %arg1, %c0_i32 : i32
    %13 = arith.extui %12 : i1 to i32
    %c0_i32_19 = arith.constant 0 : i32
    %14 = arith.cmpi ne, %13, %c0_i32_19 : i32
    scf.if %14 {
      %cst_339 = arith.constant 0.000000e+00 : bf16
      %506 = vector.broadcast %cst_339 : bf16 to vector<4x256xbf16>
      %c0_340 = arith.constant 0 : index
      %c128_341 = arith.constant 128 : index
      %507 = vector.load %arg9[%c0_340, %c128_341] : memref<24x512xbf16, #tpu.memory_space<vmem>>, vector<4x256xbf16>
      tpu.vector_store %arg9[%c0_340, %c128_341], %506 {strides = array<i32>} : memref<24x512xbf16, #tpu.memory_space<vmem>>, vector<4x256xbf16>,
    } else {
    }
    %c0_i32_20 = arith.constant 0 : i32
    %15 = arith.cmpi sgt, %arg1, %c0_i32_20 : i32
    %16 = arith.extui %15 : i1 to i32
    %c0_i32_21 = arith.constant 0 : i32
    %17 = arith.cmpi ne, %16, %c0_i32_21 : i32
    scf.if %17 {
      %c0_339 = arith.constant 0 : index
      %c0_340 = arith.constant 0 : index
      %c0_341 = arith.constant 0 : index
      %c0_342 = arith.constant 0 : index
      %c0_343 = arith.constant 0 : index
      %506 = vector.load %arg3[%c0_339, %c0_340, %c0_341, %c0_342, %c0_343] : memref<1x4x1x1x256xbf16, #tpu.memory_space<vmem>>, vector<1x4x1x1x256xbf16>
      %507 = vector.shape_cast %506 : vector<1x4x1x1x256xbf16> to vector<4x256xbf16>
      %c0_344 = arith.constant 0 : index
      %c128_345 = arith.constant 128 : index
      %508 = vector.load %arg9[%c0_344, %c128_345] : memref<24x512xbf16, #tpu.memory_space<vmem>>, vector<4x256xbf16>
      tpu.vector_store %arg9[%c0_344, %c128_345], %507 {strides = array<i32>} : memref<24x512xbf16, #tpu.memory_space<vmem>>, vector<4x256xbf16>,
    } else {
    }
    %c2_i32 = arith.constant 2 : i32
    %18 = arith.cmpi eq, %arg1, %c2_i32 : i32
    %19 = arith.extui %18 : i1 to i32
    %c0_i32_22 = arith.constant 0 : i32
    %20 = arith.cmpi ne, %19, %c0_i32_22 : i32
    scf.if %20 {
      %cst_339 = arith.constant 0.000000e+00 : bf16
      %506 = vector.broadcast %cst_339 : bf16 to vector<4x256xbf16>
      %c20 = arith.constant 20 : index
      %c128_340 = arith.constant 128 : index
      %507 = vector.load %arg9[%c20, %c128_340] : memref<24x512xbf16, #tpu.memory_space<vmem>>, vector<4x256xbf16>
      tpu.vector_store %arg9[%c20, %c128_340], %506 {strides = array<i32>} : memref<24x512xbf16, #tpu.memory_space<vmem>>, vector<4x256xbf16>,
    } else {
    }
    %c2_i32_23 = arith.constant 2 : i32
    %21 = arith.cmpi slt, %arg1, %c2_i32_23 : i32
    %22 = arith.extui %21 : i1 to i32
    %c0_i32_24 = arith.constant 0 : i32
    %23 = arith.cmpi ne, %22, %c0_i32_24 : i32
    scf.if %23 {
      %c0_339 = arith.constant 0 : index
      %c0_340 = arith.constant 0 : index
      %c0_341 = arith.constant 0 : index
      %c0_342 = arith.constant 0 : index
      %c0_343 = arith.constant 0 : index
      %506 = vector.load %arg4[%c0_339, %c0_340, %c0_341, %c0_342, %c0_343] : memref<1x4x1x1x256xbf16, #tpu.memory_space<vmem>>, vector<1x4x1x1x256xbf16>
      %507 = vector.shape_cast %506 : vector<1x4x1x1x256xbf16> to vector<4x256xbf16>
      %c20 = arith.constant 20 : index
      %c128_344 = arith.constant 128 : index
      %508 = vector.load %arg9[%c20, %c128_344] : memref<24x512xbf16, #tpu.memory_space<vmem>>, vector<4x256xbf16>
      tpu.vector_store %arg9[%c20, %c128_344], %507 {strides = array<i32>} : memref<24x512xbf16, #tpu.memory_space<vmem>>, vector<4x256xbf16>,
    } else {
    }
    %c0_25 = arith.constant 0 : index
    %c0_26 = arith.constant 0 : index
    %24 = vector.load %arg6[%c0_25, %c0_26] : memref<9x256xf32, #tpu.memory_space<vmem>>, vector<1x256xf32>
    %cst = arith.constant 5.000000e-01 : f32
    %25 = vector.broadcast %cst : f32 to vector<1x256xf32>
    %26 = arith.cmpf ogt, %24, %25 : vector<1x256xf32>
    %c0_27 = arith.constant 0 : index
    %c0_28 = arith.constant 0 : index
    %27 = vector.load %arg7[%c0_27, %c0_28] : memref<9x256xf32, #tpu.memory_space<vmem>>, vector<1x256xf32>
    %cst_29 = arith.constant 5.000000e-01 : f32
    %28 = vector.broadcast %cst_29 : f32 to vector<1x256xf32>
    %29 = arith.cmpf ogt, %27, %28 : vector<1x256xf32>
    %c0_30 = arith.constant 0 : index
    %c111 = arith.constant 111 : index
    %30 = vector.load %arg9[%c0_30, %c111] : memref<24x512xbf16, #tpu.memory_space<vmem>>, vector<12x256xbf16>
    %c0_i32_31 = arith.constant 0 : i32
    %31 = arith.sitofp %c0_i32_31 : i32 to bf16
    %32 = vector.shape_cast %26 : vector<1x256xi1> to vector<1x256xi1>
    %33 = vector.broadcast %32 : vector<1x256xi1> to vector<12x256xi1>
    %34 = vector.broadcast %31 : bf16 to vector<12x256xbf16>
    %35 = arith.select %33, %30, %34 : vector<12x256xi1>, vector<12x256xbf16>
    %c0_32 = arith.constant 0 : index
    %c0_33 = arith.constant 0 : index
    %36 = vector.load %arg10[%c0_32, %c0_33] : memref<36x1024xbf16, #tpu.memory_space<vmem>>, vector<12x256xbf16>
    tpu.vector_store %arg10[%c0_32, %c0_33], %35 {strides = array<i32>} : memref<36x1024xbf16, #tpu.memory_space<vmem>>, vector<12x256xbf16>,
    %c0_i32_34 = arith.constant 0 : i32
    %37 = arith.sitofp %c0_i32_34 : i32 to bf16
    %38 = vector.shape_cast %29 : vector<1x256xi1> to vector<1x256xi1>
    %39 = vector.broadcast %38 : vector<1x256xi1> to vector<12x256xi1>
    %40 = vector.broadcast %37 : bf16 to vector<12x256xbf16>
    %41 = arith.select %39, %30, %40 : vector<12x256xi1>, vector<12x256xbf16>
    %c0_35 = arith.constant 0 : index
    %c0_36 = arith.constant 0 : index
    %42 = vector.load %arg11[%c0_35, %c0_36] : memref<36x1024xbf16, #tpu.memory_space<vmem>>, vector<12x256xbf16>
    tpu.vector_store %arg11[%c0_35, %c0_36], %41 {strides = array<i32>} : memref<36x1024xbf16, #tpu.memory_space<vmem>>, vector<12x256xbf16>,
    %c4_37 = arith.constant 4 : index
    %c111_38 = arith.constant 111 : index
    %43 = vector.load %arg9[%c4_37, %c111_38] : memref<24x512xbf16, #tpu.memory_space<vmem>>, vector<12x256xbf16>
    %c0_i32_39 = arith.constant 0 : i32
    %44 = arith.sitofp %c0_i32_39 : i32 to bf16
    %45 = vector.shape_cast %26 : vector<1x256xi1> to vector<1x256xi1>
    %46 = vector.broadcast %45 : vector<1x256xi1> to vector<12x256xi1>
    %47 = vector.broadcast %44 : bf16 to vector<12x256xbf16>
    %48 = arith.select %46, %43, %47 : vector<12x256xi1>, vector<12x256xbf16>
    %c0_40 = arith.constant 0 : index
    %c256_41 = arith.constant 256 : index
    %49 = vector.load %arg10[%c0_40, %c256_41] : memref<36x1024xbf16, #tpu.memory_space<vmem>>, vector<12x256xbf16>
    tpu.vector_store %arg10[%c0_40, %c256_41], %48 {strides = array<i32>} : memref<36x1024xbf16, #tpu.memory_space<vmem>>, vector<12x256xbf16>,
    %c0_i32_42 = arith.constant 0 : i32
    %50 = arith.sitofp %c0_i32_42 : i32 to bf16
    %51 = vector.shape_cast %29 : vector<1x256xi1> to vector<1x256xi1>
    %52 = vector.broadcast %51 : vector<1x256xi1> to vector<12x256xi1>
    %53 = vector.broadcast %50 : bf16 to vector<12x256xbf16>
    %54 = arith.select %52, %43, %53 : vector<12x256xi1>, vector<12x256xbf16>
    %c0_43 = arith.constant 0 : index
    %c256_44 = arith.constant 256 : index
    %55 = vector.load %arg11[%c0_43, %c256_44] : memref<36x1024xbf16, #tpu.memory_space<vmem>>, vector<12x256xbf16>
    tpu.vector_store %arg11[%c0_43, %c256_44], %54 {strides = array<i32>} : memref<36x1024xbf16, #tpu.memory_space<vmem>>, vector<12x256xbf16>,
    %c8_45 = arith.constant 8 : index
    %c111_46 = arith.constant 111 : index
    %56 = vector.load %arg9[%c8_45, %c111_46] : memref<24x512xbf16, #tpu.memory_space<vmem>>, vector<12x256xbf16>
    %c0_i32_47 = arith.constant 0 : i32
    %57 = arith.sitofp %c0_i32_47 : i32 to bf16
    %58 = vector.shape_cast %26 : vector<1x256xi1> to vector<1x256xi1>
    %59 = vector.broadcast %58 : vector<1x256xi1> to vector<12x256xi1>
    %60 = vector.broadcast %57 : bf16 to vector<12x256xbf16>
    %61 = arith.select %59, %56, %60 : vector<12x256xi1>, vector<12x256xbf16>
    %c0_48 = arith.constant 0 : index
    %c512_49 = arith.constant 512 : index
    %62 = vector.load %arg10[%c0_48, %c512_49] : memref<36x1024xbf16, #tpu.memory_space<vmem>>, vector<12x256xbf16>
    tpu.vector_store %arg10[%c0_48, %c512_49], %61 {strides = array<i32>} : memref<36x1024xbf16, #tpu.memory_space<vmem>>, vector<12x256xbf16>,
    %c0_i32_50 = arith.constant 0 : i32
    %63 = arith.sitofp %c0_i32_50 : i32 to bf16
    %64 = vector.shape_cast %29 : vector<1x256xi1> to vector<1x256xi1>
    %65 = vector.broadcast %64 : vector<1x256xi1> to vector<12x256xi1>
    %66 = vector.broadcast %63 : bf16 to vector<12x256xbf16>
    %67 = arith.select %65, %56, %66 : vector<12x256xi1>, vector<12x256xbf16>
    %c0_51 = arith.constant 0 : index
    %c512_52 = arith.constant 512 : index
    %68 = vector.load %arg11[%c0_51, %c512_52] : memref<36x1024xbf16, #tpu.memory_space<vmem>>, vector<12x256xbf16>
    tpu.vector_store %arg11[%c0_51, %c512_52], %67 {strides = array<i32>} : memref<36x1024xbf16, #tpu.memory_space<vmem>>, vector<12x256xbf16>,
    %c12_53 = arith.constant 12 : index
    %c111_54 = arith.constant 111 : index
    %69 = vector.load %arg9[%c12_53, %c111_54] : memref<24x512xbf16, #tpu.memory_space<vmem>>, vector<12x256xbf16>
    %c0_i32_55 = arith.constant 0 : i32
    %70 = arith.sitofp %c0_i32_55 : i32 to bf16
    %71 = vector.shape_cast %26 : vector<1x256xi1> to vector<1x256xi1>
    %72 = vector.broadcast %71 : vector<1x256xi1> to vector<12x256xi1>
    %73 = vector.broadcast %70 : bf16 to vector<12x256xbf16>
    %74 = arith.select %72, %69, %73 : vector<12x256xi1>, vector<12x256xbf16>
    %c0_56 = arith.constant 0 : index
    %c768_57 = arith.constant 768 : index
    %75 = vector.load %arg10[%c0_56, %c768_57] : memref<36x1024xbf16, #tpu.memory_space<vmem>>, vector<12x256xbf16>
    tpu.vector_store %arg10[%c0_56, %c768_57], %74 {strides = array<i32>} : memref<36x1024xbf16, #tpu.memory_space<vmem>>, vector<12x256xbf16>,
    %c0_i32_58 = arith.constant 0 : i32
    %76 = arith.sitofp %c0_i32_58 : i32 to bf16
    %77 = vector.shape_cast %29 : vector<1x256xi1> to vector<1x256xi1>
    %78 = vector.broadcast %77 : vector<1x256xi1> to vector<12x256xi1>
    %79 = vector.broadcast %76 : bf16 to vector<12x256xbf16>
    %80 = arith.select %78, %69, %79 : vector<12x256xi1>, vector<12x256xbf16>
    %c0_59 = arith.constant 0 : index
    %c768_60 = arith.constant 768 : index
    %81 = vector.load %arg11[%c0_59, %c768_60] : memref<36x1024xbf16, #tpu.memory_space<vmem>>, vector<12x256xbf16>
    tpu.vector_store %arg11[%c0_59, %c768_60], %80 {strides = array<i32>} : memref<36x1024xbf16, #tpu.memory_space<vmem>>, vector<12x256xbf16>,
    %c1 = arith.constant 1 : index
    %c0_61 = arith.constant 0 : index
    %82 = vector.load %arg6[%c1, %c0_61] : memref<9x256xf32, #tpu.memory_space<vmem>>, vector<1x256xf32>
    %cst_62 = arith.constant 5.000000e-01 : f32
    %83 = vector.broadcast %cst_62 : f32 to vector<1x256xf32>
    %84 = arith.cmpf ogt, %82, %83 : vector<1x256xf32>
    %c1_63 = arith.constant 1 : index
    %c0_64 = arith.constant 0 : index
    %85 = vector.load %arg7[%c1_63, %c0_64] : memref<9x256xf32, #tpu.memory_space<vmem>>, vector<1x256xf32>
    %cst_65 = arith.constant 5.000000e-01 : f32
    %86 = vector.broadcast %cst_65 : f32 to vector<1x256xf32>
    %87 = arith.cmpf ogt, %85, %86 : vector<1x256xf32>
    %c0_66 = arith.constant 0 : index
    %c112 = arith.constant 112 : index
    %88 = vector.load %arg9[%c0_66, %c112] : memref<24x512xbf16, #tpu.memory_space<vmem>>, vector<12x256xbf16>
    %c0_i32_67 = arith.constant 0 : i32
    %89 = arith.sitofp %c0_i32_67 : i32 to bf16
    %90 = vector.shape_cast %84 : vector<1x256xi1> to vector<1x256xi1>
    %91 = vector.broadcast %90 : vector<1x256xi1> to vector<12x256xi1>
    %92 = vector.broadcast %89 : bf16 to vector<12x256xbf16>
    %93 = arith.select %91, %88, %92 : vector<12x256xi1>, vector<12x256xbf16>
    %c12_68 = arith.constant 12 : index
    %c0_69 = arith.constant 0 : index
    %94 = vector.load %arg10[%c12_68, %c0_69] : memref<36x1024xbf16, #tpu.memory_space<vmem>>, vector<12x256xbf16>
    tpu.vector_store %arg10[%c12_68, %c0_69], %93 {strides = array<i32>} : memref<36x1024xbf16, #tpu.memory_space<vmem>>, vector<12x256xbf16>,
    %c0_i32_70 = arith.constant 0 : i32
    %95 = arith.sitofp %c0_i32_70 : i32 to bf16
    %96 = vector.shape_cast %87 : vector<1x256xi1> to vector<1x256xi1>
    %97 = vector.broadcast %96 : vector<1x256xi1> to vector<12x256xi1>
    %98 = vector.broadcast %95 : bf16 to vector<12x256xbf16>
    %99 = arith.select %97, %88, %98 : vector<12x256xi1>, vector<12x256xbf16>
    %c12_71 = arith.constant 12 : index
    %c0_72 = arith.constant 0 : index
    %100 = vector.load %arg11[%c12_71, %c0_72] : memref<36x1024xbf16, #tpu.memory_space<vmem>>, vector<12x256xbf16>
    tpu.vector_store %arg11[%c12_71, %c0_72], %99 {strides = array<i32>} : memref<36x1024xbf16, #tpu.memory_space<vmem>>, vector<12x256xbf16>,
    %c4_73 = arith.constant 4 : index
    %c112_74 = arith.constant 112 : index
    %101 = vector.load %arg9[%c4_73, %c112_74] : memref<24x512xbf16, #tpu.memory_space<vmem>>, vector<12x256xbf16>
    %c0_i32_75 = arith.constant 0 : i32
    %102 = arith.sitofp %c0_i32_75 : i32 to bf16
    %103 = vector.shape_cast %84 : vector<1x256xi1> to vector<1x256xi1>
    %104 = vector.broadcast %103 : vector<1x256xi1> to vector<12x256xi1>
    %105 = vector.broadcast %102 : bf16 to vector<12x256xbf16>
    %106 = arith.select %104, %101, %105 : vector<12x256xi1>, vector<12x256xbf16>
    %c12_76 = arith.constant 12 : index
    %c256_77 = arith.constant 256 : index
    %107 = vector.load %arg10[%c12_76, %c256_77] : memref<36x1024xbf16, #tpu.memory_space<vmem>>, vector<12x256xbf16>
    tpu.vector_store %arg10[%c12_76, %c256_77], %106 {strides = array<i32>} : memref<36x1024xbf16, #tpu.memory_space<vmem>>, vector<12x256xbf16>,
    %c0_i32_78 = arith.constant 0 : i32
    %108 = arith.sitofp %c0_i32_78 : i32 to bf16
    %109 = vector.shape_cast %87 : vector<1x256xi1> to vector<1x256xi1>
    %110 = vector.broadcast %109 : vector<1x256xi1> to vector<12x256xi1>
    %111 = vector.broadcast %108 : bf16 to vector<12x256xbf16>
    %112 = arith.select %110, %101, %111 : vector<12x256xi1>, vector<12x256xbf16>
    %c12_79 = arith.constant 12 : index
    %c256_80 = arith.constant 256 : index
    %113 = vector.load %arg11[%c12_79, %c256_80] : memref<36x1024xbf16, #tpu.memory_space<vmem>>, vector<12x256xbf16>
    tpu.vector_store %arg11[%c12_79, %c256_80], %112 {strides = array<i32>} : memref<36x1024xbf16, #tpu.memory_space<vmem>>, vector<12x256xbf16>,
    %c8_81 = arith.constant 8 : index
    %c112_82 = arith.constant 112 : index
    %114 = vector.load %arg9[%c8_81, %c112_82] : memref<24x512xbf16, #tpu.memory_space<vmem>>, vector<12x256xbf16>
    %c0_i32_83 = arith.constant 0 : i32
    %115 = arith.sitofp %c0_i32_83 : i32 to bf16
    %116 = vector.shape_cast %84 : vector<1x256xi1> to vector<1x256xi1>
    %117 = vector.broadcast %116 : vector<1x256xi1> to vector<12x256xi1>
    %118 = vector.broadcast %115 : bf16 to vector<12x256xbf16>
    %119 = arith.select %117, %114, %118 : vector<12x256xi1>, vector<12x256xbf16>
    %c12_84 = arith.constant 12 : index
    %c512_85 = arith.constant 512 : index
    %120 = vector.load %arg10[%c12_84, %c512_85] : memref<36x1024xbf16, #tpu.memory_space<vmem>>, vector<12x256xbf16>
    tpu.vector_store %arg10[%c12_84, %c512_85], %119 {strides = array<i32>} : memref<36x1024xbf16, #tpu.memory_space<vmem>>, vector<12x256xbf16>,
    %c0_i32_86 = arith.constant 0 : i32
    %121 = arith.sitofp %c0_i32_86 : i32 to bf16
    %122 = vector.shape_cast %87 : vector<1x256xi1> to vector<1x256xi1>
    %123 = vector.broadcast %122 : vector<1x256xi1> to vector<12x256xi1>
    %124 = vector.broadcast %121 : bf16 to vector<12x256xbf16>
    %125 = arith.select %123, %114, %124 : vector<12x256xi1>, vector<12x256xbf16>
    %c12_87 = arith.constant 12 : index
    %c512_88 = arith.constant 512 : index
    %126 = vector.load %arg11[%c12_87, %c512_88] : memref<36x1024xbf16, #tpu.memory_space<vmem>>, vector<12x256xbf16>
    tpu.vector_store %arg11[%c12_87, %c512_88], %125 {strides = array<i32>} : memref<36x1024xbf16, #tpu.memory_space<vmem>>, vector<12x256xbf16>,
    %c12_89 = arith.constant 12 : index
    %c112_90 = arith.constant 112 : index
    %127 = vector.load %arg9[%c12_89, %c112_90] : memref<24x512xbf16, #tpu.memory_space<vmem>>, vector<12x256xbf16>
    %c0_i32_91 = arith.constant 0 : i32
    %128 = arith.sitofp %c0_i32_91 : i32 to bf16
    %129 = vector.shape_cast %84 : vector<1x256xi1> to vector<1x256xi1>
    %130 = vector.broadcast %129 : vector<1x256xi1> to vector<12x256xi1>
    %131 = vector.broadcast %128 : bf16 to vector<12x256xbf16>
    %132 = arith.select %130, %127, %131 : vector<12x256xi1>, vector<12x256xbf16>
    %c12_92 = arith.constant 12 : index
    %c768_93 = arith.constant 768 : index
    %133 = vector.load %arg10[%c12_92, %c768_93] : memref<36x1024xbf16, #tpu.memory_space<vmem>>, vector<12x256xbf16>
    tpu.vector_store %arg10[%c12_92, %c768_93], %132 {strides = array<i32>} : memref<36x1024xbf16, #tpu.memory_space<vmem>>, vector<12x256xbf16>,
    %c0_i32_94 = arith.constant 0 : i32
    %134 = arith.sitofp %c0_i32_94 : i32 to bf16
    %135 = vector.shape_cast %87 : vector<1x256xi1> to vector<1x256xi1>
    %136 = vector.broadcast %135 : vector<1x256xi1> to vector<12x256xi1>
    %137 = vector.broadcast %134 : bf16 to vector<12x256xbf16>
    %138 = arith.select %136, %127, %137 : vector<12x256xi1>, vector<12x256xbf16>
    %c12_95 = arith.constant 12 : index
    %c768_96 = arith.constant 768 : index
    %139 = vector.load %arg11[%c12_95, %c768_96] : memref<36x1024xbf16, #tpu.memory_space<vmem>>, vector<12x256xbf16>
    tpu.vector_store %arg11[%c12_95, %c768_96], %138 {strides = array<i32>} : memref<36x1024xbf16, #tpu.memory_space<vmem>>, vector<12x256xbf16>,
    %c2 = arith.constant 2 : index
    %c0_97 = arith.constant 0 : index
    %140 = vector.load %arg6[%c2, %c0_97] : memref<9x256xf32, #tpu.memory_space<vmem>>, vector<1x256xf32>
    %cst_98 = arith.constant 5.000000e-01 : f32
    %141 = vector.broadcast %cst_98 : f32 to vector<1x256xf32>
    %142 = arith.cmpf ogt, %140, %141 : vector<1x256xf32>
    %c2_99 = arith.constant 2 : index
    %c0_100 = arith.constant 0 : index
    %143 = vector.load %arg7[%c2_99, %c0_100] : memref<9x256xf32, #tpu.memory_space<vmem>>, vector<1x256xf32>
    %cst_101 = arith.constant 5.000000e-01 : f32
    %144 = vector.broadcast %cst_101 : f32 to vector<1x256xf32>
    %145 = arith.cmpf ogt, %143, %144 : vector<1x256xf32>
    %c0_102 = arith.constant 0 : index
    %c113 = arith.constant 113 : index
    %146 = vector.load %arg9[%c0_102, %c113] : memref<24x512xbf16, #tpu.memory_space<vmem>>, vector<12x256xbf16>
    %c0_i32_103 = arith.constant 0 : i32
    %147 = arith.sitofp %c0_i32_103 : i32 to bf16
    %148 = vector.shape_cast %142 : vector<1x256xi1> to vector<1x256xi1>
    %149 = vector.broadcast %148 : vector<1x256xi1> to vector<12x256xi1>
    %150 = vector.broadcast %147 : bf16 to vector<12x256xbf16>
    %151 = arith.select %149, %146, %150 : vector<12x256xi1>, vector<12x256xbf16>
    %c24 = arith.constant 24 : index
    %c0_104 = arith.constant 0 : index
    %152 = vector.load %arg10[%c24, %c0_104] : memref<36x1024xbf16, #tpu.memory_space<vmem>>, vector<12x256xbf16>
    tpu.vector_store %arg10[%c24, %c0_104], %151 {strides = array<i32>} : memref<36x1024xbf16, #tpu.memory_space<vmem>>, vector<12x256xbf16>,
    %c0_i32_105 = arith.constant 0 : i32
    %153 = arith.sitofp %c0_i32_105 : i32 to bf16
    %154 = vector.shape_cast %145 : vector<1x256xi1> to vector<1x256xi1>
    %155 = vector.broadcast %154 : vector<1x256xi1> to vector<12x256xi1>
    %156 = vector.broadcast %153 : bf16 to vector<12x256xbf16>
    %157 = arith.select %155, %146, %156 : vector<12x256xi1>, vector<12x256xbf16>
    %c24_106 = arith.constant 24 : index
    %c0_107 = arith.constant 0 : index
    %158 = vector.load %arg11[%c24_106, %c0_107] : memref<36x1024xbf16, #tpu.memory_space<vmem>>, vector<12x256xbf16>
    tpu.vector_store %arg11[%c24_106, %c0_107], %157 {strides = array<i32>} : memref<36x1024xbf16, #tpu.memory_space<vmem>>, vector<12x256xbf16>,
    %c4_108 = arith.constant 4 : index
    %c113_109 = arith.constant 113 : index
    %159 = vector.load %arg9[%c4_108, %c113_109] : memref<24x512xbf16, #tpu.memory_space<vmem>>, vector<12x256xbf16>
    %c0_i32_110 = arith.constant 0 : i32
    %160 = arith.sitofp %c0_i32_110 : i32 to bf16
    %161 = vector.shape_cast %142 : vector<1x256xi1> to vector<1x256xi1>
    %162 = vector.broadcast %161 : vector<1x256xi1> to vector<12x256xi1>
    %163 = vector.broadcast %160 : bf16 to vector<12x256xbf16>
    %164 = arith.select %162, %159, %163 : vector<12x256xi1>, vector<12x256xbf16>
    %c24_111 = arith.constant 24 : index
    %c256_112 = arith.constant 256 : index
    %165 = vector.load %arg10[%c24_111, %c256_112] : memref<36x1024xbf16, #tpu.memory_space<vmem>>, vector<12x256xbf16>
    tpu.vector_store %arg10[%c24_111, %c256_112], %164 {strides = array<i32>} : memref<36x1024xbf16, #tpu.memory_space<vmem>>, vector<12x256xbf16>,
    %c0_i32_113 = arith.constant 0 : i32
    %166 = arith.sitofp %c0_i32_113 : i32 to bf16
    %167 = vector.shape_cast %145 : vector<1x256xi1> to vector<1x256xi1>
    %168 = vector.broadcast %167 : vector<1x256xi1> to vector<12x256xi1>
    %169 = vector.broadcast %166 : bf16 to vector<12x256xbf16>
    %170 = arith.select %168, %159, %169 : vector<12x256xi1>, vector<12x256xbf16>
    %c24_114 = arith.constant 24 : index
    %c256_115 = arith.constant 256 : index
    %171 = vector.load %arg11[%c24_114, %c256_115] : memref<36x1024xbf16, #tpu.memory_space<vmem>>, vector<12x256xbf16>
    tpu.vector_store %arg11[%c24_114, %c256_115], %170 {strides = array<i32>} : memref<36x1024xbf16, #tpu.memory_space<vmem>>, vector<12x256xbf16>,
    %c8_116 = arith.constant 8 : index
    %c113_117 = arith.constant 113 : index
    %172 = vector.load %arg9[%c8_116, %c113_117] : memref<24x512xbf16, #tpu.memory_space<vmem>>, vector<12x256xbf16>
    %c0_i32_118 = arith.constant 0 : i32
    %173 = arith.sitofp %c0_i32_118 : i32 to bf16
    %174 = vector.shape_cast %142 : vector<1x256xi1> to vector<1x256xi1>
    %175 = vector.broadcast %174 : vector<1x256xi1> to vector<12x256xi1>
    %176 = vector.broadcast %173 : bf16 to vector<12x256xbf16>
    %177 = arith.select %175, %172, %176 : vector<12x256xi1>, vector<12x256xbf16>
    %c24_119 = arith.constant 24 : index
    %c512_120 = arith.constant 512 : index
    %178 = vector.load %arg10[%c24_119, %c512_120] : memref<36x1024xbf16, #tpu.memory_space<vmem>>, vector<12x256xbf16>
    tpu.vector_store %arg10[%c24_119, %c512_120], %177 {strides = array<i32>} : memref<36x1024xbf16, #tpu.memory_space<vmem>>, vector<12x256xbf16>,
    %c0_i32_121 = arith.constant 0 : i32
    %179 = arith.sitofp %c0_i32_121 : i32 to bf16
    %180 = vector.shape_cast %145 : vector<1x256xi1> to vector<1x256xi1>
    %181 = vector.broadcast %180 : vector<1x256xi1> to vector<12x256xi1>
    %182 = vector.broadcast %179 : bf16 to vector<12x256xbf16>
    %183 = arith.select %181, %172, %182 : vector<12x256xi1>, vector<12x256xbf16>
    %c24_122 = arith.constant 24 : index
    %c512_123 = arith.constant 512 : index
    %184 = vector.load %arg11[%c24_122, %c512_123] : memref<36x1024xbf16, #tpu.memory_space<vmem>>, vector<12x256xbf16>
    tpu.vector_store %arg11[%c24_122, %c512_123], %183 {strides = array<i32>} : memref<36x1024xbf16, #tpu.memory_space<vmem>>, vector<12x256xbf16>,
    %c12_124 = arith.constant 12 : index
    %c113_125 = arith.constant 113 : index
    %185 = vector.load %arg9[%c12_124, %c113_125] : memref<24x512xbf16, #tpu.memory_space<vmem>>, vector<12x256xbf16>
    %c0_i32_126 = arith.constant 0 : i32
    %186 = arith.sitofp %c0_i32_126 : i32 to bf16
    %187 = vector.shape_cast %142 : vector<1x256xi1> to vector<1x256xi1>
    %188 = vector.broadcast %187 : vector<1x256xi1> to vector<12x256xi1>
    %189 = vector.broadcast %186 : bf16 to vector<12x256xbf16>
    %190 = arith.select %188, %185, %189 : vector<12x256xi1>, vector<12x256xbf16>
    %c24_127 = arith.constant 24 : index
    %c768_128 = arith.constant 768 : index
    %191 = vector.load %arg10[%c24_127, %c768_128] : memref<36x1024xbf16, #tpu.memory_space<vmem>>, vector<12x256xbf16>
    tpu.vector_store %arg10[%c24_127, %c768_128], %190 {strides = array<i32>} : memref<36x1024xbf16, #tpu.memory_space<vmem>>, vector<12x256xbf16>,
    %c0_i32_129 = arith.constant 0 : i32
    %192 = arith.sitofp %c0_i32_129 : i32 to bf16
    %193 = vector.shape_cast %145 : vector<1x256xi1> to vector<1x256xi1>
    %194 = vector.broadcast %193 : vector<1x256xi1> to vector<12x256xi1>
    %195 = vector.broadcast %192 : bf16 to vector<12x256xbf16>
    %196 = arith.select %194, %185, %195 : vector<12x256xi1>, vector<12x256xbf16>
    %c24_130 = arith.constant 24 : index
    %c768_131 = arith.constant 768 : index
    %197 = vector.load %arg11[%c24_130, %c768_131] : memref<36x1024xbf16, #tpu.memory_space<vmem>>, vector<12x256xbf16>
    tpu.vector_store %arg11[%c24_130, %c768_131], %196 {strides = array<i32>} : memref<36x1024xbf16, #tpu.memory_space<vmem>>, vector<12x256xbf16>,
    %c0_132 = arith.constant 0 : index
    %c0_133 = arith.constant 0 : index
    %c0_134 = arith.constant 0 : index
    %198 = vector.load %arg5[%c0_132, %c0_133, %c0_134] : memref<3x16x36xbf16, #tpu.memory_space<vmem>>, vector<1x16x36xbf16>
    %199 = vector.shape_cast %198 : vector<1x16x36xbf16> to vector<16x36xbf16>
    %200 = vector.extract_strided_slice %199 {offsets = [0, 0], sizes = [8, 36], strides = [1, 1]} : vector<16x36xbf16> to vector<8x36xbf16>
    %c0_135 = arith.constant 0 : index
    %c0_136 = arith.constant 0 : index
    %201 = vector.load %arg10[%c0_135, %c0_136] : memref<36x1024xbf16, #tpu.memory_space<vmem>>, vector<36x1024xbf16>
    %cst_137 = arith.constant dense<0.000000e+00> : vector<8x1024xf32>
    %202 = tpu.matmul %200, %201, %cst_137 {dimension_numbers = #tpu.dot_dimension_numbers<[1], [0], [0], [1], [0, 0, 1, 1], [], []>} : vector<8x36xbf16>, vector<36x1024xbf16>, vector<8x1024xf32> -> vector<8x1024xf32>
    %203 = vector.extract_strided_slice %199 {offsets = [8, 0], sizes = [8, 36], strides = [1, 1]} : vector<16x36xbf16> to vector<8x36xbf16>
    %c0_138 = arith.constant 0 : index
    %c0_139 = arith.constant 0 : index
    %204 = vector.load %arg11[%c0_138, %c0_139] : memref<36x1024xbf16, #tpu.memory_space<vmem>>, vector<36x1024xbf16>
    %cst_140 = arith.constant dense<0.000000e+00> : vector<8x1024xf32>
    %205 = tpu.matmul %203, %204, %cst_140 {dimension_numbers = #tpu.dot_dimension_numbers<[1], [0], [0], [1], [0, 0, 1, 1], [], []>} : vector<8x36xbf16>, vector<36x1024xbf16>, vector<8x1024xf32> -> vector<8x1024xf32>
    %c3 = arith.constant 3 : index
    %c0_141 = arith.constant 0 : index
    %206 = vector.load %arg6[%c3, %c0_141] : memref<9x256xf32, #tpu.memory_space<vmem>>, vector<1x256xf32>
    %cst_142 = arith.constant 5.000000e-01 : f32
    %207 = vector.broadcast %cst_142 : f32 to vector<1x256xf32>
    %208 = arith.cmpf ogt, %206, %207 : vector<1x256xf32>
    %c0_143 = arith.constant 0 : index
    %c127 = arith.constant 127 : index
    %209 = vector.load %arg9[%c0_143, %c127] : memref<24x512xbf16, #tpu.memory_space<vmem>>, vector<12x256xbf16>
    %c0_i32_144 = arith.constant 0 : i32
    %210 = arith.sitofp %c0_i32_144 : i32 to bf16
    %211 = vector.shape_cast %208 : vector<1x256xi1> to vector<1x256xi1>
    %212 = vector.broadcast %211 : vector<1x256xi1> to vector<12x256xi1>
    %213 = vector.broadcast %210 : bf16 to vector<12x256xbf16>
    %214 = arith.select %212, %209, %213 : vector<12x256xi1>, vector<12x256xbf16>
    %c0_145 = arith.constant 0 : index
    %c0_146 = arith.constant 0 : index
    %215 = vector.load %arg10[%c0_145, %c0_146] : memref<36x1024xbf16, #tpu.memory_space<vmem>>, vector<12x256xbf16>
    tpu.vector_store %arg10[%c0_145, %c0_146], %214 {strides = array<i32>} : memref<36x1024xbf16, #tpu.memory_space<vmem>>, vector<12x256xbf16>,
    %c4_147 = arith.constant 4 : index
    %c127_148 = arith.constant 127 : index
    %216 = vector.load %arg9[%c4_147, %c127_148] : memref<24x512xbf16, #tpu.memory_space<vmem>>, vector<12x256xbf16>
    %c0_i32_149 = arith.constant 0 : i32
    %217 = arith.sitofp %c0_i32_149 : i32 to bf16
    %218 = vector.shape_cast %208 : vector<1x256xi1> to vector<1x256xi1>
    %219 = vector.broadcast %218 : vector<1x256xi1> to vector<12x256xi1>
    %220 = vector.broadcast %217 : bf16 to vector<12x256xbf16>
    %221 = arith.select %219, %216, %220 : vector<12x256xi1>, vector<12x256xbf16>
    %c0_150 = arith.constant 0 : index
    %c256_151 = arith.constant 256 : index
    %222 = vector.load %arg10[%c0_150, %c256_151] : memref<36x1024xbf16, #tpu.memory_space<vmem>>, vector<12x256xbf16>
    tpu.vector_store %arg10[%c0_150, %c256_151], %221 {strides = array<i32>} : memref<36x1024xbf16, #tpu.memory_space<vmem>>, vector<12x256xbf16>,
    %c8_152 = arith.constant 8 : index
    %c127_153 = arith.constant 127 : index
    %223 = vector.load %arg9[%c8_152, %c127_153] : memref<24x512xbf16, #tpu.memory_space<vmem>>, vector<12x256xbf16>
    %c0_i32_154 = arith.constant 0 : i32
    %224 = arith.sitofp %c0_i32_154 : i32 to bf16
    %225 = vector.shape_cast %208 : vector<1x256xi1> to vector<1x256xi1>
    %226 = vector.broadcast %225 : vector<1x256xi1> to vector<12x256xi1>
    %227 = vector.broadcast %224 : bf16 to vector<12x256xbf16>
    %228 = arith.select %226, %223, %227 : vector<12x256xi1>, vector<12x256xbf16>
    %c0_155 = arith.constant 0 : index
    %c512_156 = arith.constant 512 : index
    %229 = vector.load %arg10[%c0_155, %c512_156] : memref<36x1024xbf16, #tpu.memory_space<vmem>>, vector<12x256xbf16>
    tpu.vector_store %arg10[%c0_155, %c512_156], %228 {strides = array<i32>} : memref<36x1024xbf16, #tpu.memory_space<vmem>>, vector<12x256xbf16>,
    %c12_157 = arith.constant 12 : index
    %c127_158 = arith.constant 127 : index
    %230 = vector.load %arg9[%c12_157, %c127_158] : memref<24x512xbf16, #tpu.memory_space<vmem>>, vector<12x256xbf16>
    %c0_i32_159 = arith.constant 0 : i32
    %231 = arith.sitofp %c0_i32_159 : i32 to bf16
    %232 = vector.shape_cast %208 : vector<1x256xi1> to vector<1x256xi1>
    %233 = vector.broadcast %232 : vector<1x256xi1> to vector<12x256xi1>
    %234 = vector.broadcast %231 : bf16 to vector<12x256xbf16>
    %235 = arith.select %233, %230, %234 : vector<12x256xi1>, vector<12x256xbf16>
    %c0_160 = arith.constant 0 : index
    %c768_161 = arith.constant 768 : index
    %236 = vector.load %arg10[%c0_160, %c768_161] : memref<36x1024xbf16, #tpu.memory_space<vmem>>, vector<12x256xbf16>
    tpu.vector_store %arg10[%c0_160, %c768_161], %235 {strides = array<i32>} : memref<36x1024xbf16, #tpu.memory_space<vmem>>, vector<12x256xbf16>,
    %c4_162 = arith.constant 4 : index
    %c0_163 = arith.constant 0 : index
    %237 = vector.load %arg6[%c4_162, %c0_163] : memref<9x256xf32, #tpu.memory_space<vmem>>, vector<1x256xf32>
    %cst_164 = arith.constant 5.000000e-01 : f32
    %238 = vector.broadcast %cst_164 : f32 to vector<1x256xf32>
    %239 = arith.cmpf ogt, %237, %238 : vector<1x256xf32>
    %c0_165 = arith.constant 0 : index
    %c128_166 = arith.constant 128 : index
    %240 = vector.load %arg9[%c0_165, %c128_166] : memref<24x512xbf16, #tpu.memory_space<vmem>>, vector<12x256xbf16>
    %c0_i32_167 = arith.constant 0 : i32
    %241 = arith.sitofp %c0_i32_167 : i32 to bf16
    %242 = vector.shape_cast %239 : vector<1x256xi1> to vector<1x256xi1>
    %243 = vector.broadcast %242 : vector<1x256xi1> to vector<12x256xi1>
    %244 = vector.broadcast %241 : bf16 to vector<12x256xbf16>
    %245 = arith.select %243, %240, %244 : vector<12x256xi1>, vector<12x256xbf16>
    %c12_168 = arith.constant 12 : index
    %c0_169 = arith.constant 0 : index
    %246 = vector.load %arg10[%c12_168, %c0_169] : memref<36x1024xbf16, #tpu.memory_space<vmem>>, vector<12x256xbf16>
    tpu.vector_store %arg10[%c12_168, %c0_169], %245 {strides = array<i32>} : memref<36x1024xbf16, #tpu.memory_space<vmem>>, vector<12x256xbf16>,
    %c4_170 = arith.constant 4 : index
    %c128_171 = arith.constant 128 : index
    %247 = vector.load %arg9[%c4_170, %c128_171] : memref<24x512xbf16, #tpu.memory_space<vmem>>, vector<12x256xbf16>
    %c0_i32_172 = arith.constant 0 : i32
    %248 = arith.sitofp %c0_i32_172 : i32 to bf16
    %249 = vector.shape_cast %239 : vector<1x256xi1> to vector<1x256xi1>
    %250 = vector.broadcast %249 : vector<1x256xi1> to vector<12x256xi1>
    %251 = vector.broadcast %248 : bf16 to vector<12x256xbf16>
    %252 = arith.select %250, %247, %251 : vector<12x256xi1>, vector<12x256xbf16>
    %c12_173 = arith.constant 12 : index
    %c256_174 = arith.constant 256 : index
    %253 = vector.load %arg10[%c12_173, %c256_174] : memref<36x1024xbf16, #tpu.memory_space<vmem>>, vector<12x256xbf16>
    tpu.vector_store %arg10[%c12_173, %c256_174], %252 {strides = array<i32>} : memref<36x1024xbf16, #tpu.memory_space<vmem>>, vector<12x256xbf16>,
    %c8_175 = arith.constant 8 : index
    %c128_176 = arith.constant 128 : index
    %254 = vector.load %arg9[%c8_175, %c128_176] : memref<24x512xbf16, #tpu.memory_space<vmem>>, vector<12x256xbf16>
    %c0_i32_177 = arith.constant 0 : i32
    %255 = arith.sitofp %c0_i32_177 : i32 to bf16
    %256 = vector.shape_cast %239 : vector<1x256xi1> to vector<1x256xi1>
    %257 = vector.broadcast %256 : vector<1x256xi1> to vector<12x256xi1>
    %258 = vector.broadcast %255 : bf16 to vector<12x256xbf16>
    %259 = arith.select %257, %254, %258 : vector<12x256xi1>, vector<12x256xbf16>
    %c12_178 = arith.constant 12 : index
    %c512_179 = arith.constant 512 : index
    %260 = vector.load %arg10[%c12_178, %c512_179] : memref<36x1024xbf16, #tpu.memory_space<vmem>>, vector<12x256xbf16>
    tpu.vector_store %arg10[%c12_178, %c512_179], %259 {strides = array<i32>} : memref<36x1024xbf16, #tpu.memory_space<vmem>>, vector<12x256xbf16>,
    %c12_180 = arith.constant 12 : index
    %c128_181 = arith.constant 128 : index
    %261 = vector.load %arg9[%c12_180, %c128_181] : memref<24x512xbf16, #tpu.memory_space<vmem>>, vector<12x256xbf16>
    %c0_i32_182 = arith.constant 0 : i32
    %262 = arith.sitofp %c0_i32_182 : i32 to bf16
    %263 = vector.shape_cast %239 : vector<1x256xi1> to vector<1x256xi1>
    %264 = vector.broadcast %263 : vector<1x256xi1> to vector<12x256xi1>
    %265 = vector.broadcast %262 : bf16 to vector<12x256xbf16>
    %266 = arith.select %264, %261, %265 : vector<12x256xi1>, vector<12x256xbf16>
    %c12_183 = arith.constant 12 : index
    %c768_184 = arith.constant 768 : index
    %267 = vector.load %arg10[%c12_183, %c768_184] : memref<36x1024xbf16, #tpu.memory_space<vmem>>, vector<12x256xbf16>
    tpu.vector_store %arg10[%c12_183, %c768_184], %266 {strides = array<i32>} : memref<36x1024xbf16, #tpu.memory_space<vmem>>, vector<12x256xbf16>,
    %c5 = arith.constant 5 : index
    %c0_185 = arith.constant 0 : index
    %268 = vector.load %arg6[%c5, %c0_185] : memref<9x256xf32, #tpu.memory_space<vmem>>, vector<1x256xf32>
    %cst_186 = arith.constant 5.000000e-01 : f32
    %269 = vector.broadcast %cst_186 : f32 to vector<1x256xf32>
    %270 = arith.cmpf ogt, %268, %269 : vector<1x256xf32>
    %c0_187 = arith.constant 0 : index
    %c129 = arith.constant 129 : index
    %271 = vector.load %arg9[%c0_187, %c129] : memref<24x512xbf16, #tpu.memory_space<vmem>>, vector<12x256xbf16>
    %c0_i32_188 = arith.constant 0 : i32
    %272 = arith.sitofp %c0_i32_188 : i32 to bf16
    %273 = vector.shape_cast %270 : vector<1x256xi1> to vector<1x256xi1>
    %274 = vector.broadcast %273 : vector<1x256xi1> to vector<12x256xi1>
    %275 = vector.broadcast %272 : bf16 to vector<12x256xbf16>
    %276 = arith.select %274, %271, %275 : vector<12x256xi1>, vector<12x256xbf16>
    %c24_189 = arith.constant 24 : index
    %c0_190 = arith.constant 0 : index
    %277 = vector.load %arg10[%c24_189, %c0_190] : memref<36x1024xbf16, #tpu.memory_space<vmem>>, vector<12x256xbf16>
    tpu.vector_store %arg10[%c24_189, %c0_190], %276 {strides = array<i32>} : memref<36x1024xbf16, #tpu.memory_space<vmem>>, vector<12x256xbf16>,
    %c4_191 = arith.constant 4 : index
    %c129_192 = arith.constant 129 : index
    %278 = vector.load %arg9[%c4_191, %c129_192] : memref<24x512xbf16, #tpu.memory_space<vmem>>, vector<12x256xbf16>
    %c0_i32_193 = arith.constant 0 : i32
    %279 = arith.sitofp %c0_i32_193 : i32 to bf16
    %280 = vector.shape_cast %270 : vector<1x256xi1> to vector<1x256xi1>
    %281 = vector.broadcast %280 : vector<1x256xi1> to vector<12x256xi1>
    %282 = vector.broadcast %279 : bf16 to vector<12x256xbf16>
    %283 = arith.select %281, %278, %282 : vector<12x256xi1>, vector<12x256xbf16>
    %c24_194 = arith.constant 24 : index
    %c256_195 = arith.constant 256 : index
    %284 = vector.load %arg10[%c24_194, %c256_195] : memref<36x1024xbf16, #tpu.memory_space<vmem>>, vector<12x256xbf16>
    tpu.vector_store %arg10[%c24_194, %c256_195], %283 {strides = array<i32>} : memref<36x1024xbf16, #tpu.memory_space<vmem>>, vector<12x256xbf16>,
    %c8_196 = arith.constant 8 : index
    %c129_197 = arith.constant 129 : index
    %285 = vector.load %arg9[%c8_196, %c129_197] : memref<24x512xbf16, #tpu.memory_space<vmem>>, vector<12x256xbf16>
    %c0_i32_198 = arith.constant 0 : i32
    %286 = arith.sitofp %c0_i32_198 : i32 to bf16
    %287 = vector.shape_cast %270 : vector<1x256xi1> to vector<1x256xi1>
    %288 = vector.broadcast %287 : vector<1x256xi1> to vector<12x256xi1>
    %289 = vector.broadcast %286 : bf16 to vector<12x256xbf16>
    %290 = arith.select %288, %285, %289 : vector<12x256xi1>, vector<12x256xbf16>
    %c24_199 = arith.constant 24 : index
    %c512_200 = arith.constant 512 : index
    %291 = vector.load %arg10[%c24_199, %c512_200] : memref<36x1024xbf16, #tpu.memory_space<vmem>>, vector<12x256xbf16>
    tpu.vector_store %arg10[%c24_199, %c512_200], %290 {strides = array<i32>} : memref<36x1024xbf16, #tpu.memory_space<vmem>>, vector<12x256xbf16>,
    %c12_201 = arith.constant 12 : index
    %c129_202 = arith.constant 129 : index
    %292 = vector.load %arg9[%c12_201, %c129_202] : memref<24x512xbf16, #tpu.memory_space<vmem>>, vector<12x256xbf16>
    %c0_i32_203 = arith.constant 0 : i32
    %293 = arith.sitofp %c0_i32_203 : i32 to bf16
    %294 = vector.shape_cast %270 : vector<1x256xi1> to vector<1x256xi1>
    %295 = vector.broadcast %294 : vector<1x256xi1> to vector<12x256xi1>
    %296 = vector.broadcast %293 : bf16 to vector<12x256xbf16>
    %297 = arith.select %295, %292, %296 : vector<12x256xi1>, vector<12x256xbf16>
    %c24_204 = arith.constant 24 : index
    %c768_205 = arith.constant 768 : index
    %298 = vector.load %arg10[%c24_204, %c768_205] : memref<36x1024xbf16, #tpu.memory_space<vmem>>, vector<12x256xbf16>
    tpu.vector_store %arg10[%c24_204, %c768_205], %297 {strides = array<i32>} : memref<36x1024xbf16, #tpu.memory_space<vmem>>, vector<12x256xbf16>,
    %c1_206 = arith.constant 1 : index
    %c0_207 = arith.constant 0 : index
    %c0_208 = arith.constant 0 : index
    %299 = vector.load %arg5[%c1_206, %c0_207, %c0_208] : memref<3x16x36xbf16, #tpu.memory_space<vmem>>, vector<1x16x36xbf16>
    %300 = vector.shape_cast %299 : vector<1x16x36xbf16> to vector<16x36xbf16>
    %c0_209 = arith.constant 0 : index
    %c0_210 = arith.constant 0 : index
    %301 = vector.load %arg10[%c0_209, %c0_210] : memref<36x1024xbf16, #tpu.memory_space<vmem>>, vector<36x1024xbf16>
    %cst_211 = arith.constant dense<0.000000e+00> : vector<16x1024xf32>
    %302 = tpu.matmul %300, %301, %cst_211 {dimension_numbers = #tpu.dot_dimension_numbers<[1], [0], [0], [1], [0, 0, 1, 1], [], []>} : vector<16x36xbf16>, vector<36x1024xbf16>, vector<16x1024xf32> -> vector<16x1024xf32>
    %303 = vector.extract_strided_slice %302 {offsets = [0, 0], sizes = [8, 1024], strides = [1, 1]} : vector<16x1024xf32> to vector<8x1024xf32>
    %304 = vector.extract_strided_slice %302 {offsets = [8, 0], sizes = [8, 1024], strides = [1, 1]} : vector<16x1024xf32> to vector<8x1024xf32>
    %305 = arith.addf %202, %303 : vector<8x1024xf32>
    %306 = arith.addf %205, %304 : vector<8x1024xf32>
    %c6 = arith.constant 6 : index
    %c0_212 = arith.constant 0 : index
    %307 = vector.load %arg6[%c6, %c0_212] : memref<9x256xf32, #tpu.memory_space<vmem>>, vector<1x256xf32>
    %cst_213 = arith.constant 5.000000e-01 : f32
    %308 = vector.broadcast %cst_213 : f32 to vector<1x256xf32>
    %309 = arith.cmpf ogt, %307, %308 : vector<1x256xf32>
    %c6_214 = arith.constant 6 : index
    %c0_215 = arith.constant 0 : index
    %310 = vector.load %arg7[%c6_214, %c0_215] : memref<9x256xf32, #tpu.memory_space<vmem>>, vector<1x256xf32>
    %cst_216 = arith.constant 5.000000e-01 : f32
    %311 = vector.broadcast %cst_216 : f32 to vector<1x256xf32>
    %312 = arith.cmpf ogt, %310, %311 : vector<1x256xf32>
    %c0_217 = arith.constant 0 : index
    %c143 = arith.constant 143 : index
    %313 = vector.load %arg9[%c0_217, %c143] : memref<24x512xbf16, #tpu.memory_space<vmem>>, vector<12x256xbf16>
    %c0_i32_218 = arith.constant 0 : i32
    %314 = arith.sitofp %c0_i32_218 : i32 to bf16
    %315 = vector.shape_cast %309 : vector<1x256xi1> to vector<1x256xi1>
    %316 = vector.broadcast %315 : vector<1x256xi1> to vector<12x256xi1>
    %317 = vector.broadcast %314 : bf16 to vector<12x256xbf16>
    %318 = arith.select %316, %313, %317 : vector<12x256xi1>, vector<12x256xbf16>
    %c0_219 = arith.constant 0 : index
    %c0_220 = arith.constant 0 : index
    %319 = vector.load %arg10[%c0_219, %c0_220] : memref<36x1024xbf16, #tpu.memory_space<vmem>>, vector<12x256xbf16>
    tpu.vector_store %arg10[%c0_219, %c0_220], %318 {strides = array<i32>} : memref<36x1024xbf16, #tpu.memory_space<vmem>>, vector<12x256xbf16>,
    %c0_i32_221 = arith.constant 0 : i32
    %320 = arith.sitofp %c0_i32_221 : i32 to bf16
    %321 = vector.shape_cast %312 : vector<1x256xi1> to vector<1x256xi1>
    %322 = vector.broadcast %321 : vector<1x256xi1> to vector<12x256xi1>
    %323 = vector.broadcast %320 : bf16 to vector<12x256xbf16>
    %324 = arith.select %322, %313, %323 : vector<12x256xi1>, vector<12x256xbf16>
    %c0_222 = arith.constant 0 : index
    %c0_223 = arith.constant 0 : index
    %325 = vector.load %arg11[%c0_222, %c0_223] : memref<36x1024xbf16, #tpu.memory_space<vmem>>, vector<12x256xbf16>
    tpu.vector_store %arg11[%c0_222, %c0_223], %324 {strides = array<i32>} : memref<36x1024xbf16, #tpu.memory_space<vmem>>, vector<12x256xbf16>,
    %c4_224 = arith.constant 4 : index
    %c143_225 = arith.constant 143 : index
    %326 = vector.load %arg9[%c4_224, %c143_225] : memref<24x512xbf16, #tpu.memory_space<vmem>>, vector<12x256xbf16>
    %c0_i32_226 = arith.constant 0 : i32
    %327 = arith.sitofp %c0_i32_226 : i32 to bf16
    %328 = vector.shape_cast %309 : vector<1x256xi1> to vector<1x256xi1>
    %329 = vector.broadcast %328 : vector<1x256xi1> to vector<12x256xi1>
    %330 = vector.broadcast %327 : bf16 to vector<12x256xbf16>
    %331 = arith.select %329, %326, %330 : vector<12x256xi1>, vector<12x256xbf16>
    %c0_227 = arith.constant 0 : index
    %c256_228 = arith.constant 256 : index
    %332 = vector.load %arg10[%c0_227, %c256_228] : memref<36x1024xbf16, #tpu.memory_space<vmem>>, vector<12x256xbf16>
    tpu.vector_store %arg10[%c0_227, %c256_228], %331 {strides = array<i32>} : memref<36x1024xbf16, #tpu.memory_space<vmem>>, vector<12x256xbf16>,
    %c0_i32_229 = arith.constant 0 : i32
    %333 = arith.sitofp %c0_i32_229 : i32 to bf16
    %334 = vector.shape_cast %312 : vector<1x256xi1> to vector<1x256xi1>
    %335 = vector.broadcast %334 : vector<1x256xi1> to vector<12x256xi1>
    %336 = vector.broadcast %333 : bf16 to vector<12x256xbf16>
    %337 = arith.select %335, %326, %336 : vector<12x256xi1>, vector<12x256xbf16>
    %c0_230 = arith.constant 0 : index
    %c256_231 = arith.constant 256 : index
    %338 = vector.load %arg11[%c0_230, %c256_231] : memref<36x1024xbf16, #tpu.memory_space<vmem>>, vector<12x256xbf16>
    tpu.vector_store %arg11[%c0_230, %c256_231], %337 {strides = array<i32>} : memref<36x1024xbf16, #tpu.memory_space<vmem>>, vector<12x256xbf16>,
    %c8_232 = arith.constant 8 : index
    %c143_233 = arith.constant 143 : index
    %339 = vector.load %arg9[%c8_232, %c143_233] : memref<24x512xbf16, #tpu.memory_space<vmem>>, vector<12x256xbf16>
    %c0_i32_234 = arith.constant 0 : i32
    %340 = arith.sitofp %c0_i32_234 : i32 to bf16
    %341 = vector.shape_cast %309 : vector<1x256xi1> to vector<1x256xi1>
    %342 = vector.broadcast %341 : vector<1x256xi1> to vector<12x256xi1>
    %343 = vector.broadcast %340 : bf16 to vector<12x256xbf16>
    %344 = arith.select %342, %339, %343 : vector<12x256xi1>, vector<12x256xbf16>
    %c0_235 = arith.constant 0 : index
    %c512_236 = arith.constant 512 : index
    %345 = vector.load %arg10[%c0_235, %c512_236] : memref<36x1024xbf16, #tpu.memory_space<vmem>>, vector<12x256xbf16>
    tpu.vector_store %arg10[%c0_235, %c512_236], %344 {strides = array<i32>} : memref<36x1024xbf16, #tpu.memory_space<vmem>>, vector<12x256xbf16>,
    %c0_i32_237 = arith.constant 0 : i32
    %346 = arith.sitofp %c0_i32_237 : i32 to bf16
    %347 = vector.shape_cast %312 : vector<1x256xi1> to vector<1x256xi1>
    %348 = vector.broadcast %347 : vector<1x256xi1> to vector<12x256xi1>
    %349 = vector.broadcast %346 : bf16 to vector<12x256xbf16>
    %350 = arith.select %348, %339, %349 : vector<12x256xi1>, vector<12x256xbf16>
    %c0_238 = arith.constant 0 : index
    %c512_239 = arith.constant 512 : index
    %351 = vector.load %arg11[%c0_238, %c512_239] : memref<36x1024xbf16, #tpu.memory_space<vmem>>, vector<12x256xbf16>
    tpu.vector_store %arg11[%c0_238, %c512_239], %350 {strides = array<i32>} : memref<36x1024xbf16, #tpu.memory_space<vmem>>, vector<12x256xbf16>,
    %c12_240 = arith.constant 12 : index
    %c143_241 = arith.constant 143 : index
    %352 = vector.load %arg9[%c12_240, %c143_241] : memref<24x512xbf16, #tpu.memory_space<vmem>>, vector<12x256xbf16>
    %c0_i32_242 = arith.constant 0 : i32
    %353 = arith.sitofp %c0_i32_242 : i32 to bf16
    %354 = vector.shape_cast %309 : vector<1x256xi1> to vector<1x256xi1>
    %355 = vector.broadcast %354 : vector<1x256xi1> to vector<12x256xi1>
    %356 = vector.broadcast %353 : bf16 to vector<12x256xbf16>
    %357 = arith.select %355, %352, %356 : vector<12x256xi1>, vector<12x256xbf16>
    %c0_243 = arith.constant 0 : index
    %c768_244 = arith.constant 768 : index
    %358 = vector.load %arg10[%c0_243, %c768_244] : memref<36x1024xbf16, #tpu.memory_space<vmem>>, vector<12x256xbf16>
    tpu.vector_store %arg10[%c0_243, %c768_244], %357 {strides = array<i32>} : memref<36x1024xbf16, #tpu.memory_space<vmem>>, vector<12x256xbf16>,
    %c0_i32_245 = arith.constant 0 : i32
    %359 = arith.sitofp %c0_i32_245 : i32 to bf16
    %360 = vector.shape_cast %312 : vector<1x256xi1> to vector<1x256xi1>
    %361 = vector.broadcast %360 : vector<1x256xi1> to vector<12x256xi1>
    %362 = vector.broadcast %359 : bf16 to vector<12x256xbf16>
    %363 = arith.select %361, %352, %362 : vector<12x256xi1>, vector<12x256xbf16>
    %c0_246 = arith.constant 0 : index
    %c768_247 = arith.constant 768 : index
    %364 = vector.load %arg11[%c0_246, %c768_247] : memref<36x1024xbf16, #tpu.memory_space<vmem>>, vector<12x256xbf16>
    tpu.vector_store %arg11[%c0_246, %c768_247], %363 {strides = array<i32>} : memref<36x1024xbf16, #tpu.memory_space<vmem>>, vector<12x256xbf16>,
    %c7 = arith.constant 7 : index
    %c0_248 = arith.constant 0 : index
    %365 = vector.load %arg6[%c7, %c0_248] : memref<9x256xf32, #tpu.memory_space<vmem>>, vector<1x256xf32>
    %cst_249 = arith.constant 5.000000e-01 : f32
    %366 = vector.broadcast %cst_249 : f32 to vector<1x256xf32>
    %367 = arith.cmpf ogt, %365, %366 : vector<1x256xf32>
    %c7_250 = arith.constant 7 : index
    %c0_251 = arith.constant 0 : index
    %368 = vector.load %arg7[%c7_250, %c0_251] : memref<9x256xf32, #tpu.memory_space<vmem>>, vector<1x256xf32>
    %cst_252 = arith.constant 5.000000e-01 : f32
    %369 = vector.broadcast %cst_252 : f32 to vector<1x256xf32>
    %370 = arith.cmpf ogt, %368, %369 : vector<1x256xf32>
    %c0_253 = arith.constant 0 : index
    %c144 = arith.constant 144 : index
    %371 = vector.load %arg9[%c0_253, %c144] : memref<24x512xbf16, #tpu.memory_space<vmem>>, vector<12x256xbf16>
    %c0_i32_254 = arith.constant 0 : i32
    %372 = arith.sitofp %c0_i32_254 : i32 to bf16
    %373 = vector.shape_cast %367 : vector<1x256xi1> to vector<1x256xi1>
    %374 = vector.broadcast %373 : vector<1x256xi1> to vector<12x256xi1>
    %375 = vector.broadcast %372 : bf16 to vector<12x256xbf16>
    %376 = arith.select %374, %371, %375 : vector<12x256xi1>, vector<12x256xbf16>
    %c12_255 = arith.constant 12 : index
    %c0_256 = arith.constant 0 : index
    %377 = vector.load %arg10[%c12_255, %c0_256] : memref<36x1024xbf16, #tpu.memory_space<vmem>>, vector<12x256xbf16>
    tpu.vector_store %arg10[%c12_255, %c0_256], %376 {strides = array<i32>} : memref<36x1024xbf16, #tpu.memory_space<vmem>>, vector<12x256xbf16>,
    %c0_i32_257 = arith.constant 0 : i32
    %378 = arith.sitofp %c0_i32_257 : i32 to bf16
    %379 = vector.shape_cast %370 : vector<1x256xi1> to vector<1x256xi1>
    %380 = vector.broadcast %379 : vector<1x256xi1> to vector<12x256xi1>
    %381 = vector.broadcast %378 : bf16 to vector<12x256xbf16>
    %382 = arith.select %380, %371, %381 : vector<12x256xi1>, vector<12x256xbf16>
    %c12_258 = arith.constant 12 : index
    %c0_259 = arith.constant 0 : index
    %383 = vector.load %arg11[%c12_258, %c0_259] : memref<36x1024xbf16, #tpu.memory_space<vmem>>, vector<12x256xbf16>
    tpu.vector_store %arg11[%c12_258, %c0_259], %382 {strides = array<i32>} : memref<36x1024xbf16, #tpu.memory_space<vmem>>, vector<12x256xbf16>,
    %c4_260 = arith.constant 4 : index
    %c144_261 = arith.constant 144 : index
    %384 = vector.load %arg9[%c4_260, %c144_261] : memref<24x512xbf16, #tpu.memory_space<vmem>>, vector<12x256xbf16>
    %c0_i32_262 = arith.constant 0 : i32
    %385 = arith.sitofp %c0_i32_262 : i32 to bf16
    %386 = vector.shape_cast %367 : vector<1x256xi1> to vector<1x256xi1>
    %387 = vector.broadcast %386 : vector<1x256xi1> to vector<12x256xi1>
    %388 = vector.broadcast %385 : bf16 to vector<12x256xbf16>
    %389 = arith.select %387, %384, %388 : vector<12x256xi1>, vector<12x256xbf16>
    %c12_263 = arith.constant 12 : index
    %c256_264 = arith.constant 256 : index
    %390 = vector.load %arg10[%c12_263, %c256_264] : memref<36x1024xbf16, #tpu.memory_space<vmem>>, vector<12x256xbf16>
    tpu.vector_store %arg10[%c12_263, %c256_264], %389 {strides = array<i32>} : memref<36x1024xbf16, #tpu.memory_space<vmem>>, vector<12x256xbf16>,
    %c0_i32_265 = arith.constant 0 : i32
    %391 = arith.sitofp %c0_i32_265 : i32 to bf16
    %392 = vector.shape_cast %370 : vector<1x256xi1> to vector<1x256xi1>
    %393 = vector.broadcast %392 : vector<1x256xi1> to vector<12x256xi1>
    %394 = vector.broadcast %391 : bf16 to vector<12x256xbf16>
    %395 = arith.select %393, %384, %394 : vector<12x256xi1>, vector<12x256xbf16>
    %c12_266 = arith.constant 12 : index
    %c256_267 = arith.constant 256 : index
    %396 = vector.load %arg11[%c12_266, %c256_267] : memref<36x1024xbf16, #tpu.memory_space<vmem>>, vector<12x256xbf16>
    tpu.vector_store %arg11[%c12_266, %c256_267], %395 {strides = array<i32>} : memref<36x1024xbf16, #tpu.memory_space<vmem>>, vector<12x256xbf16>,
    %c8_268 = arith.constant 8 : index
    %c144_269 = arith.constant 144 : index
    %397 = vector.load %arg9[%c8_268, %c144_269] : memref<24x512xbf16, #tpu.memory_space<vmem>>, vector<12x256xbf16>
    %c0_i32_270 = arith.constant 0 : i32
    %398 = arith.sitofp %c0_i32_270 : i32 to bf16
    %399 = vector.shape_cast %367 : vector<1x256xi1> to vector<1x256xi1>
    %400 = vector.broadcast %399 : vector<1x256xi1> to vector<12x256xi1>
    %401 = vector.broadcast %398 : bf16 to vector<12x256xbf16>
    %402 = arith.select %400, %397, %401 : vector<12x256xi1>, vector<12x256xbf16>
    %c12_271 = arith.constant 12 : index
    %c512_272 = arith.constant 512 : index
    %403 = vector.load %arg10[%c12_271, %c512_272] : memref<36x1024xbf16, #tpu.memory_space<vmem>>, vector<12x256xbf16>
    tpu.vector_store %arg10[%c12_271, %c512_272], %402 {strides = array<i32>} : memref<36x1024xbf16, #tpu.memory_space<vmem>>, vector<12x256xbf16>,
    %c0_i32_273 = arith.constant 0 : i32
    %404 = arith.sitofp %c0_i32_273 : i32 to bf16
    %405 = vector.shape_cast %370 : vector<1x256xi1> to vector<1x256xi1>
    %406 = vector.broadcast %405 : vector<1x256xi1> to vector<12x256xi1>
    %407 = vector.broadcast %404 : bf16 to vector<12x256xbf16>
    %408 = arith.select %406, %397, %407 : vector<12x256xi1>, vector<12x256xbf16>
    %c12_274 = arith.constant 12 : index
    %c512_275 = arith.constant 512 : index
    %409 = vector.load %arg11[%c12_274, %c512_275] : memref<36x1024xbf16, #tpu.memory_space<vmem>>, vector<12x256xbf16>
    tpu.vector_store %arg11[%c12_274, %c512_275], %408 {strides = array<i32>} : memref<36x1024xbf16, #tpu.memory_space<vmem>>, vector<12x256xbf16>,
    %c12_276 = arith.constant 12 : index
    %c144_277 = arith.constant 144 : index
    %410 = vector.load %arg9[%c12_276, %c144_277] : memref<24x512xbf16, #tpu.memory_space<vmem>>, vector<12x256xbf16>
    %c0_i32_278 = arith.constant 0 : i32
    %411 = arith.sitofp %c0_i32_278 : i32 to bf16
    %412 = vector.shape_cast %367 : vector<1x256xi1> to vector<1x256xi1>
    %413 = vector.broadcast %412 : vector<1x256xi1> to vector<12x256xi1>
    %414 = vector.broadcast %411 : bf16 to vector<12x256xbf16>
    %415 = arith.select %413, %410, %414 : vector<12x256xi1>, vector<12x256xbf16>
    %c12_279 = arith.constant 12 : index
    %c768_280 = arith.constant 768 : index
    %416 = vector.load %arg10[%c12_279, %c768_280] : memref<36x1024xbf16, #tpu.memory_space<vmem>>, vector<12x256xbf16>
    tpu.vector_store %arg10[%c12_279, %c768_280], %415 {strides = array<i32>} : memref<36x1024xbf16, #tpu.memory_space<vmem>>, vector<12x256xbf16>,
    %c0_i32_281 = arith.constant 0 : i32
    %417 = arith.sitofp %c0_i32_281 : i32 to bf16
    %418 = vector.shape_cast %370 : vector<1x256xi1> to vector<1x256xi1>
    %419 = vector.broadcast %418 : vector<1x256xi1> to vector<12x256xi1>
    %420 = vector.broadcast %417 : bf16 to vector<12x256xbf16>
    %421 = arith.select %419, %410, %420 : vector<12x256xi1>, vector<12x256xbf16>
    %c12_282 = arith.constant 12 : index
    %c768_283 = arith.constant 768 : index
    %422 = vector.load %arg11[%c12_282, %c768_283] : memref<36x1024xbf16, #tpu.memory_space<vmem>>, vector<12x256xbf16>
    tpu.vector_store %arg11[%c12_282, %c768_283], %421 {strides = array<i32>} : memref<36x1024xbf16, #tpu.memory_space<vmem>>, vector<12x256xbf16>,
    %c8_284 = arith.constant 8 : index
    %c0_285 = arith.constant 0 : index
    %423 = vector.load %arg6[%c8_284, %c0_285] : memref<9x256xf32, #tpu.memory_space<vmem>>, vector<1x256xf32>
    %cst_286 = arith.constant 5.000000e-01 : f32
    %424 = vector.broadcast %cst_286 : f32 to vector<1x256xf32>
    %425 = arith.cmpf ogt, %423, %424 : vector<1x256xf32>
    %c8_287 = arith.constant 8 : index
    %c0_288 = arith.constant 0 : index
    %426 = vector.load %arg7[%c8_287, %c0_288] : memref<9x256xf32, #tpu.memory_space<vmem>>, vector<1x256xf32>
    %cst_289 = arith.constant 5.000000e-01 : f32
    %427 = vector.broadcast %cst_289 : f32 to vector<1x256xf32>
    %428 = arith.cmpf ogt, %426, %427 : vector<1x256xf32>
    %c0_290 = arith.constant 0 : index
    %c145 = arith.constant 145 : index
    %429 = vector.load %arg9[%c0_290, %c145] : memref<24x512xbf16, #tpu.memory_space<vmem>>, vector<12x256xbf16>
    %c0_i32_291 = arith.constant 0 : i32
    %430 = arith.sitofp %c0_i32_291 : i32 to bf16
    %431 = vector.shape_cast %425 : vector<1x256xi1> to vector<1x256xi1>
    %432 = vector.broadcast %431 : vector<1x256xi1> to vector<12x256xi1>
    %433 = vector.broadcast %430 : bf16 to vector<12x256xbf16>
    %434 = arith.select %432, %429, %433 : vector<12x256xi1>, vector<12x256xbf16>
    %c24_292 = arith.constant 24 : index
    %c0_293 = arith.constant 0 : index
    %435 = vector.load %arg10[%c24_292, %c0_293] : memref<36x1024xbf16, #tpu.memory_space<vmem>>, vector<12x256xbf16>
    tpu.vector_store %arg10[%c24_292, %c0_293], %434 {strides = array<i32>} : memref<36x1024xbf16, #tpu.memory_space<vmem>>, vector<12x256xbf16>,
    %c0_i32_294 = arith.constant 0 : i32
    %436 = arith.sitofp %c0_i32_294 : i32 to bf16
    %437 = vector.shape_cast %428 : vector<1x256xi1> to vector<1x256xi1>
    %438 = vector.broadcast %437 : vector<1x256xi1> to vector<12x256xi1>
    %439 = vector.broadcast %436 : bf16 to vector<12x256xbf16>
    %440 = arith.select %438, %429, %439 : vector<12x256xi1>, vector<12x256xbf16>
    %c24_295 = arith.constant 24 : index
    %c0_296 = arith.constant 0 : index
    %441 = vector.load %arg11[%c24_295, %c0_296] : memref<36x1024xbf16, #tpu.memory_space<vmem>>, vector<12x256xbf16>
    tpu.vector_store %arg11[%c24_295, %c0_296], %440 {strides = array<i32>} : memref<36x1024xbf16, #tpu.memory_space<vmem>>, vector<12x256xbf16>,
    %c4_297 = arith.constant 4 : index
    %c145_298 = arith.constant 145 : index
    %442 = vector.load %arg9[%c4_297, %c145_298] : memref<24x512xbf16, #tpu.memory_space<vmem>>, vector<12x256xbf16>
    %c0_i32_299 = arith.constant 0 : i32
    %443 = arith.sitofp %c0_i32_299 : i32 to bf16
    %444 = vector.shape_cast %425 : vector<1x256xi1> to vector<1x256xi1>
    %445 = vector.broadcast %444 : vector<1x256xi1> to vector<12x256xi1>
    %446 = vector.broadcast %443 : bf16 to vector<12x256xbf16>
    %447 = arith.select %445, %442, %446 : vector<12x256xi1>, vector<12x256xbf16>
    %c24_300 = arith.constant 24 : index
    %c256_301 = arith.constant 256 : index
    %448 = vector.load %arg10[%c24_300, %c256_301] : memref<36x1024xbf16, #tpu.memory_space<vmem>>, vector<12x256xbf16>
    tpu.vector_store %arg10[%c24_300, %c256_301], %447 {strides = array<i32>} : memref<36x1024xbf16, #tpu.memory_space<vmem>>, vector<12x256xbf16>,
    %c0_i32_302 = arith.constant 0 : i32
    %449 = arith.sitofp %c0_i32_302 : i32 to bf16
    %450 = vector.shape_cast %428 : vector<1x256xi1> to vector<1x256xi1>
    %451 = vector.broadcast %450 : vector<1x256xi1> to vector<12x256xi1>
    %452 = vector.broadcast %449 : bf16 to vector<12x256xbf16>
    %453 = arith.select %451, %442, %452 : vector<12x256xi1>, vector<12x256xbf16>
    %c24_303 = arith.constant 24 : index
    %c256_304 = arith.constant 256 : index
    %454 = vector.load %arg11[%c24_303, %c256_304] : memref<36x1024xbf16, #tpu.memory_space<vmem>>, vector<12x256xbf16>
    tpu.vector_store %arg11[%c24_303, %c256_304], %453 {strides = array<i32>} : memref<36x1024xbf16, #tpu.memory_space<vmem>>, vector<12x256xbf16>,
    %c8_305 = arith.constant 8 : index
    %c145_306 = arith.constant 145 : index
    %455 = vector.load %arg9[%c8_305, %c145_306] : memref<24x512xbf16, #tpu.memory_space<vmem>>, vector<12x256xbf16>
    %c0_i32_307 = arith.constant 0 : i32
    %456 = arith.sitofp %c0_i32_307 : i32 to bf16
    %457 = vector.shape_cast %425 : vector<1x256xi1> to vector<1x256xi1>
    %458 = vector.broadcast %457 : vector<1x256xi1> to vector<12x256xi1>
    %459 = vector.broadcast %456 : bf16 to vector<12x256xbf16>
    %460 = arith.select %458, %455, %459 : vector<12x256xi1>, vector<12x256xbf16>
    %c24_308 = arith.constant 24 : index
    %c512_309 = arith.constant 512 : index
    %461 = vector.load %arg10[%c24_308, %c512_309] : memref<36x1024xbf16, #tpu.memory_space<vmem>>, vector<12x256xbf16>
    tpu.vector_store %arg10[%c24_308, %c512_309], %460 {strides = array<i32>} : memref<36x1024xbf16, #tpu.memory_space<vmem>>, vector<12x256xbf16>,
    %c0_i32_310 = arith.constant 0 : i32
    %462 = arith.sitofp %c0_i32_310 : i32 to bf16
    %463 = vector.shape_cast %428 : vector<1x256xi1> to vector<1x256xi1>
    %464 = vector.broadcast %463 : vector<1x256xi1> to vector<12x256xi1>
    %465 = vector.broadcast %462 : bf16 to vector<12x256xbf16>
    %466 = arith.select %464, %455, %465 : vector<12x256xi1>, vector<12x256xbf16>
    %c24_311 = arith.constant 24 : index
    %c512_312 = arith.constant 512 : index
    %467 = vector.load %arg11[%c24_311, %c512_312] : memref<36x1024xbf16, #tpu.memory_space<vmem>>, vector<12x256xbf16>
    tpu.vector_store %arg11[%c24_311, %c512_312], %466 {strides = array<i32>} : memref<36x1024xbf16, #tpu.memory_space<vmem>>, vector<12x256xbf16>,
    %c12_313 = arith.constant 12 : index
    %c145_314 = arith.constant 145 : index
    %468 = vector.load %arg9[%c12_313, %c145_314] : memref<24x512xbf16, #tpu.memory_space<vmem>>, vector<12x256xbf16>
    %c0_i32_315 = arith.constant 0 : i32
    %469 = arith.sitofp %c0_i32_315 : i32 to bf16
    %470 = vector.shape_cast %425 : vector<1x256xi1> to vector<1x256xi1>
    %471 = vector.broadcast %470 : vector<1x256xi1> to vector<12x256xi1>
    %472 = vector.broadcast %469 : bf16 to vector<12x256xbf16>
    %473 = arith.select %471, %468, %472 : vector<12x256xi1>, vector<12x256xbf16>
    %c24_316 = arith.constant 24 : index
    %c768_317 = arith.constant 768 : index
    %474 = vector.load %arg10[%c24_316, %c768_317] : memref<36x1024xbf16, #tpu.memory_space<vmem>>, vector<12x256xbf16>
    tpu.vector_store %arg10[%c24_316, %c768_317], %473 {strides = array<i32>} : memref<36x1024xbf16, #tpu.memory_space<vmem>>, vector<12x256xbf16>,
    %c0_i32_318 = arith.constant 0 : i32
    %475 = arith.sitofp %c0_i32_318 : i32 to bf16
    %476 = vector.shape_cast %428 : vector<1x256xi1> to vector<1x256xi1>
    %477 = vector.broadcast %476 : vector<1x256xi1> to vector<12x256xi1>
    %478 = vector.broadcast %475 : bf16 to vector<12x256xbf16>
    %479 = arith.select %477, %468, %478 : vector<12x256xi1>, vector<12x256xbf16>
    %c24_319 = arith.constant 24 : index
    %c768_320 = arith.constant 768 : index
    %480 = vector.load %arg11[%c24_319, %c768_320] : memref<36x1024xbf16, #tpu.memory_space<vmem>>, vector<12x256xbf16>
    tpu.vector_store %arg11[%c24_319, %c768_320], %479 {strides = array<i32>} : memref<36x1024xbf16, #tpu.memory_space<vmem>>, vector<12x256xbf16>,
    %c2_321 = arith.constant 2 : index
    %c0_322 = arith.constant 0 : index
    %c0_323 = arith.constant 0 : index
    %481 = vector.load %arg5[%c2_321, %c0_322, %c0_323] : memref<3x16x36xbf16, #tpu.memory_space<vmem>>, vector<1x16x36xbf16>
    %482 = vector.shape_cast %481 : vector<1x16x36xbf16> to vector<16x36xbf16>
    %483 = vector.extract_strided_slice %482 {offsets = [0, 0], sizes = [8, 36], strides = [1, 1]} : vector<16x36xbf16> to vector<8x36xbf16>
    %c0_324 = arith.constant 0 : index
    %c0_325 = arith.constant 0 : index
    %484 = vector.load %arg10[%c0_324, %c0_325] : memref<36x1024xbf16, #tpu.memory_space<vmem>>, vector<36x1024xbf16>
    %cst_326 = arith.constant dense<0.000000e+00> : vector<8x1024xf32>
    %485 = tpu.matmul %483, %484, %cst_326 {dimension_numbers = #tpu.dot_dimension_numbers<[1], [0], [0], [1], [0, 0, 1, 1], [], []>} : vector<8x36xbf16>, vector<36x1024xbf16>, vector<8x1024xf32> -> vector<8x1024xf32>
    %486 = vector.extract_strided_slice %482 {offsets = [8, 0], sizes = [8, 36], strides = [1, 1]} : vector<16x36xbf16> to vector<8x36xbf16>
    %c0_327 = arith.constant 0 : index
    %c0_328 = arith.constant 0 : index
    %487 = vector.load %arg11[%c0_327, %c0_328] : memref<36x1024xbf16, #tpu.memory_space<vmem>>, vector<36x1024xbf16>
    %cst_329 = arith.constant dense<0.000000e+00> : vector<8x1024xf32>
    %488 = tpu.matmul %486, %487, %cst_329 {dimension_numbers = #tpu.dot_dimension_numbers<[1], [0], [0], [1], [0, 0, 1, 1], [], []>} : vector<8x36xbf16>, vector<36x1024xbf16>, vector<8x1024xf32> -> vector<8x1024xf32>
    %489 = arith.addf %305, %485 : vector<8x1024xf32>
    %490 = arith.addf %306, %488 : vector<8x1024xf32>
    %cst_330 = arith.constant 0.000000e+00 : f32
    %491 = vector.broadcast %cst_330 : f32 to vector<8x1024xf32>
    %492 = arith.cmpf oge, %489, %491 : vector<8x1024xf32>
    %cst_331 = arith.constant 0.00999999977 : f32
    %493 = vector.broadcast %cst_331 : f32 to vector<8x1024xf32>
    %494 = arith.mulf %493, %489 : vector<8x1024xf32>
    %495 = arith.select %492, %489, %494 : vector<8x1024xi1>, vector<8x1024xf32>
    %cst_332 = arith.constant 0.000000e+00 : f32
    %496 = vector.broadcast %cst_332 : f32 to vector<8x1024xf32>
    %497 = arith.cmpf oge, %490, %496 : vector<8x1024xf32>
    %cst_333 = arith.constant 0.00999999977 : f32
    %498 = vector.broadcast %cst_333 : f32 to vector<8x1024xf32>
    %499 = arith.mulf %498, %490 : vector<8x1024xf32>
    %500 = arith.select %497, %490, %499 : vector<8x1024xi1>, vector<8x1024xf32>
    %501 = arith.addf %495, %500 : vector<8x1024xf32>
    %502 = arith.truncf %501 : vector<8x1024xf32> to vector<8x1024xbf16>
    %c0_334 = arith.constant 0 : index
    %c0_335 = arith.constant 0 : index
    %c0_336 = arith.constant 0 : index
    %c0_337 = arith.constant 0 : index
    %c0_338 = arith.constant 0 : index
    %503 = vector.load %arg8[%c0_334, %c0_335, %c0_336, %c0_337, %c0_338] : memref<1x8x1x1x1024xbf16, #tpu.memory_space<vmem>>, vector<1x8x1x1x1024xbf16>
    %504 = vector.shape_cast %503 : vector<1x8x1x1x1024xbf16> to vector<8x1024xbf16>
    %505 = vector.shape_cast %502 : vector<8x1024xbf16> to vector<1x8x1x1x1024xbf16>
    tpu.vector_store %arg8[%c0_334, %c0_335, %c0_336, %c0_337, %c0_338], %505 {strides = array<i32>} : memref<1x8x1x1x1024xbf16, #tpu.memory_space<vmem>>, vector<1x8x1x1x1024xbf16>,
    return
  }
  func.func @transform_0(%arg0: i32, %arg1: i32) -> (i32, i32, i32, i32, i32) {
    %c0_i32 = arith.constant 0 : i32
    %c0_i32_0 = arith.constant 0 : i32
    %c0_i32_1 = arith.constant 0 : i32
    %c0_i32_2 = arith.constant 0 : i32
    return %arg0, %c0_i32, %arg1, %c0_i32_0, %c0_i32_1 : i32, i32, i32, i32, i32
  }
  func.func @transform_1(%arg0: i32, %arg1: i32) -> (i32, i32, i32, i32, i32) {
    %c4_i32 = arith.constant 4 : i32
    %0 = arith.muli %arg1, %c4_i32 : i32
    %c1_i32 = arith.constant 1 : i32
    %1 = arith.subi %0, %c1_i32 : i32
    %c0_i32 = arith.constant 0 : i32
    %2 = arith.maxsi %1, %c0_i32 : i32
    %c0_i32_0 = arith.constant 0 : i32
    %c0_i32_1 = arith.constant 0 : i32
    %c0_i32_2 = arith.constant 0 : i32
    %c0_i32_3 = arith.constant 0 : i32
    return %arg0, %c0_i32_0, %2, %c0_i32_1, %c0_i32_2 : i32, i32, i32, i32, i32
  }
  func.func @transform_2(%arg0: i32, %arg1: i32) -> (i32, i32, i32, i32, i32) {
    %c4_i32 = arith.constant 4 : i32
    %0 = arith.muli %arg1, %c4_i32 : i32
    %c4_i32_0 = arith.constant 4 : i32
    %1 = arith.addi %0, %c4_i32_0 : i32
    %c11_i32 = arith.constant 11 : i32
    %2 = arith.minsi %1, %c11_i32 : i32
    %c0_i32 = arith.constant 0 : i32
    %c0_i32_1 = arith.constant 0 : i32
    %c0_i32_2 = arith.constant 0 : i32
    %c0_i32_3 = arith.constant 0 : i32
    return %arg0, %c0_i32, %2, %c0_i32_1, %c0_i32_2 : i32, i32, i32, i32, i32
  }
  func.func @transform_3(%arg0: i32, %arg1: i32) -> (i32, i32, i32) {
    %c0_i32 = arith.constant 0 : i32
    %c0_i32_0 = arith.constant 0 : i32
    %c0_i32_1 = arith.constant 0 : i32
    %c0_i32_2 = arith.constant 0 : i32
    return %c0_i32, %c0_i32_0, %c0_i32_1 : i32, i32, i32
  }
  func.func @transform_4(%arg0: i32, %arg1: i32) -> (i32, i32) {
    %c0_i32 = arith.constant 0 : i32
    %c0_i32_0 = arith.constant 0 : i32
    %c0_i32_1 = arith.constant 0 : i32
    return %c0_i32, %c0_i32_0 : i32, i32
  }
  func.func @transform_5(%arg0: i32, %arg1: i32) -> (i32, i32) {
    %c0_i32 = arith.constant 0 : i32
    %c0_i32_0 = arith.constant 0 : i32
    %c0_i32_1 = arith.constant 0 : i32
    return %c0_i32, %c0_i32_0 : i32, i32
  }
  func.func @transform_6(%arg0: i32, %arg1: i32) -> (i32, i32, i32, i32, i32) {
    %c0_i32 = arith.constant 0 : i32
    %c0_i32_0 = arith.constant 0 : i32
    %c0_i32_1 = arith.constant 0 : i32
    %c0_i32_2 = arith.constant 0 : i32
    return %arg0, %c0_i32, %arg1, %c0_i32_0, %c0_i32_1 : i32, i32, i32, i32, i32
  }
}

</mosaic_0001>

<llo_original>
// kernel: glconv_forward.1
$region0: #{glconv_forward.1}
  #allocation0 [shape = 'u32[]', space=smem, size = 0x4, offset = 0x4, fixed_abs, tag = 'smem constant byte address 0x4 - core index']
  #allocation1 [shape = 'u32[72,128]{1,0:T(1,128)}', space=vmem, size = 0x9000, scoped, tag = 'internal scratch']
  #allocation2 [shape = 'bf16[24,512]{1,0:T(8,128)(2,1)}', space=vmem, size = 0x6000, scoped, tag = 'scratch operand']
  #allocation3 [shape = 'bf16[36,1024]{1,0:T(8,128)(2,1)}', space=vmem, size = 0x14000, scoped, tag = 'scratch operand']
  #allocation4 [shape = 'bf16[36,1024]{1,0:T(8,128)(2,1)}', space=vmem, size = 0x14000, scoped, tag = 'scratch operand']
  %s0 = inlined_call_operand.vmem [shape: bf16[2,4,3,1,1024], index: 0, kind: input, shape index: {}]
  %s1 = inlined_call_operand.vmem [shape: bf16[2,4,12,1,256], index: 1, kind: input, shape index: {}, may-alias: {1,2}]
  %s2 = inlined_call_operand.vmem [shape: bf16[2,4,12,1,256], index: 2, kind: input, shape index: {}, may-alias: {1,2}]
  %s3 = inlined_call_operand.vmem [shape: bf16[3,16,36], index: 3, kind: input, shape index: {}]
  %s4 = inlined_call_operand.vmem [shape: f32[9,256], index: 4, kind: input, shape index: {}]
  %s5 = inlined_call_operand.vmem [shape: f32[9,256], index: 5, kind: input, shape index: {}]
  %s6 = inlined_call_operand.vmem [shape: bf16[2,8,3,1,1024], index: 6, kind: output, shape index: {}]
  %s7 = sld [smem:[#allocation0]]
  $region227: #{glconv_forward.1} parent=0
    _
  %s9 = ssub.s32 1, %s7
  %s10 = scalar_select 0, %s9, %s7
  $region1: #{glconv_forward.1} parent=0
    #allocation5 [shape = 'u8[32768]{0}', space=vmem, size = 0x8000, scoped, tag = 'input window, operand 0']
    #allocation6 [shape = 'u8[8192]{0}', space=vmem, size = 0x2000, scoped, tag = 'input window, operand 1']
    #allocation7 [shape = 'u8[8192]{0}', space=vmem, size = 0x2000, scoped, tag = 'input window, operand 2']
    #allocation8 [shape = 'u8[65536]{0}', space=vmem, size = 0x10000, scoped, tag = 'output window, operand 0']
    loop: start=0, step=1, limit=8
    $region2: #{glconv_forward.1} parent=1 // loop_pre_header
      _
    $region3: #{glconv_forward.1} parent=1 // loop_header
      %s12 = sphi 0, %s16
      %p13 = scmp.ge.s32.totalorder %s12, 8
      %s19 = sphi 0, %s31
      %s20 = sphi 0, %s27
      %s21 = sphi 0, %s19
      %s22 = sphi 0, %s20
      %s23 = sphi 0, %s21
      %s24 = sphi 0, %s22
      %s36 = sphi 0, %s38
      %s39 = sphi 0, %s36
      %s40 = sphi 0, %s39
      %s56 = sphi 0, %s40
      %s72 = sphi 0, %s74
      %s75 = sphi 0, %s72
      %s76 = sphi 0, %s75
      %s92 = sphi 0, %s76
      %s108 = sphi 0, %s110
      %s111 = sphi 0, %s108
      %s112 = sphi 0, %s111
      %s128 = sphi 0, %s112
      %s132 = sphi 0, %s132
      %s134 = sphi 0, %s132
      %s135 = sphi 0, %s134
      %s149 = sphi 0, %s135
      %s153 = sphi 0, %s153
      %s155 = sphi 0, %s153
      %s156 = sphi 0, %s155
      %s170 = sphi 0, %s156
      %s174 = sphi 0, %s174
      %s176 = sphi 0, %s174
      %s177 = sphi 0, %s176
      %s191 = sphi 0, %s177
      %s199 = sphi 0, %s201
      %s202 = sphi 0, %s199
      %s203 = sphi 0, %s202
      %s219 = sphi 0, %s203
    $region4: #{glconv_forward.1} parent=1 // loop_header_branch
      %15 = sbr.rel (%p13) target = $region8
    $region5: #{glconv_forward.1} parent=1 // loop_body
      %s17 = ssub.s32 %s12, 1
      %s18 = ssub.s32 %s12, 2
      %s25 = sadd.s32 1, %s20
      %p26 = scmp.ge.s32.totalorder %s25, 3
      %s27 = scalar_select %p26, 0, %s25
      %s28 = sadd.s32 1, %s19
      %s29 = scalar_select %p26, %s28, %s19
      %p30 = scmp.ge.s32.totalorder %s29, 2
      %s31 = scalar_select %p30, 0, %s29
      %s32 = ssub.s32 %s19, %s31
      %s33 = ssub.s32 %s20, %s27
      %s34 = sor.u32 %s32, %s33
      %p35 = scmp.eq.s32.totalorder %s34, 0
      %s37 = sadd.s32 %s36, 1
      %s38 = scalar_select %p35, %s36, %s37
      %p41 = pneg %p35
      %p42 = scmp.eq.s32.totalorder %s12, 5
      %p43 = por %p41, %p42
      %p44 = scmp.ne.s32.totalorder %s36, %s39
      %p45 = scmp.eq.s32.totalorder %s12, 0
      %p46 = por %p44, %p45
      %p47 = scmp.ne.s32.totalorder %s36, %s39
      %p48 = scmp.eq.s32.totalorder %s17, 5
      %p49 = por %p47, %p48
      %p50 = scmp.ne.s32.totalorder %s39, %s40
      %p51 = scmp.eq.s32.totalorder %s17, 0
      %p52 = por %p50, %p51
      %p53 = scmp.ne.s32.totalorder %s39, %s40
      %p54 = scmp.eq.s32.totalorder %s18, 5
      %p55 = por %p53, %p54
      %p57 = scmp.ne.s32.totalorder %s40, %s56
      %p58 = scmp.eq.s32.totalorder %s18, 0
      %p59 = por %p57, %p58
      %s60 = smul.u32 %s20, 4
      %s61 = ssub.s32 %s60, 1
      %p62 = scmp.gt.s32.totalorder %s61, 0
      %s63 = scalar_select %p62, %s61, 0
      %s64 = smul.u32 %s27, 4
      %s65 = ssub.s32 %s64, 1
      %p66 = scmp.gt.s32.totalorder %s65, 0
      %s67 = scalar_select %p66, %s65, 0
      %s68 = ssub.s32 %s19, %s31
      %s69 = ssub.s32 %s63, %s67
      %s70 = sor.u32 %s68, %s69
      %p71 = scmp.eq.s32.totalorder %s70, 0
      %s73 = sadd.s32 %s72, 1
      %s74 = scalar_select %p71, %s72, %s73
      %p77 = pneg %p71
      %p78 = scmp.eq.s32.totalorder %s12, 5
      %p79 = por %p77, %p78
      %p80 = scmp.ne.s32.totalorder %s72, %s75
      %p81 = scmp.eq.s32.totalorder %s12, 0
      %p82 = por %p80, %p81
      %p83 = scmp.ne.s32.totalorder %s72, %s75
      %p84 = scmp.eq.s32.totalorder %s17, 5
      %p85 = por %p83, %p84
      %p86 = scmp.ne.s32.totalorder %s75, %s76
      %p87 = scmp.eq.s32.totalorder %s17, 0
      %p88 = por %p86, %p87
      %p89 = scmp.ne.s32.totalorder %s75, %s76
      %p90 = scmp.eq.s32.totalorder %s18, 5
      %p91 = por %p89, %p90
      %p93 = scmp.ne.s32.totalorder %s76, %s92
      %p94 = scmp.eq.s32.totalorder %s18, 0
      %p95 = por %p93, %p94
      %s96 = smul.u32 %s20, 4
      %s97 = sadd.s32 %s96, 4
      %p98 = scmp.lt.s32.totalorder %s97, 11
      %s99 = scalar_select %p98, %s97, 11
      %s100 = smul.u32 %s27, 4
      %s101 = sadd.s32 %s100, 4
      %p102 = scmp.lt.s32.totalorder %s101, 11
      %s103 = scalar_select %p102, %s101, 11
      %s104 = ssub.s32 %s19, %s31
      %s105 = ssub.s32 %s99, %s103
      %s106 = sor.u32 %s104, %s105
      %p107 = scmp.eq.s32.totalorder %s106, 0
      %s109 = sadd.s32 %s108, 1
      %s110 = scalar_select %p107, %s108, %s109
      %p113 = pneg %p107
      %p114 = scmp.eq.s32.totalorder %s12, 5
      %p115 = por %p113, %p114
      %p116 = scmp.ne.s32.totalorder %s108, %s111
      %p117 = scmp.eq.s32.totalorder %s12, 0
      %p118 = por %p116, %p117
      %p119 = scmp.ne.s32.totalorder %s108, %s111
      %p120 = scmp.eq.s32.totalorder %s17, 5
      %p121 = por %p119, %p120
      %p122 = scmp.ne.s32.totalorder %s111, %s112
      %p123 = scmp.eq.s32.totalorder %s17, 0
      %p124 = por %p122, %p123
      %p125 = scmp.ne.s32.totalorder %s111, %s112
      %p126 = scmp.eq.s32.totalorder %s18, 5
      %p127 = por %p125, %p126
      %p129 = scmp.ne.s32.totalorder %s112, %s128
      %p130 = scmp.eq.s32.totalorder %s18, 0
      %p131 = por %p129, %p130
      %s133 = sadd.s32 %s132, 1
      %p136 = scmp.eq.s32.totalorder %s12, 5
      %p137 = scmp.ne.s32.totalorder %s132, %s134
      %p138 = scmp.eq.s32.totalorder %s12, 0
      %p139 = por %p137, %p138
      %p140 = scmp.ne.s32.totalorder %s132, %s134
      %p141 = scmp.eq.s32.totalorder %s17, 5
      %p142 = por %p140, %p141
      %p143 = scmp.ne.s32.totalorder %s134, %s135
      %p144 = scmp.eq.s32.totalorder %s17, 0
      %p145 = por %p143, %p144
      %p146 = scmp.ne.s32.totalorder %s134, %s135
      %p147 = scmp.eq.s32.totalorder %s18, 5
      %p148 = por %p146, %p147
      %p150 = scmp.ne.s32.totalorder %s135, %s149
      %p151 = scmp.eq.s32.totalorder %s18, 0
      %p152 = por %p150, %p151
      %s154 = sadd.s32 %s153, 1
      %p157 = scmp.eq.s32.totalorder %s12, 5
      %p158 = scmp.ne.s32.totalorder %s153, %s155
      %p159 = scmp.eq.s32.totalorder %s12, 0
      %p160 = por %p158, %p159
      %p161 = scmp.ne.s32.totalorder %s153, %s155
      %p162 = scmp.eq.s32.totalorder %s17, 5
      %p163 = por %p161, %p162
      %p164 = scmp.ne.s32.totalorder %s155, %s156
      %p165 = scmp.eq.s32.totalorder %s17, 0
      %p166 = por %p164, %p165
      %p167 = scmp.ne.s32.totalorder %s155, %s156
      %p168 = scmp.eq.s32.totalorder %s18, 5
      %p169 = por %p167, %p168
      %p171 = scmp.ne.s32.totalorder %s156, %s170
      %p172 = scmp.eq.s32.totalorder %s18, 0
      %p173 = por %p171, %p172
      %s175 = sadd.s32 %s174, 1
      %p178 = scmp.eq.s32.totalorder %s12, 5
      %p179 = scmp.ne.s32.totalorder %s174, %s176
      %p180 = scmp.eq.s32.totalorder %s12, 0
      %p181 = por %p179, %p180
      %p182 = scmp.ne.s32.totalorder %s174, %s176
      %p183 = scmp.eq.s32.totalorder %s17, 5
      %p184 = por %p182, %p183
      %p185 = scmp.ne.s32.totalorder %s176, %s177
      %p186 = scmp.eq.s32.totalorder %s17, 0
      %p187 = por %p185, %p186
      %p188 = scmp.ne.s32.totalorder %s176, %s177
      %p189 = scmp.eq.s32.totalorder %s18, 5
      %p190 = por %p188, %p189
      %p192 = scmp.ne.s32.totalorder %s177, %s191
      %p193 = scmp.eq.s32.totalorder %s18, 0
      %p194 = por %p192, %p193
      %s195 = ssub.s32 %s19, %s31
      %s196 = ssub.s32 %s20, %s27
      %s197 = sor.u32 %s195, %s196
      %p198 = scmp.eq.s32.totalorder %s197, 0
      %s200 = sadd.s32 %s199, 1
      %s201 = scalar_select %p198, %s199, %s200
      %p204 = pneg %p198
      %p205 = scmp.eq.s32.totalorder %s12, 5
      %p206 = por %p204, %p205
      %p207 = scmp.ne.s32.totalorder %s199, %s202
      %p208 = scmp.eq.s32.totalorder %s12, 0
      %p209 = por %p207, %p208
      %p210 = scmp.ne.s32.totalorder %s199, %s202
      %p211 = scmp.eq.s32.totalorder %s17, 5
      %p212 = por %p210, %p211
      %p213 = scmp.ne.s32.totalorder %s202, %s203
      %p214 = scmp.eq.s32.totalorder %s17, 0
      %p215 = por %p213, %p214
      %p216 = scmp.ne.s32.totalorder %s202, %s203
      %p217 = scmp.eq.s32.totalorder %s18, 5
      %p218 = por %p216, %p217
      %p220 = scmp.ne.s32.totalorder %s203, %s219
      %p221 = scmp.eq.s32.totalorder %s18, 0
      %p222 = por %p220, %p221
      %p223 = scmp.le.s32.totalorder 1, %s12
      %p224 = scmp.lt.s32.totalorder %s12, 7
      %p225 = pnand %p223, %p224
      %p226 = pneg %p225
      // Predicated region
      $region9: #{glconv_forward.1} parent=5 // pred_check
        _
      $region10: #{glconv_forward.1} parent=5 // pred_check_branch
        %228 = sbr.rel (%p225) target = $region12
      $region11: #{glconv_forward.1} parent=5 // pred_region
        %s229 = ssub.s32 %s12, 1
        // Predicated region
        $region13: #{glconv_forward.1} parent=11 // pred_check
          %p230 = pneg %p145
        $region14: #{glconv_forward.1} parent=11 // pred_check_branch
          %232 = sbr.rel (%p230) target = $region16
        $region15: #{glconv_forward.1} parent=11 // pred_region
          _
        $region16: #{glconv_forward.1} parent=11 // pred_fallthru
          _
        // Predicated region
        $region17: #{glconv_forward.1} parent=11 // pred_check
          %p233 = pneg %p166
        $region18: #{glconv_forward.1} parent=11 // pred_check_branch
          %235 = sbr.rel (%p233) target = $region20
        $region19: #{glconv_forward.1} parent=11 // pred_region
          _
        $region20: #{glconv_forward.1} parent=11 // pred_fallthru
          _
        // Predicated region
        $region21: #{glconv_forward.1} parent=11 // pred_check
          %p236 = pneg %p187
        $region22: #{glconv_forward.1} parent=11 // pred_check_branch
          %238 = sbr.rel (%p236) target = $region24
        $region23: #{glconv_forward.1} parent=11 // pred_region
          _
        $region24: #{glconv_forward.1} parent=11 // pred_fallthru
          _
      $region12: #{glconv_forward.1} parent=5 // pred_fallthru
        _
      %p239 = scmp.lt.s32.totalorder %s12, 6
      // Predicated region
      $region25: #{glconv_forward.1} parent=5 // pred_check
        %p240 = pneg %p239
      $region26: #{glconv_forward.1} parent=5 // pred_check_branch
        %242 = sbr.rel (%p240) target = $region28
      $region27: #{glconv_forward.1} parent=5 // pred_region
        // Predicated region
        $region29: #{glconv_forward.1} parent=27 // pred_check
          %p243 = pneg %p46
        $region30: #{glconv_forward.1} parent=27 // pred_check_branch
          %245 = sbr.rel (%p243) target = $region32
        $region31: #{glconv_forward.1} parent=27 // pred_region
          %s246 = sand.u32 %s36, 1
          %s247 = sand.u32 %s36, 1
          %s248 = smul.addr %s247, 32
          %s249 = scalar_lea.vmem [#allocation5], %s248
          %s250 = smul.addr %s20, 8
          %s251 = smul.addr %s19, 96
          %s252 = sadd.s32 %s250, %s251
          %s253 = scalar_lea.vmem %s0, %s252
          // Predicated region
          $region33: #{glconv_forward.1} parent=31 // pred_check
            _
          $region34: #{glconv_forward.1} parent=31 // pred_check_branch
            %255 = sbr.rel (0) target = $region36
          $region35: #{glconv_forward.1} parent=31 // pred_region
            // Predicated region
            $region37: #{glconv_forward.1} parent=35 // pred_check
              _
            $region38: #{glconv_forward.1} parent=35 // pred_check_branch
              %257 = sbr.rel (0) target = $region40
            $region39: #{glconv_forward.1} parent=35 // pred_region
              // Predicated region
              $region52: #{glconv_forward.1} parent=39 // pred_check
                _
              $region53: #{glconv_forward.1} parent=39 // pred_check_branch
                %279 = sbr.rel (0) target = $region55
              $region54: #{glconv_forward.1} parent=39 // pred_region
                loop: start=0, step=1, limit=1
                $region56: #{glconv_forward.1} parent=54 // loop_pre_header
                  _
                $region57: #{glconv_forward.1} parent=54 // loop_header
                  %s281 = sphi 0, %s285
                  %p282 = scmp.ge.s32.totalorder %s281, 1
                  %s286 = sphi %s253, %s253
                  %s287 = sphi %s249, %s249
                $region58: #{glconv_forward.1} parent=54 // loop_header_branch
                  %284 = sbr.rel (%p282) target = $region62
                $region59: #{glconv_forward.1} parent=54 // loop_body
                  %v288 = vld [vmem:[%s286] sm:$0xff]
                  %289 = vst [vmem:[%s287] sm:$0xff] %v288
                  %v290 = vld [vmem:[%s286 + $0x18] sm:$0xff]
                  %291 = vst [vmem:[%s287 + $0x8] sm:$0xff] %v290
                  %v292 = vld [vmem:[%s286 + $0x30] sm:$0xff]
                  %293 = vst [vmem:[%s287 + $0x10] sm:$0xff] %v292
                  %v294 = vld [vmem:[%s286 + $0x48] sm:$0xff]
                  %295 = vst [vmem:[%s287 + $0x18] sm:$0xff] %v294
                $region60: #{glconv_forward.1} parent=54 // loop_footer
                  %s285 = sadd.s32 1, %s281
                $region61: #{glconv_forward.1} parent=54 // loop_footer_branch
                  %280 = sbr.rel target = $region57
                $region62: #{glconv_forward.1} parent=54 // loop_exit
                  _
              $region55: #{glconv_forward.1} parent=39 // pred_fallthru
                _
              // Predicated region
              $region63: #{glconv_forward.1} parent=39 // pred_check
                _
              $region64: #{glconv_forward.1} parent=39 // pred_check_branch
                %297 = sbr.rel target = $region66
              $region65: #{glconv_forward.1} parent=39 // pred_region
                _
              $region66: #{glconv_forward.1} parent=39 // pred_fallthru
                _
            $region40: #{glconv_forward.1} parent=35 // pred_fallthru
              _
            // Predicated region
            $region41: #{glconv_forward.1} parent=35 // pred_check
              _
            $region42: #{glconv_forward.1} parent=35 // pred_check_branch
              %259 = sbr.rel target = $region44
            $region43: #{glconv_forward.1} parent=35 // pred_region
              %s261 = ssub.s32 256, 1
              loop: start=0, step=1, limit=1
              $region45: #{glconv_forward.1} parent=43 // loop_pre_header
                _
              $region46: #{glconv_forward.1} parent=43 // loop_header
                %s263 = sphi 0, %s267
                %p264 = scmp.ge.s32.totalorder %s263, 1
                %s268 = sphi %s253, %s253
                %s269 = sphi %s249, %s249
              $region47: #{glconv_forward.1} parent=43 // loop_header_branch
                %266 = sbr.rel (%p264) target = $region51
              $region48: #{glconv_forward.1} parent=43 // loop_body
                %v270 = vld [vmem:[%s268] sm:%s261]
                %271 = vst [vmem:[%s269] sm:%s261] %v270
                %v272 = vld [vmem:[%s268 + $0x18] sm:%s261]
                %273 = vst [vmem:[%s269 + $0x8] sm:%s261] %v272
                %v274 = vld [vmem:[%s268 + $0x30] sm:%s261]
                %275 = vst [vmem:[%s269 + $0x10] sm:%s261] %v274
                %v276 = vld [vmem:[%s268 + $0x48] sm:%s261]
                %277 = vst [vmem:[%s269 + $0x18] sm:%s261] %v276
              $region49: #{glconv_forward.1} parent=43 // loop_footer
                %s267 = sadd.s32 1, %s263
              $region50: #{glconv_forward.1} parent=43 // loop_footer_branch
                %262 = sbr.rel target = $region46
              $region51: #{glconv_forward.1} parent=43 // loop_exit
                _
            $region44: #{glconv_forward.1} parent=35 // pred_fallthru
              _
          $region36: #{glconv_forward.1} parent=31 // pred_fallthru
            _
          %298 = vnop
        $region32: #{glconv_forward.1} parent=27 // pred_fallthru
          _
        // Predicated region
        $region67: #{glconv_forward.1} parent=27 // pred_check
          %p299 = pneg %p82
        $region68: #{glconv_forward.1} parent=27 // pred_check_branch
          %301 = sbr.rel (%p299) target = $region70
        $region69: #{glconv_forward.1} parent=27 // pred_region
          %s302 = sand.u32 %s72, 1
          %s303 = sand.u32 %s72, 1
          %s304 = smul.addr %s303, 8
          %s305 = scalar_lea.vmem [#allocation6], %s304
          %s306 = smul.u32 %s20, 4
          %s307 = ssub.s32 %s306, 1
          %p308 = scmp.gt.s32.totalorder %s307, 0
          %s309 = scalar_select %p308, %s307, 0
          %s310 = smul.addr %s309, 2
          %s311 = smul.addr %s19, 96
          %s312 = sadd.s32 %s310, %s311
          %s313 = scalar_lea.vmem %s1, %s312
          // Predicated region
          $region71: #{glconv_forward.1} parent=69 // pred_check
            _
          $region72: #{glconv_forward.1} parent=69 // pred_check_branch
            %315 = sbr.rel (0) target = $region74
          $region73: #{glconv_forward.1} parent=69 // pred_region
            // Predicated region
            $region75: #{glconv_forward.1} parent=73 // pred_check
              _
            $region76: #{glconv_forward.1} parent=73 // pred_check_branch
              %317 = sbr.rel target = $region78
            $region77: #{glconv_forward.1} parent=73 // pred_region
              // Predicated region
              $region90: #{glconv_forward.1} parent=77 // pred_check
                _
              $region91: #{glconv_forward.1} parent=77 // pred_check_branch
                %339 = sbr.rel (0) target = $region93
              $region92: #{glconv_forward.1} parent=77 // pred_region
                loop: start=0, step=1, limit=1
                $region94: #{glconv_forward.1} parent=92 // loop_pre_header
                  _
                $region95: #{glconv_forward.1} parent=92 // loop_header
                  %s341 = sphi 0, %s345
                  %p342 = scmp.ge.s32.totalorder %s341, 1
                  %s346 = sphi %s313, %s313
                  %s347 = sphi %s305, %s305
                $region96: #{glconv_forward.1} parent=92 // loop_header_branch
                  %344 = sbr.rel (%p342) target = $region100
                $region97: #{glconv_forward.1} parent=92 // loop_body
                  _
                $region98: #{glconv_forward.1} parent=92 // loop_footer
                  %s345 = sadd.s32 1, %s341
                $region99: #{glconv_forward.1} parent=92 // loop_footer_branch
                  %340 = sbr.rel target = $region95
                $region100: #{glconv_forward.1} parent=92 // loop_exit
                  _
                %s349 = ssub.s32 4, 1
                loop: start=0, step=1, limit=1
                $region101: #{glconv_forward.1} parent=92 // loop_pre_header
                  _
                $region102: #{glconv_forward.1} parent=92 // loop_header
                  %s351 = sphi 0, %s355
                  %p352 = scmp.ge.s32.totalorder %s351, 1
                  %s356 = sphi %s313, %s313
                  %s357 = sphi %s305, %s305
                $region103: #{glconv_forward.1} parent=92 // loop_header_branch
                  %354 = sbr.rel (%p352) target = $region107
                $region104: #{glconv_forward.1} parent=92 // loop_body
                  %v358 = vld [vmem:[%s356] sm:%s349]
                  %359 = vst [vmem:[%s357] sm:%s349] %v358
                  %v360 = vld [vmem:[%s356 + $0x18] sm:%s349]
                  %361 = vst [vmem:[%s357 + $0x2] sm:%s349] %v360
                  %v362 = vld [vmem:[%s356 + $0x30] sm:%s349]
                  %363 = vst [vmem:[%s357 + $0x4] sm:%s349] %v362
                  %v364 = vld [vmem:[%s356 + $0x48] sm:%s349]
                  %365 = vst [vmem:[%s357 + $0x6] sm:%s349] %v364
                $region105: #{glconv_forward.1} parent=92 // loop_footer
                  %s355 = sadd.s32 1, %s351
                $region106: #{glconv_forward.1} parent=92 // loop_footer_branch
                  %350 = sbr.rel target = $region102
                $region107: #{glconv_forward.1} parent=92 // loop_exit
                  _
              $region93: #{glconv_forward.1} parent=77 // pred_fallthru
                _
            $region78: #{glconv_forward.1} parent=73 // pred_fallthru
              _
            // Predicated region
            $region79: #{glconv_forward.1} parent=73 // pred_check
              _
            $region80: #{glconv_forward.1} parent=73 // pred_check_branch
              %319 = sbr.rel (0) target = $region82
            $region81: #{glconv_forward.1} parent=73 // pred_region
              %s321 = ssub.s32 4, 1
              loop: start=0, step=1, limit=1
              $region83: #{glconv_forward.1} parent=81 // loop_pre_header
                _
              $region84: #{glconv_forward.1} parent=81 // loop_header
                %s323 = sphi 0, %s327
                %p324 = scmp.ge.s32.totalorder %s323, 1
                %s328 = sphi %s313, %s313
                %s329 = sphi %s305, %s305
              $region85: #{glconv_forward.1} parent=81 // loop_header_branch
                %326 = sbr.rel (%p324) target = $region89
              $region86: #{glconv_forward.1} parent=81 // loop_body
                %v330 = vld [vmem:[%s328] sm:%s321]
                %331 = vst [vmem:[%s329] sm:%s321] %v330
                %v332 = vld [vmem:[%s328 + $0x18] sm:%s321]
                %333 = vst [vmem:[%s329 + $0x2] sm:%s321] %v332
                %v334 = vld [vmem:[%s328 + $0x30] sm:%s321]
                %335 = vst [vmem:[%s329 + $0x4] sm:%s321] %v334
                %v336 = vld [vmem:[%s328 + $0x48] sm:%s321]
                %337 = vst [vmem:[%s329 + $0x6] sm:%s321] %v336
              $region87: #{glconv_forward.1} parent=81 // loop_footer
                %s327 = sadd.s32 1, %s323
              $region88: #{glconv_forward.1} parent=81 // loop_footer_branch
                %322 = sbr.rel target = $region84
              $region89: #{glconv_forward.1} parent=81 // loop_exit
                _
            $region82: #{glconv_forward.1} parent=73 // pred_fallthru
              _
          $region74: #{glconv_forward.1} parent=69 // pred_fallthru
            _
          %366 = vnop
        $region70: #{glconv_forward.1} parent=27 // pred_fallthru
          _
        // Predicated region
        $region108: #{glconv_forward.1} parent=27 // pred_check
          %p367 = pneg %p118
        $region109: #{glconv_forward.1} parent=27 // pred_check_branch
          %369 = sbr.rel (%p367) target = $region111
        $region110: #{glconv_forward.1} parent=27 // pred_region
          %s370 = sand.u32 %s108, 1
          %s371 = sand.u32 %s108, 1
          %s372 = smul.addr %s371, 8
          %s373 = scalar_lea.vmem [#allocation7], %s372
          %s374 = smul.u32 %s20, 4
          %s375 = sadd.s32 %s374, 4
          %p376 = scmp.lt.s32.totalorder %s375, 11
          %s377 = scalar_select %p376, %s375, 11
          %s378 = smul.addr %s377, 2
          %s379 = smul.addr %s19, 96
          %s380 = sadd.s32 %s378, %s379
          %s381 = scalar_lea.vmem %s2, %s380
          // Predicated region
          $region112: #{glconv_forward.1} parent=110 // pred_check
            _
          $region113: #{glconv_forward.1} parent=110 // pred_check_branch
            %383 = sbr.rel (0) target = $region115
          $region114: #{glconv_forward.1} parent=110 // pred_region
            // Predicated region
            $region116: #{glconv_forward.1} parent=114 // pred_check
              _
            $region117: #{glconv_forward.1} parent=114 // pred_check_branch
              %385 = sbr.rel target = $region119
            $region118: #{glconv_forward.1} parent=114 // pred_region
              // Predicated region
              $region131: #{glconv_forward.1} parent=118 // pred_check
                _
              $region132: #{glconv_forward.1} parent=118 // pred_check_branch
                %407 = sbr.rel (0) target = $region134
              $region133: #{glconv_forward.1} parent=118 // pred_region
                loop: start=0, step=1, limit=1
                $region135: #{glconv_forward.1} parent=133 // loop_pre_header
                  _
                $region136: #{glconv_forward.1} parent=133 // loop_header
                  %s409 = sphi 0, %s413
                  %p410 = scmp.ge.s32.totalorder %s409, 1
                  %s414 = sphi %s381, %s381
                  %s415 = sphi %s373, %s373
                $region137: #{glconv_forward.1} parent=133 // loop_header_branch
                  %412 = sbr.rel (%p410) target = $region141
                $region138: #{glconv_forward.1} parent=133 // loop_body
                  _
                $region139: #{glconv_forward.1} parent=133 // loop_footer
                  %s413 = sadd.s32 1, %s409
                $region140: #{glconv_forward.1} parent=133 // loop_footer_branch
                  %408 = sbr.rel target = $region136
                $region141: #{glconv_forward.1} parent=133 // loop_exit
                  _
                %s417 = ssub.s32 4, 1
                loop: start=0, step=1, limit=1
                $region142: #{glconv_forward.1} parent=133 // loop_pre_header
                  _
                $region143: #{glconv_forward.1} parent=133 // loop_header
                  %s419 = sphi 0, %s423
                  %p420 = scmp.ge.s32.totalorder %s419, 1
                  %s424 = sphi %s381, %s381
                  %s425 = sphi %s373, %s373
                $region144: #{glconv_forward.1} parent=133 // loop_header_branch
                  %422 = sbr.rel (%p420) target = $region148
                $region145: #{glconv_forward.1} parent=133 // loop_body
                  %v426 = vld [vmem:[%s424] sm:%s417]
                  %427 = vst [vmem:[%s425] sm:%s417] %v426
                  %v428 = vld [vmem:[%s424 + $0x18] sm:%s417]
                  %429 = vst [vmem:[%s425 + $0x2] sm:%s417] %v428
                  %v430 = vld [vmem:[%s424 + $0x30] sm:%s417]
                  %431 = vst [vmem:[%s425 + $0x4] sm:%s417] %v430
                  %v432 = vld [vmem:[%s424 + $0x48] sm:%s417]
                  %433 = vst [vmem:[%s425 + $0x6] sm:%s417] %v432
                $region146: #{glconv_forward.1} parent=133 // loop_footer
                  %s423 = sadd.s32 1, %s419
                $region147: #{glconv_forward.1} parent=133 // loop_footer_branch
                  %418 = sbr.rel target = $region143
                $region148: #{glconv_forward.1} parent=133 // loop_exit
                  _
              $region134: #{glconv_forward.1} parent=118 // pred_fallthru
                _
            $region119: #{glconv_forward.1} parent=114 // pred_fallthru
              _
            // Predicated region
            $region120: #{glconv_forward.1} parent=114 // pred_check
              _
            $region121: #{glconv_forward.1} parent=114 // pred_check_branch
              %387 = sbr.rel (0) target = $region123
            $region122: #{glconv_forward.1} parent=114 // pred_region
              %s389 = ssub.s32 4, 1
              loop: start=0, step=1, limit=1
              $region124: #{glconv_forward.1} parent=122 // loop_pre_header
                _
              $region125: #{glconv_forward.1} parent=122 // loop_header
                %s391 = sphi 0, %s395
                %p392 = scmp.ge.s32.totalorder %s391, 1
                %s396 = sphi %s381, %s381
                %s397 = sphi %s373, %s373
              $region126: #{glconv_forward.1} parent=122 // loop_header_branch
                %394 = sbr.rel (%p392) target = $region130
              $region127: #{glconv_forward.1} parent=122 // loop_body
                %v398 = vld [vmem:[%s396] sm:%s389]
                %399 = vst [vmem:[%s397] sm:%s389] %v398
                %v400 = vld [vmem:[%s396 + $0x18] sm:%s389]
                %401 = vst [vmem:[%s397 + $0x2] sm:%s389] %v400
                %v402 = vld [vmem:[%s396 + $0x30] sm:%s389]
                %403 = vst [vmem:[%s397 + $0x4] sm:%s389] %v402
                %v404 = vld [vmem:[%s396 + $0x48] sm:%s389]
                %405 = vst [vmem:[%s397 + $0x6] sm:%s389] %v404
              $region128: #{glconv_forward.1} parent=122 // loop_footer
                %s395 = sadd.s32 1, %s391
              $region129: #{glconv_forward.1} parent=122 // loop_footer_branch
                %390 = sbr.rel target = $region125
              $region130: #{glconv_forward.1} parent=122 // loop_exit
                _
            $region123: #{glconv_forward.1} parent=114 // pred_fallthru
              _
          $region115: #{glconv_forward.1} parent=110 // pred_fallthru
            _
          %434 = vnop
        $region111: #{glconv_forward.1} parent=27 // pred_fallthru
          _
      $region28: #{glconv_forward.1} parent=5 // pred_fallthru
        _
      %p435 = scmp.le.s32.totalorder 1, %s12
      %p436 = scmp.lt.s32.totalorder %s12, 7
      %p437 = pnand %p435, %p436
      %p438 = pneg %p437
      // Predicated region
      $region149: #{glconv_forward.1} parent=5 // pred_check
        _
      $region150: #{glconv_forward.1} parent=5 // pred_check_branch
        %440 = sbr.rel (%p437) target = $region152
      $region151: #{glconv_forward.1} parent=5 // pred_region
        %s441 = ssub.s32 %s12, 1
        %s442 = sand.u32 %s39, 1
        %s443 = sand.u32 %s39, 1
        %s444 = smul.addr %s443, 32
        %s445 = scalar_lea.vmem [#allocation5], %s444
        // Predicated region
        $region153: #{glconv_forward.1} parent=151 // pred_check
          %p446 = pneg %p52
        $region154: #{glconv_forward.1} parent=151 // pred_check_branch
          %448 = sbr.rel (%p446) target = $region156
        $region155: #{glconv_forward.1} parent=151 // pred_region
          _
        $region156: #{glconv_forward.1} parent=151 // pred_fallthru
          _
        %s449 = sand.u32 %s75, 1
        %s450 = sand.u32 %s75, 1
        %s451 = smul.addr %s450, 8
        %s452 = scalar_lea.vmem [#allocation6], %s451
        // Predicated region
        $region157: #{glconv_forward.1} parent=151 // pred_check
          %p453 = pneg %p88
        $region158: #{glconv_forward.1} parent=151 // pred_check_branch
          %455 = sbr.rel (%p453) target = $region160
        $region159: #{glconv_forward.1} parent=151 // pred_region
          _
        $region160: #{glconv_forward.1} parent=151 // pred_fallthru
          _
        %s456 = sand.u32 %s111, 1
        %s457 = sand.u32 %s111, 1
        %s458 = smul.addr %s457, 8
        %s459 = scalar_lea.vmem [#allocation7], %s458
        // Predicated region
        $region161: #{glconv_forward.1} parent=151 // pred_check
          %p460 = pneg %p124
        $region162: #{glconv_forward.1} parent=151 // pred_check_branch
          %462 = sbr.rel (%p460) target = $region164
        $region163: #{glconv_forward.1} parent=151 // pred_region
          _
        $region164: #{glconv_forward.1} parent=151 // pred_fallthru
          _
        %s463 = sand.u32 %s39, 1
        %s464 = sand.u32 %s39, 1
        %s465 = smul.addr %s464, 32
        %s466 = scalar_lea.vmem [#allocation5], %s465
        %p467 = pneg %p52
        %p468 = pneg %p49
        %s469 = sand.u32 %s75, 1
        %s470 = sand.u32 %s75, 1
        %s471 = smul.addr %s470, 8
        %s472 = scalar_lea.vmem [#allocation6], %s471
        %p473 = pneg %p88
        %p474 = pneg %p85
        %s475 = sand.u32 %s111, 1
        %s476 = sand.u32 %s111, 1
        %s477 = smul.addr %s476, 8
        %s478 = scalar_lea.vmem [#allocation7], %s477
        %p479 = pneg %p124
        %p480 = pneg %p121
        %p481 = pneg %p145
        %p482 = pneg %p142
        %p483 = pneg %p166
        %p484 = pneg %p163
        %p485 = pneg %p187
        %p486 = pneg %p184
        %p487 = pneg %p215
        %p488 = pneg %p212
        %s489 = sand.u32 %s202, 1
        %s490 = sand.u32 %s202, 1
        %s491 = smul.addr %s490, 64
        %s492 = scalar_lea.vmem [#allocation8], %s491
        %s493 = smul.u32 %s22, 4
        %s494 = ssub.s32 %s493, 1
        %p495 = scmp.gt.s32.totalorder %s494, 0
        %s496 = scalar_select %p495, %s494, 0
        %s497 = smul.u32 %s22, 4
        %s498 = sadd.s32 %s497, 4
        %p499 = scmp.lt.s32.totalorder %s498, 11
        %s500 = scalar_select %p499, %s498, 11
        %v504 = vld [vmem:[%s445] sm:$0x3]
        %v505 = vld [vmem:[%s445 + $0x8] sm:$0x3]
        %v506 = vld [vmem:[%s445 + $0x10] sm:$0x3]
        %v507 = vld [vmem:[%s445 + $0x18] sm:$0x3]
        %s509 = scalar_lea.vmem [#allocation1], 2
        %510 = vst [vmem:[%s509] ss:$4 sm:$0xff] %v504
        %v511 = vld [vmem:[#allocation1] sm:$0xff]
        %s514 = scalar_lea.vmem [#allocation1], 34
        %515 = vst [vmem:[%s514] ss:$4 sm:$0xff] %v505
        %v516 = vld [vmem:[#allocation1 + $0x20] sm:$0xff]
        %519 = vst [vmem:[%s509] ss:$4 sm:$0xff] %v506
        %v520 = vld [vmem:[#allocation1] sm:$0xff]
        %523 = vst [vmem:[%s514] ss:$4 sm:$0xff] %v507
        %v524 = vld [vmem:[#allocation1 + $0x20] sm:$0xff]
        %v526 = vunpack.c.l.b16 %v511
        %v527 = vunpack.c.h.b16 %v511
        %v528 = vunpack.c.l.b16 %v516
        %v529 = vunpack.c.h.b16 %v516
        %v530 = vunpack.c.l.b16 %v520
        %v531 = vunpack.c.h.b16 %v520
        %v532 = vunpack.c.l.b16 %v524
        %v533 = vunpack.c.h.b16 %v524
        %v534 = vrot.slane %v528, 7
        %vm535 = vcmask 1045509
        %v536 = vsel %vm535, %v534, %v526
        %v537 = vrot.slane %v530, 6
        %vm538 = vcmask 1046534
        %v539 = vsel %vm538, %v537, %v536
        %v540 = vrot.slane %v532, 5
        %vm541 = vcmask 1047559
        %v542 = vsel %vm541, %v540, %v539
        %v543 = vrot.slane %v529, 7
        %v544 = vsel %vm535, %v543, %v527
        %v545 = vrot.slane %v531, 6
        %v546 = vsel %vm538, %v545, %v544
        %v547 = vrot.slane %v533, 5
        %v548 = vsel %vm541, %v547, %v546
        %v549 = vpack.c.b16 %v548, %v542
        %551 = vst [vmem:[#allocation2 + $0x4] sm:$0xcc] %v549
        %v552 = vld [vmem:[%s445 + $0x2] sm:$0x3]
        %v553 = vld [vmem:[%s445 + $0xa] sm:$0x3]
        %v554 = vld [vmem:[%s445 + $0x12] sm:$0x3]
        %v555 = vld [vmem:[%s445 + $0x1a] sm:$0x3]
        %557 = vst [vmem:[#allocation1] ss:$4 sm:$0xff] %v552
        %v558 = vld [vmem:[#allocation1] sm:$0xff]
        %s561 = scalar_lea.vmem [#allocation1], 32
        %562 = vst [vmem:[%s561] ss:$4 sm:$0xff] %v553
        %v563 = vld [vmem:[#allocation1 + $0x20] sm:$0xff]
        %566 = vst [vmem:[#allocation1] ss:$4 sm:$0xff] %v554
        %v567 = vld [vmem:[#allocation1] sm:$0xff]
        %570 = vst [vmem:[%s561] ss:$4 sm:$0xff] %v555
        %v571 = vld [vmem:[#allocation1 + $0x20] sm:$0xff]
        %v573 = vunpack.c.l.b16 %v558
        %v574 = vunpack.c.h.b16 %v558
        %v575 = vunpack.c.l.b16 %v563
        %v576 = vunpack.c.h.b16 %v563
        %v577 = vunpack.c.l.b16 %v567
        %v578 = vunpack.c.h.b16 %v567
        %v579 = vunpack.c.l.b16 %v571
        %v580 = vunpack.c.h.b16 %v571
        %v581 = vrot.slane %v575, 7
        %vm582 = vcmask 1041409
        %v583 = vsel %vm582, %v581, %v573
        %v584 = vrot.slane %v577, 6
        %vm585 = vcmask 1042434
        %v586 = vsel %vm585, %v584, %v583
        %v587 = vrot.slane %v579, 5
        %vm588 = vcmask 1043459
        %v589 = vsel %vm588, %v587, %v586
        %v590 = vrot.slane %v576, 7
        %v591 = vsel %vm582, %v590, %v574
        %v592 = vrot.slane %v578, 6
        %v593 = vsel %vm585, %v592, %v591
        %v594 = vrot.slane %v580, 5
        %v595 = vsel %vm588, %v594, %v593
        %v596 = vpack.c.b16 %v595, %v589
        %598 = vst [vmem:[#allocation2 + $0x14] sm:$0x33] %v596
        %v599 = vld [vmem:[%s445 + $0x4] sm:$0x3]
        %v600 = vld [vmem:[%s445 + $0xc] sm:$0x3]
        %v601 = vld [vmem:[%s445 + $0x14] sm:$0x3]
        %v602 = vld [vmem:[%s445 + $0x1c] sm:$0x3]
        %s604 = scalar_lea.vmem [#allocation1], 2
        %605 = vst [vmem:[%s604] ss:$4 sm:$0xff] %v599
        %v606 = vld [vmem:[#allocation1] sm:$0xff]
        %s609 = scalar_lea.vmem [#allocation1], 34
        %610 = vst [vmem:[%s609] ss:$4 sm:$0xff] %v600
        %v611 = vld [vmem:[#allocation1 + $0x20] sm:$0xff]
        %614 = vst [vmem:[%s604] ss:$4 sm:$0xff] %v601
        %v615 = vld [vmem:[#allocation1] sm:$0xff]
        %618 = vst [vmem:[%s609] ss:$4 sm:$0xff] %v602
        %v619 = vld [vmem:[#allocation1 + $0x20] sm:$0xff]
        %v621 = vunpack.c.l.b16 %v606
        %v622 = vunpack.c.h.b16 %v606
        %v623 = vunpack.c.l.b16 %v611
        %v624 = vunpack.c.h.b16 %v611
        %v625 = vunpack.c.l.b16 %v615
        %v626 = vunpack.c.h.b16 %v615
        %v627 = vunpack.c.l.b16 %v619
        %v628 = vunpack.c.h.b16 %v619
        %v629 = vrot.slane %v623, 7
        %v630 = vsel %vm535, %v629, %v621
        %v631 = vrot.slane %v625, 6
        %v632 = vsel %vm538, %v631, %v630
        %v633 = vrot.slane %v627, 5
        %v634 = vsel %vm541, %v633, %v632
        %v635 = vrot.slane %v624, 7
        %v636 = vsel %vm535, %v635, %v622
        %v637 = vrot.slane %v626, 6
        %v638 = vsel %vm538, %v637, %v636
        %v639 = vrot.slane %v628, 5
        %v640 = vsel %vm541, %v639, %v638
        %v641 = vpack.c.b16 %v640, %v634
        %643 = vst [vmem:[#allocation2 + $0x14] sm:$0xcc] %v641
        %v644 = vld [vmem:[%s445 + $0x6] sm:$0x3]
        %v645 = vld [vmem:[%s445 + $0xe] sm:$0x3]
        %v646 = vld [vmem:[%s445 + $0x16] sm:$0x3]
        %v647 = vld [vmem:[%s445 + $0x1e] sm:$0x3]
        %649 = vst [vmem:[#allocation1] ss:$4 sm:$0xff] %v644
        %v650 = vld [vmem:[#allocation1] sm:$0xff]
        %s653 = scalar_lea.vmem [#allocation1], 32
        %654 = vst [vmem:[%s653] ss:$4 sm:$0xff] %v645
        %v655 = vld [vmem:[#allocation1 + $0x20] sm:$0xff]
        %658 = vst [vmem:[#allocation1] ss:$4 sm:$0xff] %v646
        %v659 = vld [vmem:[#allocation1] sm:$0xff]
        %662 = vst [vmem:[%s653] ss:$4 sm:$0xff] %v647
        %v663 = vld [vmem:[#allocation1 + $0x20] sm:$0xff]
        %v665 = vunpack.c.l.b16 %v650
        %v666 = vunpack.c.h.b16 %v650
        %v667 = vunpack.c.l.b16 %v655
        %v668 = vunpack.c.h.b16 %v655
        %v669 = vunpack.c.l.b16 %v659
        %v670 = vunpack.c.h.b16 %v659
        %v671 = vunpack.c.l.b16 %v663
        %v672 = vunpack.c.h.b16 %v663
        %v673 = vrot.slane %v667, 7
        %v674 = vsel %vm582, %v673, %v665
        %v675 = vrot.slane %v669, 6
        %v676 = vsel %vm585, %v675, %v674
        %v677 = vrot.slane %v671, 5
        %v678 = vsel %vm588, %v677, %v676
        %v679 = vrot.slane %v668, 7
        %v680 = vsel %vm582, %v679, %v666
        %v681 = vrot.slane %v670, 6
        %v682 = vsel %vm585, %v681, %v680
        %v683 = vrot.slane %v672, 5
        %v684 = vsel %vm588, %v683, %v682
        %v685 = vpack.c.b16 %v684, %v678
        %687 = vst [vmem:[#allocation2 + $0x24] sm:$0x33] %v685
        %p688 = scmp.eq.s32.totalorder %s22, 0
        // Predicated region
        $region165: #{glconv_forward.1} parent=151 // pred_check
          %p689 = pneg %p688
        $region166: #{glconv_forward.1} parent=151 // pred_check_branch
          %691 = sbr.rel (%p689) target = $region168
        $region167: #{glconv_forward.1} parent=151 // pred_region
          %692 = vst [vmem:[#allocation2 + $0x4] sm:$0x33] 0
        $region168: #{glconv_forward.1} parent=151 // pred_fallthru
          _
        %p693 = scmp.gt.s32.totalorder %s22, 0
        // Predicated region
        $region169: #{glconv_forward.1} parent=151 // pred_check
          %p694 = pneg %p693
        $region170: #{glconv_forward.1} parent=151 // pred_check_branch
          %696 = sbr.rel (%p694) target = $region172
        $region171: #{glconv_forward.1} parent=151 // pred_region
          %v697 = vld [vmem:[%s452] sm:$0x3]
          %v698 = vld [vmem:[%s452 + $0x2] sm:$0x3]
          %v699 = vld [vmem:[%s452 + $0x4] sm:$0x3]
          %v700 = vld [vmem:[%s452 + $0x6] sm:$0x3]
          %702 = vst [vmem:[#allocation1] ss:$4 sm:$0xff] %v697
          %v703 = vld [vmem:[#allocation1] sm:$0xff]
          %s706 = scalar_lea.vmem [#allocation1], 32
          %707 = vst [vmem:[%s706] ss:$4 sm:$0xff] %v698
          %v708 = vld [vmem:[#allocation1 + $0x20] sm:$0xff]
          %711 = vst [vmem:[#allocation1] ss:$4 sm:$0xff] %v699
          %v712 = vld [vmem:[#allocation1] sm:$0xff]
          %715 = vst [vmem:[%s706] ss:$4 sm:$0xff] %v700
          %v716 = vld [vmem:[#allocation1 + $0x20] sm:$0xff]
          %v718 = vunpack.c.l.b16 %v703
          %v719 = vunpack.c.h.b16 %v703
          %v720 = vunpack.c.l.b16 %v708
          %v721 = vunpack.c.h.b16 %v708
          %v722 = vunpack.c.l.b16 %v712
          %v723 = vunpack.c.h.b16 %v712
          %v724 = vunpack.c.l.b16 %v716
          %v725 = vunpack.c.h.b16 %v716
          %v726 = vrot.slane %v720, 7
          %v727 = vsel %vm582, %v726, %v718
          %v728 = vrot.slane %v722, 6
          %v729 = vsel %vm585, %v728, %v727
          %v730 = vrot.slane %v724, 5
          %v731 = vsel %vm588, %v730, %v729
          %v732 = vrot.slane %v721, 7
          %v733 = vsel %vm582, %v732, %v719
          %v734 = vrot.slane %v723, 6
          %v735 = vsel %vm585, %v734, %v733
          %v736 = vrot.slane %v725, 5
          %v737 = vsel %vm588, %v736, %v735
          %v738 = vpack.c.b16 %v737, %v731
          %740 = vst [vmem:[#allocation2 + $0x4] sm:$0x33] %v738
        $region172: #{glconv_forward.1} parent=151 // pred_fallthru
          _
        %p741 = scmp.eq.s32.totalorder %s22, 2
        // Predicated region
        $region173: #{glconv_forward.1} parent=151 // pred_check
          %p742 = pneg %p741
        $region174: #{glconv_forward.1} parent=151 // pred_check_branch
          %744 = sbr.rel (%p742) target = $region176
        $region175: #{glconv_forward.1} parent=151 // pred_region
          %745 = vst [vmem:[#allocation2 + $0x24] sm:$0xcc] 0
        $region176: #{glconv_forward.1} parent=151 // pred_fallthru
          _
        %p746 = scmp.lt.s32.totalorder %s22, 2
        // Predicated region
        $region177: #{glconv_forward.1} parent=151 // pred_check
          %p747 = pneg %p746
        $region178: #{glconv_forward.1} parent=151 // pred_check_branch
          %749 = sbr.rel (%p747) target = $region180
        $region179: #{glconv_forward.1} parent=151 // pred_region
          %v750 = vld [vmem:[%s459] sm:$0x3]
          %v751 = vld [vmem:[%s459 + $0x2] sm:$0x3]
          %v752 = vld [vmem:[%s459 + $0x4] sm:$0x3]
          %v753 = vld [vmem:[%s459 + $0x6] sm:$0x3]
          %s755 = scalar_lea.vmem [#allocation1], 2
          %756 = vst [vmem:[%s755] ss:$4 sm:$0xff] %v750
          %v757 = vld [vmem:[#allocation1] sm:$0xff]
          %s760 = scalar_lea.vmem [#allocation1], 34
          %761 = vst [vmem:[%s760] ss:$4 sm:$0xff] %v751
          %v762 = vld [vmem:[#allocation1 + $0x20] sm:$0xff]
          %765 = vst [vmem:[%s755] ss:$4 sm:$0xff] %v752
          %v766 = vld [vmem:[#allocation1] sm:$0xff]
          %769 = vst [vmem:[%s760] ss:$4 sm:$0xff] %v753
          %v770 = vld [vmem:[#allocation1 + $0x20] sm:$0xff]
          %v772 = vunpack.c.l.b16 %v757
          %v773 = vunpack.c.h.b16 %v757
          %v774 = vunpack.c.l.b16 %v762
          %v775 = vunpack.c.h.b16 %v762
          %v776 = vunpack.c.l.b16 %v766
          %v777 = vunpack.c.h.b16 %v766
          %v778 = vunpack.c.l.b16 %v770
          %v779 = vunpack.c.h.b16 %v770
          %v780 = vrot.slane %v774, 7
          %v781 = vsel %vm535, %v780, %v772
          %v782 = vrot.slane %v776, 6
          %v783 = vsel %vm538, %v782, %v781
          %v784 = vrot.slane %v778, 5
          %v785 = vsel %vm541, %v784, %v783
          %v786 = vrot.slane %v775, 7
          %v787 = vsel %vm535, %v786, %v773
          %v788 = vrot.slane %v777, 6
          %v789 = vsel %vm538, %v788, %v787
          %v790 = vrot.slane %v779, 5
          %v791 = vsel %vm541, %v790, %v789
          %v792 = vpack.c.b16 %v791, %v785
          %794 = vst [vmem:[#allocation2 + $0x24] sm:$0xcc] %v792
        $region180: #{glconv_forward.1} parent=151 // pred_fallthru
          _
        %v795 = vld [vmem:[%s4] ss:$8 sm:$0x3]
        %vm796 = vcmp.gt.f32.partialorder %v795, 0.5
        %v797 = vld [vmem:[%s5] ss:$8 sm:$0x3]
        %vm798 = vcmp.gt.f32.partialorder %v797, 0.5
        %v799 = vld [vmem:[#allocation2] sm:$0xff]
        %v800 = vld [vmem:[#allocation2 + $0x8] sm:$0xf]
        %v801 = vld [vmem:[#allocation2 + $0x10] sm:$0x33]
        %v802 = vld [vmem:[#allocation2 + $0x18] sm:$0x3]
        %v803 = vsel %vm796, 1, 0
        %v804 = vperm.slane %v803, 0
        %v805 = vperm.slane %v803, 1
        %vm806 = vcmp.eq.s32.totalorder %v804, 1
        %vm807 = vcmp.eq.s32.totalorder %v805, 1
        %vm808 = vmpackc.low %vm807, %vm806
        %v809 = vsel %vm808, 65537, 0
        %810 = vrot.lane.b32.xlu0 %v809, 111
        %v811 = vpop.permute.xlu0 %810
        %v812 = vrot.slane %v811, 4
        %vm813 = vcmask 908288
        %v814 = vsel %vm813, %v812, %v811
        %v815 = vunpack.c.l.b16 %v814
        %v816 = vunpack.c.h.b16 %v814
        %v817 = vunpack.c.l.b16 0
        %v818 = vunpack.c.h.b16 0
        %vm819 = vcmp.ne.s32.totalorder %v815, %v817
        %vm820 = vcmp.ne.s32.totalorder %v816, %v818
        %vm821 = vmpackc.low %vm820, %vm819
        %v822 = vunpack.c.l.b16 %v812
        %v823 = vunpack.c.h.b16 %v812
        %v824 = vunpack.c.l.b16 0
        %v825 = vunpack.c.h.b16 0
        %vm826 = vcmp.ne.s32.totalorder %v822, %v824
        %vm827 = vcmp.ne.s32.totalorder %v823, %v825
        %vm828 = vmpackc.low %vm827, %vm826
        %v829 = vsel %vm821, %v799, 0
        %v830 = vsel %vm828, %v800, 0
        %v831 = vsel %vm821, %v801, 0
        %v832 = vsel %vm828, %v802, 0
        %837 = vrot.lane.b32.xlu0 %v829, 17
        %v838 = vpop.permute.xlu0 %837
        %839 = vrot.lane.b32.xlu0 %v830, 17
        %v840 = vpop.permute.xlu0 %839
        %841 = vrot.lane.b32.xlu0 %v831, 17
        %v842 = vpop.permute.xlu0 %841
        %843 = vrot.lane.b32.xlu0 %v832, 17
        %v844 = vpop.permute.xlu0 %843
        %v845 = vrot.slane %v838, 4
        %v846 = vrot.slane %v840, 4
        %v847 = vrot.slane %v842, 4
        %v848 = vrot.slane %v844, 4
        %vm849 = vcmask 1043456
        %v850 = vsel %vm849, %v845, %v846
        %vm851 = vcmask 138240
        %v852 = vsel %vm851, %v838, %v850
        %v853 = vsel %vm849, %v847, %v848
        %v854 = vsel %vm851, %v842, %v853
        %857 = vst [vmem:[#allocation3] sm:$0xff] %v852
        %858 = vst [vmem:[#allocation3 + $0x20] sm:$0x33] %v854
        %v859 = vsel %vm798, 1, 0
        %v860 = vperm.slane %v859, 0
        %v861 = vperm.slane %v859, 1
        %vm862 = vcmp.eq.s32.totalorder %v860, 1
        %vm863 = vcmp.eq.s32.totalorder %v861, 1
        %vm864 = vmpackc.low %vm863, %vm862
        %v865 = vsel %vm864, 65537, 0
        %866 = vrot.lane.b32.xlu0 %v865, 111
        %v867 = vpop.permute.xlu0 %866
        %v868 = vrot.slane %v867, 4
        %v869 = vsel %vm813, %v868, %v867
        %v870 = vunpack.c.l.b16 %v869
        %v871 = vunpack.c.h.b16 %v869
        %v872 = vunpack.c.l.b16 0
        %v873 = vunpack.c.h.b16 0
        %vm874 = vcmp.ne.s32.totalorder %v870, %v872
        %vm875 = vcmp.ne.s32.totalorder %v871, %v873
        %vm876 = vmpackc.low %vm875, %vm874
        %v877 = vunpack.c.l.b16 %v868
        %v878 = vunpack.c.h.b16 %v868
        %v879 = vunpack.c.l.b16 0
        %v880 = vunpack.c.h.b16 0
        %vm881 = vcmp.ne.s32.totalorder %v877, %v879
        %vm882 = vcmp.ne.s32.totalorder %v878, %v880
        %vm883 = vmpackc.low %vm882, %vm881
        %v884 = vsel %vm876, %v799, 0
        %v885 = vsel %vm883, %v800, 0
        %v886 = vsel %vm876, %v801, 0
        %v887 = vsel %vm883, %v802, 0
        %892 = vrot.lane.b32.xlu0 %v884, 17
        %v893 = vpop.permute.xlu0 %892
        %894 = vrot.lane.b32.xlu0 %v885, 17
        %v895 = vpop.permute.xlu0 %894
        %896 = vrot.lane.b32.xlu0 %v886, 17
        %v897 = vpop.permute.xlu0 %896
        %898 = vrot.lane.b32.xlu0 %v887, 17
        %v899 = vpop.permute.xlu0 %898
        %v900 = vrot.slane %v893, 4
        %v901 = vrot.slane %v895, 4
        %v902 = vrot.slane %v897, 4
        %v903 = vrot.slane %v899, 4
        %v904 = vsel %vm849, %v900, %v901
        %v905 = vsel %vm851, %v893, %v904
        %v906 = vsel %vm849, %v902, %v903
        %v907 = vsel %vm851, %v897, %v906
        %910 = vst [vmem:[#allocation4] sm:$0xff] %v905
        %911 = vst [vmem:[#allocation4 + $0x20] sm:$0x33] %v907
        %v912 = vld [vmem:[#allocation2] sm:$0xcc]
        %v913 = vld [vmem:[#allocation2 + $0x8] sm:$0xc]
        %v914 = vld [vmem:[#allocation2 + $0x10] sm:$0xff]
        %v915 = vld [vmem:[#allocation2 + $0x18] sm:$0xf]
        %v916 = vsel %vm821, %v912, 0
        %v917 = vsel %vm828, %v913, 0
        %v918 = vsel %vm821, %v914, 0
        %v919 = vsel %vm828, %v915, 0
        %vm924 = vcmask 1041408
        %vm925 = vcmask 1045508
        %vm926 = vmor %vm924, %vm925
        %v927 = vrot.slane %v916, 6
        %v928 = vrot.slane %v927, 4
        %v929 = vrot.slane %v918, 6
        %v930 = vsel %vm926, %v928, %v929
        %v931 = vrot.slane %v917, 6
        %v932 = vrot.slane %v931, 4
        %v933 = vrot.slane %v919, 6
        %v934 = vsel %vm926, %v932, %v933
        %v935 = vrot.slane %v929, 4
        %v936 = vrot.slane %v933, 4
        %937 = vrot.lane.b32.xlu0 %v930, 17
        %v938 = vpop.permute.xlu0 %937
        %939 = vrot.lane.b32.xlu0 %v934, 17
        %v940 = vpop.permute.xlu0 %939
        %941 = vrot.lane.b32.xlu0 %v935, 17
        %v942 = vpop.permute.xlu0 %941
        %943 = vrot.lane.b32.xlu0 %v936, 17
        %v944 = vpop.permute.xlu0 %943
        %v945 = vrot.slane %v938, 4
        %v946 = vrot.slane %v940, 4
        %v947 = vrot.slane %v942, 4
        %v948 = vrot.slane %v944, 4
        %v949 = vsel %vm849, %v945, %v946
        %v950 = vsel %vm851, %v938, %v949
        %v951 = vsel %vm849, %v947, %v948
        %v952 = vsel %vm851, %v942, %v951
        %955 = vst [vmem:[#allocation3 + $0x8] sm:$0xff] %v950
        %956 = vst [vmem:[#allocation3 + $0x28] sm:$0x33] %v952
        %v957 = vsel %vm876, %v912, 0
        %v958 = vsel %vm883, %v913, 0
        %v959 = vsel %vm876, %v914, 0
        %v960 = vsel %vm883, %v915, 0
        %v965 = vrot.slane %v957, 6
        %v966 = vrot.slane %v965, 4
        %v967 = vrot.slane %v959, 6
        %v968 = vsel %vm926, %v966, %v967
        %v969 = vrot.slane %v958, 6
        %v970 = vrot.slane %v969, 4
        %v971 = vrot.slane %v960, 6
        %v972 = vsel %vm926, %v970, %v971
        %v973 = vrot.slane %v967, 4
        %v974 = vrot.slane %v971, 4
        %975 = vrot.lane.b32.xlu0 %v968, 17
        %v976 = vpop.permute.xlu0 %975
        %977 = vrot.lane.b32.xlu0 %v972, 17
        %v978 = vpop.permute.xlu0 %977
        %979 = vrot.lane.b32.xlu0 %v973, 17
        %v980 = vpop.permute.xlu0 %979
        %981 = vrot.lane.b32.xlu0 %v974, 17
        %v982 = vpop.permute.xlu0 %981
        %v983 = vrot.slane %v976, 4
        %v984 = vrot.slane %v978, 4
        %v985 = vrot.slane %v980, 4
        %v986 = vrot.slane %v982, 4
        %v987 = vsel %vm849, %v983, %v984
        %v988 = vsel %vm851, %v976, %v987
        %v989 = vsel %vm849, %v985, %v986
        %v990 = vsel %vm851, %v980, %v989
        %993 = vst [vmem:[#allocation4 + $0x8] sm:$0xff] %v988
        %994 = vst [vmem:[#allocation4 + $0x28] sm:$0x33] %v990
        %v995 = vld [vmem:[#allocation2 + $0x10] sm:$0xff]
        %v996 = vld [vmem:[#allocation2 + $0x18] sm:$0xf]
        %v997 = vld [vmem:[#allocation2 + $0x20] sm:$0x33]
        %v998 = vld [vmem:[#allocation2 + $0x28] sm:$0x3]
        %v999 = vsel %vm821, %v995, 0
        %v1000 = vsel %vm828, %v996, 0
        %v1001 = vsel %vm821, %v997, 0
        %v1002 = vsel %vm828, %v998, 0
        %1007 = vrot.lane.b32.xlu0 %v999, 17
        %v1008 = vpop.permute.xlu0 %1007
        %1009 = vrot.lane.b32.xlu0 %v1000, 17
        %v1010 = vpop.permute.xlu0 %1009
        %1011 = vrot.lane.b32.xlu0 %v1001, 17
        %v1012 = vpop.permute.xlu0 %1011
        %1013 = vrot.lane.b32.xlu0 %v1002, 17
        %v1014 = vpop.permute.xlu0 %1013
        %v1015 = vrot.slane %v1008, 4
        %v1016 = vrot.slane %v1010, 4
        %v1017 = vrot.slane %v1012, 4
        %v1018 = vrot.slane %v1014, 4
        %v1019 = vsel %vm849, %v1015, %v1016
        %v1020 = vsel %vm851, %v1008, %v1019
        %v1021 = vsel %vm849, %v1017, %v1018
        %v1022 = vsel %vm851, %v1012, %v1021
        %1025 = vst [vmem:[#allocation3 + $0x10] sm:$0xff] %v1020
        %1026 = vst [vmem:[#allocation3 + $0x30] sm:$0x33] %v1022
        %v1027 = vsel %vm876, %v995, 0
        %v1028 = vsel %vm883, %v996, 0
        %v1029 = vsel %vm876, %v997, 0
        %v1030 = vsel %vm883, %v998, 0
        %1035 = vrot.lane.b32.xlu0 %v1027, 17
        %v1036 = vpop.permute.xlu0 %1035
        %1037 = vrot.lane.b32.xlu0 %v1028, 17
        %v1038 = vpop.permute.xlu0 %1037
        %1039 = vrot.lane.b32.xlu0 %v1029, 17
        %v1040 = vpop.permute.xlu0 %1039
        %1041 = vrot.lane.b32.xlu0 %v1030, 17
        %v1042 = vpop.permute.xlu0 %1041
        %v1043 = vrot.slane %v1036, 4
        %v1044 = vrot.slane %v1038, 4
        %v1045 = vrot.slane %v1040, 4
        %v1046 = vrot.slane %v1042, 4
        %v1047 = vsel %vm849, %v1043, %v1044
        %v1048 = vsel %vm851, %v1036, %v1047
        %v1049 = vsel %vm849, %v1045, %v1046
        %v1050 = vsel %vm851, %v1040, %v1049
        %1053 = vst [vmem:[#allocation4 + $0x10] sm:$0xff] %v1048
        %1054 = vst [vmem:[#allocation4 + $0x30] sm:$0x33] %v1050
        %v1055 = vld [vmem:[#allocation2 + $0x10] sm:$0xcc]
        %v1056 = vld [vmem:[#allocation2 + $0x18] sm:$0xc]
        %v1057 = vld [vmem:[#allocation2 + $0x20] sm:$0xff]
        %v1058 = vld [vmem:[#allocation2 + $0x28] sm:$0xf]
        %v1059 = vsel %vm821, %v1055, 0
        %v1060 = vsel %vm828, %v1056, 0
        %v1061 = vsel %vm821, %v1057, 0
        %v1062 = vsel %vm828, %v1058, 0
        %v1067 = vrot.slane %v1059, 6
        %v1068 = vrot.slane %v1067, 4
        %v1069 = vrot.slane %v1061, 6
        %v1070 = vsel %vm926, %v1068, %v1069
        %v1071 = vrot.slane %v1060, 6
        %v1072 = vrot.slane %v1071, 4
        %v1073 = vrot.slane %v1062, 6
        %v1074 = vsel %vm926, %v1072, %v1073
        %v1075 = vrot.slane %v1069, 4
        %v1076 = vrot.slane %v1073, 4
        %1077 = vrot.lane.b32.xlu0 %v1070, 17
        %v1078 = vpop.permute.xlu0 %1077
        %1079 = vrot.lane.b32.xlu0 %v1074, 17
        %v1080 = vpop.permute.xlu0 %1079
        %1081 = vrot.lane.b32.xlu0 %v1075, 17
        %v1082 = vpop.permute.xlu0 %1081
        %1083 = vrot.lane.b32.xlu0 %v1076, 17
        %v1084 = vpop.permute.xlu0 %1083
        %v1085 = vrot.slane %v1078, 4
        %v1086 = vrot.slane %v1080, 4
        %v1087 = vrot.slane %v1082, 4
        %v1088 = vrot.slane %v1084, 4
        %v1089 = vsel %vm849, %v1085, %v1086
        %v1090 = vsel %vm851, %v1078, %v1089
        %v1091 = vsel %vm849, %v1087, %v1088
        %v1092 = vsel %vm851, %v1082, %v1091
        %1095 = vst [vmem:[#allocation3 + $0x18] sm:$0xff] %v1090
        %1096 = vst [vmem:[#allocation3 + $0x38] sm:$0x33] %v1092
        %v1097 = vsel %vm876, %v1055, 0
        %v1098 = vsel %vm883, %v1056, 0
        %v1099 = vsel %vm876, %v1057, 0
        %v1100 = vsel %vm883, %v1058, 0
        %v1105 = vrot.slane %v1097, 6
        %v1106 = vrot.slane %v1105, 4
        %v1107 = vrot.slane %v1099, 6
        %v1108 = vsel %vm926, %v1106, %v1107
        %v1109 = vrot.slane %v1098, 6
        %v1110 = vrot.slane %v1109, 4
        %v1111 = vrot.slane %v1100, 6
        %v1112 = vsel %vm926, %v1110, %v1111
        %v1113 = vrot.slane %v1107, 4
        %v1114 = vrot.slane %v1111, 4
        %1115 = vrot.lane.b32.xlu0 %v1108, 17
        %v1116 = vpop.permute.xlu0 %1115
        %1117 = vrot.lane.b32.xlu0 %v1112, 17
        %v1118 = vpop.permute.xlu0 %1117
        %1119 = vrot.lane.b32.xlu0 %v1113, 17
        %v1120 = vpop.permute.xlu0 %1119
        %1121 = vrot.lane.b32.xlu0 %v1114, 17
        %v1122 = vpop.permute.xlu0 %1121
        %v1123 = vrot.slane %v1116, 4
        %v1124 = vrot.slane %v1118, 4
        %v1125 = vrot.slane %v1120, 4
        %v1126 = vrot.slane %v1122, 4
        %v1127 = vsel %vm849, %v1123, %v1124
        %v1128 = vsel %vm851, %v1116, %v1127
        %v1129 = vsel %vm849, %v1125, %v1126
        %v1130 = vsel %vm851, %v1120, %v1129
        %1133 = vst [vmem:[#allocation4 + $0x18] sm:$0xff] %v1128
        %1134 = vst [vmem:[#allocation4 + $0x38] sm:$0x33] %v1130
        %s1135 = scalar_lea.vmem %s4, 1
        %v1136 = vld [vmem:[%s1135] ss:$8 sm:$0x3]
        %vm1137 = vcmp.gt.f32.partialorder %v1136, 0.5
        %s1138 = scalar_lea.vmem %s5, 1
        %v1139 = vld [vmem:[%s1138] ss:$8 sm:$0x3]
        %vm1140 = vcmp.gt.f32.partialorder %v1139, 0.5
        %v1141 = vld [vmem:[#allocation2] sm:$0xff]
        %v1142 = vld [vmem:[#allocation2 + $0x8] sm:$0xf]
        %v1143 = vld [vmem:[#allocation2 + $0x10] sm:$0x33]
        %v1144 = vld [vmem:[#allocation2 + $0x18] sm:$0x3]
        %v1145 = vsel %vm1137, 1, 0
        %v1146 = vperm.slane %v1145, 0
        %v1147 = vperm.slane %v1145, 1
        %vm1148 = vcmp.eq.s32.totalorder %v1146, 1
        %vm1149 = vcmp.eq.s32.totalorder %v1147, 1
        %vm1150 = vmpackc.low %vm1149, %vm1148
        %v1151 = vsel %vm1150, 65537, 0
        %1152 = vrot.lane.b32.xlu0 %v1151, 112
        %v1153 = vpop.permute.xlu0 %1152
        %v1154 = vrot.slane %v1153, 4
        %vm1155 = vcmask 916480
        %v1156 = vsel %vm1155, %v1154, %v1153
        %v1157 = vunpack.c.l.b16 %v1156
        %v1158 = vunpack.c.h.b16 %v1156
        %v1159 = vunpack.c.l.b16 0
        %v1160 = vunpack.c.h.b16 0
        %vm1161 = vcmp.ne.s32.totalorder %v1157, %v1159
        %vm1162 = vcmp.ne.s32.totalorder %v1158, %v1160
        %vm1163 = vmpackc.low %vm1162, %vm1161
        %v1164 = vunpack.c.l.b16 %v1154
        %v1165 = vunpack.c.h.b16 %v1154
        %v1166 = vunpack.c.l.b16 0
        %v1167 = vunpack.c.h.b16 0
        %vm1168 = vcmp.ne.s32.totalorder %v1164, %v1166
        %vm1169 = vcmp.ne.s32.totalorder %v1165, %v1167
        %vm1170 = vmpackc.low %vm1169, %vm1168
        %v1171 = vsel %vm1163, %v1141, 0
        %v1172 = vsel %vm1170, %v1142, 0
        %v1173 = vsel %vm1163, %v1143, 0
        %v1174 = vsel %vm1170, %v1144, 0
        %v1179 = vrot.slane %v1171, 6
        %v1180 = vrot.slane %v1172, 6
        %v1181 = vrot.slane %v1179, 4
        %v1182 = vrot.slane %v1173, 6
        %v1183 = vsel %vm926, %v1181, %v1182
        %v1184 = vrot.slane %v1180, 4
        %v1185 = vrot.slane %v1174, 6
        %v1186 = vsel %vm926, %v1184, %v1185
        %1187 = vrot.lane.b32.xlu0 %v1179, 16
        %v1188 = vpop.permute.xlu0 %1187
        %1189 = vrot.lane.b32.xlu0 %v1180, 16
        %v1190 = vpop.permute.xlu0 %1189
        %1191 = vrot.lane.b32.xlu0 %v1183, 16
        %v1192 = vpop.permute.xlu0 %1191
        %1193 = vrot.lane.b32.xlu0 %v1186, 16
        %v1194 = vpop.permute.xlu0 %1193
        %v1195 = vrot.slane %v1188, 4
        %v1196 = vrot.slane %v1190, 4
        %v1197 = vrot.slane %v1192, 4
        %v1198 = vrot.slane %v1194, 4
        %v1199 = vsel %vm849, %v1195, %v1196
        %vm1200 = vcmask 130048
        %v1201 = vsel %vm1200, %v1188, %v1199
        %v1202 = vsel %vm849, %v1197, %v1198
        %v1203 = vsel %vm1200, %v1192, %v1202
        %1206 = vst [vmem:[#allocation3 + $0x20] sm:$0xcc] %v1201
        %1207 = vst [vmem:[#allocation3 + $0x40] sm:$0xff] %v1203
        %v1208 = vsel %vm1140, 1, 0
        %v1209 = vperm.slane %v1208, 0
        %v1210 = vperm.slane %v1208, 1
        %vm1211 = vcmp.eq.s32.totalorder %v1209, 1
        %vm1212 = vcmp.eq.s32.totalorder %v1210, 1
        %vm1213 = vmpackc.low %vm1212, %vm1211
        %v1214 = vsel %vm1213, 65537, 0
        %1215 = vrot.lane.b32.xlu0 %v1214, 112
        %v1216 = vpop.permute.xlu0 %1215
        %v1217 = vrot.slane %v1216, 4
        %v1218 = vsel %vm1155, %v1217, %v1216
        %v1219 = vunpack.c.l.b16 %v1218
        %v1220 = vunpack.c.h.b16 %v1218
        %v1221 = vunpack.c.l.b16 0
        %v1222 = vunpack.c.h.b16 0
        %vm1223 = vcmp.ne.s32.totalorder %v1219, %v1221
        %vm1224 = vcmp.ne.s32.totalorder %v1220, %v1222
        %vm1225 = vmpackc.low %vm1224, %vm1223
        %v1226 = vunpack.c.l.b16 %v1217
        %v1227 = vunpack.c.h.b16 %v1217
        %v1228 = vunpack.c.l.b16 0
        %v1229 = vunpack.c.h.b16 0
        %vm1230 = vcmp.ne.s32.totalorder %v1226, %v1228
        %vm1231 = vcmp.ne.s32.totalorder %v1227, %v1229
        %vm1232 = vmpackc.low %vm1231, %vm1230
        %v1233 = vsel %vm1225, %v1141, 0
        %v1234 = vsel %vm1232, %v1142, 0
        %v1235 = vsel %vm1225, %v1143, 0
        %v1236 = vsel %vm1232, %v1144, 0
        %v1241 = vrot.slane %v1233, 6
        %v1242 = vrot.slane %v1234, 6
        %v1243 = vrot.slane %v1241, 4
        %v1244 = vrot.slane %v1235, 6
        %v1245 = vsel %vm926, %v1243, %v1244
        %v1246 = vrot.slane %v1242, 4
        %v1247 = vrot.slane %v1236, 6
        %v1248 = vsel %vm926, %v1246, %v1247
        %1249 = vrot.lane.b32.xlu0 %v1241, 16
        %v1250 = vpop.permute.xlu0 %1249
        %1251 = vrot.lane.b32.xlu0 %v1242, 16
        %v1252 = vpop.permute.xlu0 %1251
        %1253 = vrot.lane.b32.xlu0 %v1245, 16
        %v1254 = vpop.permute.xlu0 %1253
        %1255 = vrot.lane.b32.xlu0 %v1248, 16
        %v1256 = vpop.permute.xlu0 %1255
        %v1257 = vrot.slane %v1250, 4
        %v1258 = vrot.slane %v1252, 4
        %v1259 = vrot.slane %v1254, 4
        %v1260 = vrot.slane %v1256, 4
        %v1261 = vsel %vm849, %v1257, %v1258
        %v1262 = vsel %vm1200, %v1250, %v1261
        %v1263 = vsel %vm849, %v1259, %v1260
        %v1264 = vsel %vm1200, %v1254, %v1263
        %1267 = vst [vmem:[#allocation4 + $0x20] sm:$0xcc] %v1262
        %1268 = vst [vmem:[#allocation4 + $0x40] sm:$0xff] %v1264
        %v1269 = vld [vmem:[#allocation2] sm:$0xcc]
        %v1270 = vld [vmem:[#allocation2 + $0x8] sm:$0xc]
        %v1271 = vld [vmem:[#allocation2 + $0x10] sm:$0xff]
        %v1272 = vld [vmem:[#allocation2 + $0x18] sm:$0xf]
        %v1273 = vsel %vm1163, %v1269, 0
        %v1274 = vsel %vm1170, %v1270, 0
        %v1275 = vsel %vm1163, %v1271, 0
        %v1276 = vsel %vm1170, %v1272, 0
        %1281 = vrot.lane.b32.xlu0 %v1273, 16
        %v1282 = vpop.permute.xlu0 %1281
        %1283 = vrot.lane.b32.xlu0 %v1274, 16
        %v1284 = vpop.permute.xlu0 %1283
        %1285 = vrot.lane.b32.xlu0 %v1275, 16
        %v1286 = vpop.permute.xlu0 %1285
        %1287 = vrot.lane.b32.xlu0 %v1276, 16
        %v1288 = vpop.permute.xlu0 %1287
        %v1289 = vrot.slane %v1282, 4
        %v1290 = vrot.slane %v1284, 4
        %v1291 = vrot.slane %v1286, 4
        %v1292 = vrot.slane %v1288, 4
        %v1293 = vsel %vm849, %v1289, %v1290
        %v1294 = vsel %vm1200, %v1282, %v1293
        %v1295 = vsel %vm849, %v1291, %v1292
        %v1296 = vsel %vm1200, %v1286, %v1295
        %1299 = vst [vmem:[#allocation3 + $0x28] sm:$0xcc] %v1294
        %1300 = vst [vmem:[#allocation3 + $0x48] sm:$0xff] %v1296
        %v1301 = vsel %vm1225, %v1269, 0
        %v1302 = vsel %vm1232, %v1270, 0
        %v1303 = vsel %vm1225, %v1271, 0
        %v1304 = vsel %vm1232, %v1272, 0
        %1309 = vrot.lane.b32.xlu0 %v1301, 16
        %v1310 = vpop.permute.xlu0 %1309
        %1311 = vrot.lane.b32.xlu0 %v1302, 16
        %v1312 = vpop.permute.xlu0 %1311
        %1313 = vrot.lane.b32.xlu0 %v1303, 16
        %v1314 = vpop.permute.xlu0 %1313
        %1315 = vrot.lane.b32.xlu0 %v1304, 16
        %v1316 = vpop.permute.xlu0 %1315
        %v1317 = vrot.slane %v1310, 4
        %v1318 = vrot.slane %v1312, 4
        %v1319 = vrot.slane %v1314, 4
        %v1320 = vrot.slane %v1316, 4
        %v1321 = vsel %vm849, %v1317, %v1318
        %v1322 = vsel %vm1200, %v1310, %v1321
        %v1323 = vsel %vm849, %v1319, %v1320
        %v1324 = vsel %vm1200, %v1314, %v1323
        %1327 = vst [vmem:[#allocation4 + $0x28] sm:$0xcc] %v1322
        %1328 = vst [vmem:[#allocation4 + $0x48] sm:$0xff] %v1324
        %v1329 = vld [vmem:[#allocation2 + $0x10] sm:$0xff]
        %v1330 = vld [vmem:[#allocation2 + $0x18] sm:$0xf]
        %v1331 = vld [vmem:[#allocation2 + $0x20] sm:$0x33]
        %v1332 = vld [vmem:[#allocation2 + $0x28] sm:$0x3]
        %v1333 = vsel %vm1163, %v1329, 0
        %v1334 = vsel %vm1170, %v1330, 0
        %v1335 = vsel %vm1163, %v1331, 0
        %v1336 = vsel %vm1170, %v1332, 0
        %v1341 = vrot.slane %v1333, 6
        %v1342 = vrot.slane %v1334, 6
        %v1343 = vrot.slane %v1341, 4
        %v1344 = vrot.slane %v1335, 6
        %v1345 = vsel %vm926, %v1343, %v1344
        %v1346 = vrot.slane %v1342, 4
        %v1347 = vrot.slane %v1336, 6
        %v1348 = vsel %vm926, %v1346, %v1347
        %1349 = vrot.lane.b32.xlu0 %v1341, 16
        %v1350 = vpop.permute.xlu0 %1349
        %1351 = vrot.lane.b32.xlu0 %v1342, 16
        %v1352 = vpop.permute.xlu0 %1351
        %1353 = vrot.lane.b32.xlu0 %v1345, 16
        %v1354 = vpop.permute.xlu0 %1353
        %1355 = vrot.lane.b32.xlu0 %v1348, 16
        %v1356 = vpop.permute.xlu0 %1355
        %v1357 = vrot.slane %v1350, 4
        %v1358 = vrot.slane %v1352, 4
        %v1359 = vrot.slane %v1354, 4
        %v1360 = vrot.slane %v1356, 4
        %v1361 = vsel %vm849, %v1357, %v1358
        %v1362 = vsel %vm1200, %v1350, %v1361
        %v1363 = vsel %vm849, %v1359, %v1360
        %v1364 = vsel %vm1200, %v1354, %v1363
        %1367 = vst [vmem:[#allocation3 + $0x30] sm:$0xcc] %v1362
        %1368 = vst [vmem:[#allocation3 + $0x50] sm:$0xff] %v1364
        %v1369 = vsel %vm1225, %v1329, 0
        %v1370 = vsel %vm1232, %v1330, 0
        %v1371 = vsel %vm1225, %v1331, 0
        %v1372 = vsel %vm1232, %v1332, 0
        %v1377 = vrot.slane %v1369, 6
        %v1378 = vrot.slane %v1370, 6
        %v1379 = vrot.slane %v1377, 4
        %v1380 = vrot.slane %v1371, 6
        %v1381 = vsel %vm926, %v1379, %v1380
        %v1382 = vrot.slane %v1378, 4
        %v1383 = vrot.slane %v1372, 6
        %v1384 = vsel %vm926, %v1382, %v1383
        %1385 = vrot.lane.b32.xlu0 %v1377, 16
        %v1386 = vpop.permute.xlu0 %1385
        %1387 = vrot.lane.b32.xlu0 %v1378, 16
        %v1388 = vpop.permute.xlu0 %1387
        %1389 = vrot.lane.b32.xlu0 %v1381, 16
        %v1390 = vpop.permute.xlu0 %1389
        %1391 = vrot.lane.b32.xlu0 %v1384, 16
        %v1392 = vpop.permute.xlu0 %1391
        %v1393 = vrot.slane %v1386, 4
        %v1394 = vrot.slane %v1388, 4
        %v1395 = vrot.slane %v1390, 4
        %v1396 = vrot.slane %v1392, 4
        %v1397 = vsel %vm849, %v1393, %v1394
        %v1398 = vsel %vm1200, %v1386, %v1397
        %v1399 = vsel %vm849, %v1395, %v1396
        %v1400 = vsel %vm1200, %v1390, %v1399
        %1403 = vst [vmem:[#allocation4 + $0x30] sm:$0xcc] %v1398
        %1404 = vst [vmem:[#allocation4 + $0x50] sm:$0xff] %v1400
        %v1405 = vld [vmem:[#allocation2 + $0x10] sm:$0xcc]
        %v1406 = vld [vmem:[#allocation2 + $0x18] sm:$0xc]
        %v1407 = vld [vmem:[#allocation2 + $0x20] sm:$0xff]
        %v1408 = vld [vmem:[#allocation2 + $0x28] sm:$0xf]
        %v1409 = vsel %vm1163, %v1405, 0
        %v1410 = vsel %vm1170, %v1406, 0
        %v1411 = vsel %vm1163, %v1407, 0
        %v1412 = vsel %vm1170, %v1408, 0
        %1417 = vrot.lane.b32.xlu0 %v1409, 16
        %v1418 = vpop.permute.xlu0 %1417
        %1419 = vrot.lane.b32.xlu0 %v1410, 16
        %v1420 = vpop.permute.xlu0 %1419
        %1421 = vrot.lane.b32.xlu0 %v1411, 16
        %v1422 = vpop.permute.xlu0 %1421
        %1423 = vrot.lane.b32.xlu0 %v1412, 16
        %v1424 = vpop.permute.xlu0 %1423
        %v1425 = vrot.slane %v1418, 4
        %v1426 = vrot.slane %v1420, 4
        %v1427 = vrot.slane %v1422, 4
        %v1428 = vrot.slane %v1424, 4
        %v1429 = vsel %vm849, %v1425, %v1426
        %v1430 = vsel %vm1200, %v1418, %v1429
        %v1431 = vsel %vm849, %v1427, %v1428
        %v1432 = vsel %vm1200, %v1422, %v1431
        %1435 = vst [vmem:[#allocation3 + $0x38] sm:$0xcc] %v1430
        %1436 = vst [vmem:[#allocation3 + $0x58] sm:$0xff] %v1432
        %v1437 = vsel %vm1225, %v1405, 0
        %v1438 = vsel %vm1232, %v1406, 0
        %v1439 = vsel %vm1225, %v1407, 0
        %v1440 = vsel %vm1232, %v1408, 0
        %1445 = vrot.lane.b32.xlu0 %v1437, 16
        %v1446 = vpop.permute.xlu0 %1445
        %1447 = vrot.lane.b32.xlu0 %v1438, 16
        %v1448 = vpop.permute.xlu0 %1447
        %1449 = vrot.lane.b32.xlu0 %v1439, 16
        %v1450 = vpop.permute.xlu0 %1449
        %1451 = vrot.lane.b32.xlu0 %v1440, 16
        %v1452 = vpop.permute.xlu0 %1451
        %v1453 = vrot.slane %v1446, 4
        %v1454 = vrot.slane %v1448, 4
        %v1455 = vrot.slane %v1450, 4
        %v1456 = vrot.slane %v1452, 4
        %v1457 = vsel %vm849, %v1453, %v1454
        %v1458 = vsel %vm1200, %v1446, %v1457
        %v1459 = vsel %vm849, %v1455, %v1456
        %v1460 = vsel %vm1200, %v1450, %v1459
        %1463 = vst [vmem:[#allocation4 + $0x38] sm:$0xcc] %v1458
        %1464 = vst [vmem:[#allocation4 + $0x58] sm:$0xff] %v1460
        %s1465 = scalar_lea.vmem %s4, 2
        %v1466 = vld [vmem:[%s1465] ss:$8 sm:$0x3]
        %vm1467 = vcmp.gt.f32.partialorder %v1466, 0.5
        %s1468 = scalar_lea.vmem %s5, 2
        %v1469 = vld [vmem:[%s1468] ss:$8 sm:$0x3]
        %vm1470 = vcmp.gt.f32.partialorder %v1469, 0.5
        %v1471 = vld [vmem:[#allocation2] sm:$0xff]
        %v1472 = vld [vmem:[#allocation2 + $0x8] sm:$0xf]
        %v1473 = vld [vmem:[#allocation2 + $0x10] sm:$0x33]
        %v1474 = vld [vmem:[#allocation2 + $0x18] sm:$0x3]
        %v1475 = vsel %vm1467, 1, 0
        %v1476 = vperm.slane %v1475, 0
        %v1477 = vperm.slane %v1475, 1
        %vm1478 = vcmp.eq.s32.totalorder %v1476, 1
        %vm1479 = vcmp.eq.s32.totalorder %v1477, 1
        %vm1480 = vmpackc.low %vm1479, %vm1478
        %v1481 = vsel %vm1480, 65537, 0
        %1482 = vrot.lane.b32.xlu0 %v1481, 113
        %v1483 = vpop.permute.xlu0 %1482
        %v1484 = vrot.slane %v1483, 4
        %vm1485 = vcmask 924672
        %v1486 = vsel %vm1485, %v1484, %v1483
        %v1487 = vunpack.c.l.b16 %v1486
        %v1488 = vunpack.c.h.b16 %v1486
        %v1489 = vunpack.c.l.b16 0
        %v1490 = vunpack.c.h.b16 0
        %vm1491 = vcmp.ne.s32.totalorder %v1487, %v1489
        %vm1492 = vcmp.ne.s32.totalorder %v1488, %v1490
        %vm1493 = vmpackc.low %vm1492, %vm1491
        %v1494 = vunpack.c.l.b16 %v1484
        %v1495 = vunpack.c.h.b16 %v1484
        %v1496 = vunpack.c.l.b16 0
        %v1497 = vunpack.c.h.b16 0
        %vm1498 = vcmp.ne.s32.totalorder %v1494, %v1496
        %vm1499 = vcmp.ne.s32.totalorder %v1495, %v1497
        %vm1500 = vmpackc.low %vm1499, %vm1498
        %v1501 = vsel %vm1493, %v1471, 0
        %v1502 = vsel %vm1500, %v1472, 0
        %v1503 = vsel %vm1493, %v1473, 0
        %v1504 = vsel %vm1500, %v1474, 0
        %1509 = vrot.lane.b32.xlu0 %v1501, 15
        %v1510 = vpop.permute.xlu0 %1509
        %1511 = vrot.lane.b32.xlu0 %v1502, 15
        %v1512 = vpop.permute.xlu0 %1511
        %1513 = vrot.lane.b32.xlu0 %v1503, 15
        %v1514 = vpop.permute.xlu0 %1513
        %1515 = vrot.lane.b32.xlu0 %v1504, 15
        %v1516 = vpop.permute.xlu0 %1515
        %v1517 = vrot.slane %v1510, 4
        %v1518 = vrot.slane %v1512, 4
        %v1519 = vrot.slane %v1514, 4
        %v1520 = vrot.slane %v1516, 4
        %v1521 = vsel %vm849, %v1517, %v1518
        %vm1522 = vcmask 121856
        %v1523 = vsel %vm1522, %v1510, %v1521
        %v1524 = vsel %vm849, %v1519, %v1520
        %v1525 = vsel %vm1522, %v1514, %v1524
        %1528 = vst [vmem:[#allocation3 + $0x60] sm:$0xff] %v1523
        %1529 = vst [vmem:[#allocation3 + $0x80] sm:$0x33] %v1525
        %v1530 = vsel %vm1470, 1, 0
        %v1531 = vperm.slane %v1530, 0
        %v1532 = vperm.slane %v1530, 1
        %vm1533 = vcmp.eq.s32.totalorder %v1531, 1
        %vm1534 = vcmp.eq.s32.totalorder %v1532, 1
        %vm1535 = vmpackc.low %vm1534, %vm1533
        %v1536 = vsel %vm1535, 65537, 0
        %1537 = vrot.lane.b32.xlu0 %v1536, 113
        %v1538 = vpop.permute.xlu0 %1537
        %v1539 = vrot.slane %v1538, 4
        %v1540 = vsel %vm1485, %v1539, %v1538
        %v1541 = vunpack.c.l.b16 %v1540
        %v1542 = vunpack.c.h.b16 %v1540
        %v1543 = vunpack.c.l.b16 0
        %v1544 = vunpack.c.h.b16 0
        %vm1545 = vcmp.ne.s32.totalorder %v1541, %v1543
        %vm1546 = vcmp.ne.s32.totalorder %v1542, %v1544
        %vm1547 = vmpackc.low %vm1546, %vm1545
        %v1548 = vunpack.c.l.b16 %v1539
        %v1549 = vunpack.c.h.b16 %v1539
        %v1550 = vunpack.c.l.b16 0
        %v1551 = vunpack.c.h.b16 0
        %vm1552 = vcmp.ne.s32.totalorder %v1548, %v1550
        %vm1553 = vcmp.ne.s32.totalorder %v1549, %v1551
        %vm1554 = vmpackc.low %vm1553, %vm1552
        %v1555 = vsel %vm1547, %v1471, 0
        %v1556 = vsel %vm1554, %v1472, 0
        %v1557 = vsel %vm1547, %v1473, 0
        %v1558 = vsel %vm1554, %v1474, 0
        %1563 = vrot.lane.b32.xlu0 %v1555, 15
        %v1564 = vpop.permute.xlu0 %1563
        %1565 = vrot.lane.b32.xlu0 %v1556, 15
        %v1566 = vpop.permute.xlu0 %1565
        %1567 = vrot.lane.b32.xlu0 %v1557, 15
        %v1568 = vpop.permute.xlu0 %1567
        %1569 = vrot.lane.b32.xlu0 %v1558, 15
        %v1570 = vpop.permute.xlu0 %1569
        %v1571 = vrot.slane %v1564, 4
        %v1572 = vrot.slane %v1566, 4
        %v1573 = vrot.slane %v1568, 4
        %v1574 = vrot.slane %v1570, 4
        %v1575 = vsel %vm849, %v1571, %v1572
        %v1576 = vsel %vm1522, %v1564, %v1575
        %v1577 = vsel %vm849, %v1573, %v1574
        %v1578 = vsel %vm1522, %v1568, %v1577
        %1581 = vst [vmem:[#allocation4 + $0x60] sm:$0xff] %v1576
        %1582 = vst [vmem:[#allocation4 + $0x80] sm:$0x33] %v1578
        %v1583 = vld [vmem:[#allocation2] sm:$0xcc]
        %v1584 = vld [vmem:[#allocation2 + $0x8] sm:$0xc]
        %v1585 = vld [vmem:[#allocation2 + $0x10] sm:$0xff]
        %v1586 = vld [vmem:[#allocation2 + $0x18] sm:$0xf]
        %v1587 = vsel %vm1493, %v1583, 0
        %v1588 = vsel %vm1500, %v1584, 0
        %v1589 = vsel %vm1493, %v1585, 0
        %v1590 = vsel %vm1500, %v1586, 0
        %v1595 = vrot.slane %v1587, 6
        %v1596 = vrot.slane %v1595, 4
        %v1597 = vrot.slane %v1589, 6
        %v1598 = vsel %vm926, %v1596, %v1597
        %v1599 = vrot.slane %v1588, 6
        %v1600 = vrot.slane %v1599, 4
        %v1601 = vrot.slane %v1590, 6
        %v1602 = vsel %vm926, %v1600, %v1601
        %v1603 = vrot.slane %v1597, 4
        %v1604 = vrot.slane %v1601, 4
        %1605 = vrot.lane.b32.xlu0 %v1598, 15
        %v1606 = vpop.permute.xlu0 %1605
        %1607 = vrot.lane.b32.xlu0 %v1602, 15
        %v1608 = vpop.permute.xlu0 %1607
        %1609 = vrot.lane.b32.xlu0 %v1603, 15
        %v1610 = vpop.permute.xlu0 %1609
        %1611 = vrot.lane.b32.xlu0 %v1604, 15
        %v1612 = vpop.permute.xlu0 %1611
        %v1613 = vrot.slane %v1606, 4
        %v1614 = vrot.slane %v1608, 4
        %v1615 = vrot.slane %v1610, 4
        %v1616 = vrot.slane %v1612, 4
        %v1617 = vsel %vm849, %v1613, %v1614
        %v1618 = vsel %vm1522, %v1606, %v1617
        %v1619 = vsel %vm849, %v1615, %v1616
        %v1620 = vsel %vm1522, %v1610, %v1619
        %1623 = vst [vmem:[#allocation3 + $0x68] sm:$0xff] %v1618
        %1624 = vst [vmem:[#allocation3 + $0x88] sm:$0x33] %v1620
        %v1625 = vsel %vm1547, %v1583, 0
        %v1626 = vsel %vm1554, %v1584, 0
        %v1627 = vsel %vm1547, %v1585, 0
        %v1628 = vsel %vm1554, %v1586, 0
        %v1633 = vrot.slane %v1625, 6
        %v1634 = vrot.slane %v1633, 4
        %v1635 = vrot.slane %v1627, 6
        %v1636 = vsel %vm926, %v1634, %v1635
        %v1637 = vrot.slane %v1626, 6
        %v1638 = vrot.slane %v1637, 4
        %v1639 = vrot.slane %v1628, 6
        %v1640 = vsel %vm926, %v1638, %v1639
        %v1641 = vrot.slane %v1635, 4
        %v1642 = vrot.slane %v1639, 4
        %1643 = vrot.lane.b32.xlu0 %v1636, 15
        %v1644 = vpop.permute.xlu0 %1643
        %1645 = vrot.lane.b32.xlu0 %v1640, 15
        %v1646 = vpop.permute.xlu0 %1645
        %1647 = vrot.lane.b32.xlu0 %v1641, 15
        %v1648 = vpop.permute.xlu0 %1647
        %1649 = vrot.lane.b32.xlu0 %v1642, 15
        %v1650 = vpop.permute.xlu0 %1649
        %v1651 = vrot.slane %v1644, 4
        %v1652 = vrot.slane %v1646, 4
        %v1653 = vrot.slane %v1648, 4
        %v1654 = vrot.slane %v1650, 4
        %v1655 = vsel %vm849, %v1651, %v1652
        %v1656 = vsel %vm1522, %v1644, %v1655
        %v1657 = vsel %vm849, %v1653, %v1654
        %v1658 = vsel %vm1522, %v1648, %v1657
        %1661 = vst [vmem:[#allocation4 + $0x68] sm:$0xff] %v1656
        %1662 = vst [vmem:[#allocation4 + $0x88] sm:$0x33] %v1658
        %v1663 = vld [vmem:[#allocation2 + $0x10] sm:$0xff]
        %v1664 = vld [vmem:[#allocation2 + $0x18] sm:$0xf]
        %v1665 = vld [vmem:[#allocation2 + $0x20] sm:$0x33]
        %v1666 = vld [vmem:[#allocation2 + $0x28] sm:$0x3]
        %v1667 = vsel %vm1493, %v1663, 0
        %v1668 = vsel %vm1500, %v1664, 0
        %v1669 = vsel %vm1493, %v1665, 0
        %v1670 = vsel %vm1500, %v1666, 0
        %1675 = vrot.lane.b32.xlu0 %v1667, 15
        %v1676 = vpop.permute.xlu0 %1675
        %1677 = vrot.lane.b32.xlu0 %v1668, 15
        %v1678 = vpop.permute.xlu0 %1677
        %1679 = vrot.lane.b32.xlu0 %v1669, 15
        %v1680 = vpop.permute.xlu0 %1679
        %1681 = vrot.lane.b32.xlu0 %v1670, 15
        %v1682 = vpop.permute.xlu0 %1681
        %v1683 = vrot.slane %v1676, 4
        %v1684 = vrot.slane %v1678, 4
        %v1685 = vrot.slane %v1680, 4
        %v1686 = vrot.slane %v1682, 4
        %v1687 = vsel %vm849, %v1683, %v1684
        %v1688 = vsel %vm1522, %v1676, %v1687
        %v1689 = vsel %vm849, %v1685, %v1686
        %v1690 = vsel %vm1522, %v1680, %v1689
        %1693 = vst [vmem:[#allocation3 + $0x70] sm:$0xff] %v1688
        %1694 = vst [vmem:[#allocation3 + $0x90] sm:$0x33] %v1690
        %v1695 = vsel %vm1547, %v1663, 0
        %v1696 = vsel %vm1554, %v1664, 0
        %v1697 = vsel %vm1547, %v1665, 0
        %v1698 = vsel %vm1554, %v1666, 0
        %1703 = vrot.lane.b32.xlu0 %v1695, 15
        %v1704 = vpop.permute.xlu0 %1703
        %1705 = vrot.lane.b32.xlu0 %v1696, 15
        %v1706 = vpop.permute.xlu0 %1705
        %1707 = vrot.lane.b32.xlu0 %v1697, 15
        %v1708 = vpop.permute.xlu0 %1707
        %1709 = vrot.lane.b32.xlu0 %v1698, 15
        %v1710 = vpop.permute.xlu0 %1709
        %v1711 = vrot.slane %v1704, 4
        %v1712 = vrot.slane %v1706, 4
        %v1713 = vrot.slane %v1708, 4
        %v1714 = vrot.slane %v1710, 4
        %v1715 = vsel %vm849, %v1711, %v1712
        %v1716 = vsel %vm1522, %v1704, %v1715
        %v1717 = vsel %vm849, %v1713, %v1714
        %v1718 = vsel %vm1522, %v1708, %v1717
        %1721 = vst [vmem:[#allocation4 + $0x70] sm:$0xff] %v1716
        %1722 = vst [vmem:[#allocation4 + $0x90] sm:$0x33] %v1718
        %v1723 = vld [vmem:[#allocation2 + $0x10] sm:$0xcc]
        %v1724 = vld [vmem:[#allocation2 + $0x18] sm:$0xc]
        %v1725 = vld [vmem:[#allocation2 + $0x20] sm:$0xff]
        %v1726 = vld [vmem:[#allocation2 + $0x28] sm:$0xf]
        %v1727 = vsel %vm1493, %v1723, 0
        %v1728 = vsel %vm1500, %v1724, 0
        %v1729 = vsel %vm1493, %v1725, 0
        %v1730 = vsel %vm1500, %v1726, 0
        %v1735 = vrot.slane %v1727, 6
        %v1736 = vrot.slane %v1735, 4
        %v1737 = vrot.slane %v1729, 6
        %v1738 = vsel %vm926, %v1736, %v1737
        %v1739 = vrot.slane %v1728, 6
        %v1740 = vrot.slane %v1739, 4
        %v1741 = vrot.slane %v1730, 6
        %v1742 = vsel %vm926, %v1740, %v1741
        %v1743 = vrot.slane %v1737, 4
        %v1744 = vrot.slane %v1741, 4
        %1745 = vrot.lane.b32.xlu0 %v1738, 15
        %v1746 = vpop.permute.xlu0 %1745
        %1747 = vrot.lane.b32.xlu0 %v1742, 15
        %v1748 = vpop.permute.xlu0 %1747
        %1749 = vrot.lane.b32.xlu0 %v1743, 15
        %v1750 = vpop.permute.xlu0 %1749
        %1751 = vrot.lane.b32.xlu0 %v1744, 15
        %v1752 = vpop.permute.xlu0 %1751
        %v1753 = vrot.slane %v1746, 4
        %v1754 = vrot.slane %v1748, 4
        %v1755 = vrot.slane %v1750, 4
        %v1756 = vrot.slane %v1752, 4
        %v1757 = vsel %vm849, %v1753, %v1754
        %v1758 = vsel %vm1522, %v1746, %v1757
        %v1759 = vsel %vm849, %v1755, %v1756
        %v1760 = vsel %vm1522, %v1750, %v1759
        %1763 = vst [vmem:[#allocation3 + $0x78] sm:$0xff] %v1758
        %1764 = vst [vmem:[#allocation3 + $0x98] sm:$0x33] %v1760
        %v1765 = vsel %vm1547, %v1723, 0
        %v1766 = vsel %vm1554, %v1724, 0
        %v1767 = vsel %vm1547, %v1725, 0
        %v1768 = vsel %vm1554, %v1726, 0
        %v1773 = vrot.slane %v1765, 6
        %v1774 = vrot.slane %v1773, 4
        %v1775 = vrot.slane %v1767, 6
        %v1776 = vsel %vm926, %v1774, %v1775
        %v1777 = vrot.slane %v1766, 6
        %v1778 = vrot.slane %v1777, 4
        %v1779 = vrot.slane %v1768, 6
        %v1780 = vsel %vm926, %v1778, %v1779
        %v1781 = vrot.slane %v1775, 4
        %v1782 = vrot.slane %v1779, 4
        %1783 = vrot.lane.b32.xlu0 %v1776, 15
        %v1784 = vpop.permute.xlu0 %1783
        %1785 = vrot.lane.b32.xlu0 %v1780, 15
        %v1786 = vpop.permute.xlu0 %1785
        %1787 = vrot.lane.b32.xlu0 %v1781, 15
        %v1788 = vpop.permute.xlu0 %1787
        %1789 = vrot.lane.b32.xlu0 %v1782, 15
        %v1790 = vpop.permute.xlu0 %1789
        %v1791 = vrot.slane %v1784, 4
        %v1792 = vrot.slane %v1786, 4
        %v1793 = vrot.slane %v1788, 4
        %v1794 = vrot.slane %v1790, 4
        %v1795 = vsel %vm849, %v1791, %v1792
        %v1796 = vsel %vm1522, %v1784, %v1795
        %v1797 = vsel %vm849, %v1793, %v1794
        %v1798 = vsel %vm1522, %v1788, %v1797
        %1801 = vst [vmem:[#allocation4 + $0x78] sm:$0xff] %v1796
        %1802 = vst [vmem:[#allocation4 + $0x98] sm:$0x33] %v1798
        %v1803 = vld [vmem:[%s3] sm:$0xf]
        %v1804 = vld [vmem:[%s3 + $0x4] sm:$0xf]
        %v1805 = vld [vmem:[#allocation3] sm:$0xff]
        %v1806 = vld [vmem:[#allocation3 + $0x8] sm:$0xff]
        %v1807 = vld [vmem:[#allocation3 + $0x10] sm:$0xff]
        %v1808 = vld [vmem:[#allocation3 + $0x18] sm:$0xff]
        %v1809 = vld [vmem:[#allocation3 + $0x20] sm:$0xff]
        %v1810 = vld [vmem:[#allocation3 + $0x28] sm:$0xff]
        %v1811 = vld [vmem:[#allocation3 + $0x30] sm:$0xff]
        %v1812 = vld [vmem:[#allocation3 + $0x38] sm:$0xff]
        %v1813 = vld [vmem:[#allocation3 + $0x40] sm:$0xff]
        %v1814 = vld [vmem:[#allocation3 + $0x48] sm:$0xff]
        %v1815 = vld [vmem:[#allocation3 + $0x50] sm:$0xff]
        %v1816 = vld [vmem:[#allocation3 + $0x58] sm:$0xff]
        %v1817 = vld [vmem:[#allocation3 + $0x60] sm:$0xff]
        %v1818 = vld [vmem:[#allocation3 + $0x68] sm:$0xff]
        %v1819 = vld [vmem:[#allocation3 + $0x70] sm:$0xff]
        %v1820 = vld [vmem:[#allocation3 + $0x78] sm:$0xff]
        %v1821 = vld [vmem:[#allocation3 + $0x80] sm:$0x33]
        %v1822 = vld [vmem:[#allocation3 + $0x88] sm:$0x33]
        %v1823 = vld [vmem:[#allocation3 + $0x90] sm:$0x33]
        %v1824 = vld [vmem:[#allocation3 + $0x98] sm:$0x33]
        %v1825 = vld [vmem:[#allocation4] sm:$0xff]
        %v1826 = vld [vmem:[#allocation4 + $0x8] sm:$0xff]
        %v1827 = vld [vmem:[#allocation4 + $0x10] sm:$0xff]
        %v1828 = vld [vmem:[#allocation4 + $0x18] sm:$0xff]
        %v1829 = vld [vmem:[#allocation4 + $0x20] sm:$0xff]
        %v1830 = vld [vmem:[#allocation4 + $0x28] sm:$0xff]
        %v1831 = vld [vmem:[#allocation4 + $0x30] sm:$0xff]
        %v1832 = vld [vmem:[#allocation4 + $0x38] sm:$0xff]
        %v1833 = vld [vmem:[#allocation4 + $0x40] sm:$0xff]
        %v1834 = vld [vmem:[#allocation4 + $0x48] sm:$0xff]
        %v1835 = vld [vmem:[#allocation4 + $0x50] sm:$0xff]
        %v1836 = vld [vmem:[#allocation4 + $0x58] sm:$0xff]
        %v1837 = vld [vmem:[#allocation4 + $0x60] sm:$0xff]
        %v1838 = vld [vmem:[#allocation4 + $0x68] sm:$0xff]
        %v1839 = vld [vmem:[#allocation4 + $0x70] sm:$0xff]
        %v1840 = vld [vmem:[#allocation4 + $0x78] sm:$0xff]
        %v1841 = vld [vmem:[#allocation4 + $0x80] sm:$0x33]
        %v1842 = vld [vmem:[#allocation4 + $0x88] sm:$0x33]
        %v1843 = vld [vmem:[#allocation4 + $0x90] sm:$0x33]
        %v1844 = vld [vmem:[#allocation4 + $0x98] sm:$0x33]
        %s1845 = scalar_lea.vmem %s4, 3
        %v1846 = vld [vmem:[%s1845] ss:$8 sm:$0x3]
        %vm1847 = vcmp.gt.f32.partialorder %v1846, 0.5
        %v1848 = vld [vmem:[#allocation2] sm:$0xff]
        %v1849 = vld [vmem:[#allocation2 + $0x8] sm:$0xf]
        %v1850 = vld [vmem:[#allocation2 + $0x10] sm:$0x33]
        %v1851 = vld [vmem:[#allocation2 + $0x18] sm:$0x3]
        %v1852 = vsel %vm1847, 1, 0
        %v1853 = vperm.slane %v1852, 0
        %v1854 = vperm.slane %v1852, 1
        %vm1855 = vcmp.eq.s32.totalorder %v1853, 1
        %vm1856 = vcmp.eq.s32.totalorder %v1854, 1
        %vm1857 = vmpackc.low %vm1856, %vm1855
        %v1858 = vsel %vm1857, 65537, 0
        %1859 = vrot.lane.b32.xlu0 %v1858, 127
        %v1860 = vpop.permute.xlu0 %1859
        %v1861 = vrot.slane %v1860, 4
        %vm1862 = vcmask 1039360
        %v1863 = vsel %vm1862, %v1861, %v1860
        %v1864 = vunpack.c.l.b16 %v1863
        %v1865 = vunpack.c.h.b16 %v1863
        %v1866 = vunpack.c.l.b16 0
        %v1867 = vunpack.c.h.b16 0
        %vm1868 = vcmp.ne.s32.totalorder %v1864, %v1866
        %vm1869 = vcmp.ne.s32.totalorder %v1865, %v1867
        %vm1870 = vmpackc.low %vm1869, %vm1868
        %v1871 = vunpack.c.l.b16 %v1861
        %v1872 = vunpack.c.h.b16 %v1861
        %v1873 = vunpack.c.l.b16 0
        %v1874 = vunpack.c.h.b16 0
        %vm1875 = vcmp.ne.s32.totalorder %v1871, %v1873
        %vm1876 = vcmp.ne.s32.totalorder %v1872, %v1874
        %vm1877 = vmpackc.low %vm1876, %vm1875
        %v1878 = vsel %vm1870, %v1848, 0
        %v1879 = vsel %vm1877, %v1849, 0
        %v1880 = vsel %vm1870, %v1850, 0
        %v1881 = vsel %vm1877, %v1851, 0
        %1886 = vrot.lane.b32.xlu0 %v1878, 1
        %v1887 = vpop.permute.xlu0 %1886
        %1888 = vrot.lane.b32.xlu0 %v1879, 1
        %v1889 = vpop.permute.xlu0 %1888
        %1890 = vrot.lane.b32.xlu0 %v1880, 1
        %v1891 = vpop.permute.xlu0 %1890
        %1892 = vrot.lane.b32.xlu0 %v1881, 1
        %v1893 = vpop.permute.xlu0 %1892
        %v1894 = vrot.slane %v1887, 4
        %v1895 = vrot.slane %v1889, 4
        %v1896 = vrot.slane %v1891, 4
        %v1897 = vrot.slane %v1893, 4
        %v1898 = vsel %vm849, %v1894, %v1895
        %vm1899 = vcmask 7168
        %v1900 = vsel %vm1899, %v1887, %v1898
        %v1901 = vsel %vm849, %v1896, %v1897
        %v1902 = vsel %vm1899, %v1891, %v1901
        %1905 = vst [vmem:[#allocation3] sm:$0xff] %v1900
        %1906 = vst [vmem:[#allocation3 + $0x20] sm:$0x33] %v1902
        %v1907 = vld [vmem:[#allocation2] sm:$0xcc]
        %v1908 = vld [vmem:[#allocation2 + $0x8] sm:$0xc]
        %v1909 = vld [vmem:[#allocation2 + $0x10] sm:$0xff]
        %v1910 = vld [vmem:[#allocation2 + $0x18] sm:$0xf]
        %v1911 = vsel %vm1870, %v1907, 0
        %v1912 = vsel %vm1877, %v1908, 0
        %v1913 = vsel %vm1870, %v1909, 0
        %v1914 = vsel %vm1877, %v1910, 0
        %v1919 = vrot.slane %v1911, 6
        %v1920 = vrot.slane %v1919, 4
        %v1921 = vrot.slane %v1913, 6
        %v1922 = vsel %vm926, %v1920, %v1921
        %v1923 = vrot.slane %v1912, 6
        %v1924 = vrot.slane %v1923, 4
        %v1925 = vrot.slane %v1914, 6
        %v1926 = vsel %vm926, %v1924, %v1925
        %v1927 = vrot.slane %v1921, 4
        %v1928 = vrot.slane %v1925, 4
        %1929 = vrot.lane.b32.xlu0 %v1922, 1
        %v1930 = vpop.permute.xlu0 %1929
        %1931 = vrot.lane.b32.xlu0 %v1926, 1
        %v1932 = vpop.permute.xlu0 %1931
        %1933 = vrot.lane.b32.xlu0 %v1927, 1
        %v1934 = vpop.permute.xlu0 %1933
        %1935 = vrot.lane.b32.xlu0 %v1928, 1
        %v1936 = vpop.permute.xlu0 %1935
        %v1937 = vrot.slane %v1930, 4
        %v1938 = vrot.slane %v1932, 4
        %v1939 = vrot.slane %v1934, 4
        %v1940 = vrot.slane %v1936, 4
        %v1941 = vsel %vm849, %v1937, %v1938
        %v1942 = vsel %vm1899, %v1930, %v1941
        %v1943 = vsel %vm849, %v1939, %v1940
        %v1944 = vsel %vm1899, %v1934, %v1943
        %1947 = vst [vmem:[#allocation3 + $0x8] sm:$0xff] %v1942
        %1948 = vst [vmem:[#allocation3 + $0x28] sm:$0x33] %v1944
        %v1949 = vld [vmem:[#allocation2 + $0x10] sm:$0xff]
        %v1950 = vld [vmem:[#allocation2 + $0x18] sm:$0xf]
        %v1951 = vld [vmem:[#allocation2 + $0x20] sm:$0x33]
        %v1952 = vld [vmem:[#allocation2 + $0x28] sm:$0x3]
        %v1953 = vsel %vm1870, %v1949, 0
        %v1954 = vsel %vm1877, %v1950, 0
        %v1955 = vsel %vm1870, %v1951, 0
        %v1956 = vsel %vm1877, %v1952, 0
        %1961 = vrot.lane.b32.xlu0 %v1953, 1
        %v1962 = vpop.permute.xlu0 %1961
        %1963 = vrot.lane.b32.xlu0 %v1954, 1
        %v1964 = vpop.permute.xlu0 %1963
        %1965 = vrot.lane.b32.xlu0 %v1955, 1
        %v1966 = vpop.permute.xlu0 %1965
        %1967 = vrot.lane.b32.xlu0 %v1956, 1
        %v1968 = vpop.permute.xlu0 %1967
        %v1969 = vrot.slane %v1962, 4
        %v1970 = vrot.slane %v1964, 4
        %v1971 = vrot.slane %v1966, 4
        %v1972 = vrot.slane %v1968, 4
        %v1973 = vsel %vm849, %v1969, %v1970
        %v1974 = vsel %vm1899, %v1962, %v1973
        %v1975 = vsel %vm849, %v1971, %v1972
        %v1976 = vsel %vm1899, %v1966, %v1975
        %1979 = vst [vmem:[#allocation3 + $0x10] sm:$0xff] %v1974
        %1980 = vst [vmem:[#allocation3 + $0x30] sm:$0x33] %v1976
        %v1981 = vld [vmem:[#allocation2 + $0x10] sm:$0xcc]
        %v1982 = vld [vmem:[#allocation2 + $0x18] sm:$0xc]
        %v1983 = vld [vmem:[#allocation2 + $0x20] sm:$0xff]
        %v1984 = vld [vmem:[#allocation2 + $0x28] sm:$0xf]
        %v1985 = vsel %vm1870, %v1981, 0
        %v1986 = vsel %vm1877, %v1982, 0
        %v1987 = vsel %vm1870, %v1983, 0
        %v1988 = vsel %vm1877, %v1984, 0
        %v1993 = vrot.slane %v1985, 6
        %v1994 = vrot.slane %v1993, 4
        %v1995 = vrot.slane %v1987, 6
        %v1996 = vsel %vm926, %v1994, %v1995
        %v1997 = vrot.slane %v1986, 6
        %v1998 = vrot.slane %v1997, 4
        %v1999 = vrot.slane %v1988, 6
        %v2000 = vsel %vm926, %v1998, %v1999
        %v2001 = vrot.slane %v1995, 4
        %v2002 = vrot.slane %v1999, 4
        %2003 = vrot.lane.b32.xlu0 %v1996, 1
        %v2004 = vpop.permute.xlu0 %2003
        %2005 = vrot.lane.b32.xlu0 %v2000, 1
        %v2006 = vpop.permute.xlu0 %2005
        %2007 = vrot.lane.b32.xlu0 %v2001, 1
        %v2008 = vpop.permute.xlu0 %2007
        %2009 = vrot.lane.b32.xlu0 %v2002, 1
        %v2010 = vpop.permute.xlu0 %2009
        %v2011 = vrot.slane %v2004, 4
        %v2012 = vrot.slane %v2006, 4
        %v2013 = vrot.slane %v2008, 4
        %v2014 = vrot.slane %v2010, 4
        %v2015 = vsel %vm849, %v2011, %v2012
        %v2016 = vsel %vm1899, %v2004, %v2015
        %v2017 = vsel %vm849, %v2013, %v2014
        %v2018 = vsel %vm1899, %v2008, %v2017
        %2021 = vst [vmem:[#allocation3 + $0x18] sm:$0xff] %v2016
        %2022 = vst [vmem:[#allocation3 + $0x38] sm:$0x33] %v2018
        %s2023 = scalar_lea.vmem %s4, 4
        %v2024 = vld [vmem:[%s2023] ss:$8 sm:$0x3]
        %vm2025 = vcmp.gt.f32.partialorder %v2024, 0.5
        %v2026 = vld [vmem:[#allocation2 + $0x4] sm:$0xff]
        %v2027 = vld [vmem:[#allocation2 + $0x14] sm:$0x33]
        %v2028 = vsel %vm2025, 1, 0
        %v2029 = vperm.slane %v2028, 0
        %v2030 = vperm.slane %v2028, 1
        %vm2031 = vcmp.eq.s32.totalorder %v2029, 1
        %vm2032 = vcmp.eq.s32.totalorder %v2030, 1
        %vm2033 = vmpackc.low %vm2032, %vm2031
        %v2034 = vsel %vm2033, %v2026, 0
        %v2035 = vsel %vm2033, %v2027, 0
        %v2038 = vrot.slane %v2034, 6
        %v2039 = vrot.slane %v2038, 4
        %v2040 = vrot.slane %v2035, 6
        %v2041 = vsel %vm926, %v2039, %v2040
        %2044 = vst [vmem:[#allocation3 + $0x20] sm:$0xcc] %v2038
        %2045 = vst [vmem:[#allocation3 + $0x40] sm:$0xff] %v2041
        %v2046 = vld [vmem:[#allocation2 + $0x4] sm:$0xcc]
        %v2047 = vld [vmem:[#allocation2 + $0x14] sm:$0xff]
        %v2048 = vsel %vm2033, %v2046, 0
        %v2049 = vsel %vm2033, %v2047, 0
        %2050 = vst [vmem:[#allocation3 + $0x28] sm:$0xcc] %v2048
        %2051 = vst [vmem:[#allocation3 + $0x48] sm:$0xff] %v2049
        %v2052 = vld [vmem:[#allocation2 + $0x14] sm:$0xff]
        %v2053 = vld [vmem:[#allocation2 + $0x24] sm:$0x33]
        %v2054 = vsel %vm2033, %v2052, 0
        %v2055 = vsel %vm2033, %v2053, 0
        %v2058 = vrot.slane %v2054, 6
        %v2059 = vrot.slane %v2058, 4
        %v2060 = vrot.slane %v2055, 6
        %v2061 = vsel %vm926, %v2059, %v2060
        %2064 = vst [vmem:[#allocation3 + $0x30] sm:$0xcc] %v2058
        %2065 = vst [vmem:[#allocation3 + $0x50] sm:$0xff] %v2061
        %v2066 = vld [vmem:[#allocation2 + $0x14] sm:$0xcc]
        %v2067 = vld [vmem:[#allocation2 + $0x24] sm:$0xff]
        %v2068 = vsel %vm2033, %v2066, 0
        %v2069 = vsel %vm2033, %v2067, 0
        %2070 = vst [vmem:[#allocation3 + $0x38] sm:$0xcc] %v2068
        %2071 = vst [vmem:[#allocation3 + $0x58] sm:$0xff] %v2069
        %s2072 = scalar_lea.vmem %s4, 5
        %v2073 = vld [vmem:[%s2072] ss:$8 sm:$0x3]
        %vm2074 = vcmp.gt.f32.partialorder %v2073, 0.5
        %v2075 = vld [vmem:[#allocation2 + $0x4] sm:$0xff]
        %v2076 = vld [vmem:[#allocation2 + $0xc] sm:$0xf]
        %v2077 = vld [vmem:[#allocation2 + $0x14] sm:$0x33]
        %v2078 = vld [vmem:[#allocation2 + $0x1c] sm:$0x3]
        %v2079 = vsel %vm2074, 1, 0
        %v2080 = vperm.slane %v2079, 0
        %v2081 = vperm.slane %v2079, 1
        %vm2082 = vcmp.eq.s32.totalorder %v2080, 1
        %vm2083 = vcmp.eq.s32.totalorder %v2081, 1
        %vm2084 = vmpackc.low %vm2083, %vm2082
        %v2085 = vsel %vm2084, 65537, 0
        %2086 = vrot.lane.b32.xlu0 %v2085, 1
        %v2087 = vpop.permute.xlu0 %2086
        %v2088 = vrot.slane %v2087, 4
        %v2089 = vsel %vm1899, %v2088, %v2087
        %v2090 = vunpack.c.l.b16 %v2089
        %v2091 = vunpack.c.h.b16 %v2089
        %v2092 = vunpack.c.l.b16 0
        %v2093 = vunpack.c.h.b16 0
        %vm2094 = vcmp.ne.s32.totalorder %v2090, %v2092
        %vm2095 = vcmp.ne.s32.totalorder %v2091, %v2093
        %vm2096 = vmpackc.low %vm2095, %vm2094
        %v2097 = vunpack.c.l.b16 %v2088
        %v2098 = vunpack.c.h.b16 %v2088
        %v2099 = vunpack.c.l.b16 0
        %v2100 = vunpack.c.h.b16 0
        %vm2101 = vcmp.ne.s32.totalorder %v2097, %v2099
        %vm2102 = vcmp.ne.s32.totalorder %v2098, %v2100
        %vm2103 = vmpackc.low %vm2102, %vm2101
        %v2104 = vsel %vm2096, %v2075, 0
        %v2105 = vsel %vm2103, %v2076, 0
        %v2106 = vsel %vm2096, %v2077, 0
        %v2107 = vsel %vm2103, %v2078, 0
        %2112 = vrot.lane.b32.xlu0 %v2104, 127
        %v2113 = vpop.permute.xlu0 %2112
        %2114 = vrot.lane.b32.xlu0 %v2105, 127
        %v2115 = vpop.permute.xlu0 %2114
        %2116 = vrot.lane.b32.xlu0 %v2106, 127
        %v2117 = vpop.permute.xlu0 %2116
        %2118 = vrot.lane.b32.xlu0 %v2107, 127
        %v2119 = vpop.permute.xlu0 %2118
        %v2120 = vrot.slane %v2113, 4
        %v2121 = vrot.slane %v2115, 4
        %v2122 = vrot.slane %v2117, 4
        %v2123 = vrot.slane %v2119, 4
        %v2124 = vsel %vm849, %v2120, %v2121
        %v2125 = vsel %vm1862, %v2113, %v2124
        %v2126 = vsel %vm849, %v2122, %v2123
        %v2127 = vsel %vm1862, %v2117, %v2126
        %2130 = vst [vmem:[#allocation3 + $0x60] sm:$0xff] %v2125
        %2131 = vst [vmem:[#allocation3 + $0x80] sm:$0x33] %v2127
        %v2132 = vld [vmem:[#allocation2 + $0x4] sm:$0xcc]
        %v2133 = vld [vmem:[#allocation2 + $0xc] sm:$0xc]
        %v2134 = vld [vmem:[#allocation2 + $0x14] sm:$0xff]
        %v2135 = vld [vmem:[#allocation2 + $0x1c] sm:$0xf]
        %v2136 = vsel %vm2096, %v2132, 0
        %v2137 = vsel %vm2103, %v2133, 0
        %v2138 = vsel %vm2096, %v2134, 0
        %v2139 = vsel %vm2103, %v2135, 0
        %v2144 = vrot.slane %v2136, 6
        %v2145 = vrot.slane %v2144, 4
        %v2146 = vrot.slane %v2138, 6
        %v2147 = vsel %vm926, %v2145, %v2146
        %v2148 = vrot.slane %v2137, 6
        %v2149 = vrot.slane %v2148, 4
        %v2150 = vrot.slane %v2139, 6
        %v2151 = vsel %vm926, %v2149, %v2150
        %v2152 = vrot.slane %v2146, 4
        %v2153 = vrot.slane %v2150, 4
        %2154 = vrot.lane.b32.xlu0 %v2147, 127
        %v2155 = vpop.permute.xlu0 %2154
        %2156 = vrot.lane.b32.xlu0 %v2151, 127
        %v2157 = vpop.permute.xlu0 %2156
        %2158 = vrot.lane.b32.xlu0 %v2152, 127
        %v2159 = vpop.permute.xlu0 %2158
        %2160 = vrot.lane.b32.xlu0 %v2153, 127
        %v2161 = vpop.permute.xlu0 %2160
        %v2162 = vrot.slane %v2155, 4
        %v2163 = vrot.slane %v2157, 4
        %v2164 = vrot.slane %v2159, 4
        %v2165 = vrot.slane %v2161, 4
        %v2166 = vsel %vm849, %v2162, %v2163
        %v2167 = vsel %vm1862, %v2155, %v2166
        %v2168 = vsel %vm849, %v2164, %v2165
        %v2169 = vsel %vm1862, %v2159, %v2168
        %2172 = vst [vmem:[#allocation3 + $0x68] sm:$0xff] %v2167
        %2173 = vst [vmem:[#allocation3 + $0x88] sm:$0x33] %v2169
        %v2174 = vld [vmem:[#allocation2 + $0x14] sm:$0xff]
        %v2175 = vld [vmem:[#allocation2 + $0x1c] sm:$0xf]
        %v2176 = vld [vmem:[#allocation2 + $0x24] sm:$0x33]
        %v2177 = vld [vmem:[#allocation2 + $0x2c] sm:$0x3]
        %v2178 = vsel %vm2096, %v2174, 0
        %v2179 = vsel %vm2103, %v2175, 0
        %v2180 = vsel %vm2096, %v2176, 0
        %v2181 = vsel %vm2103, %v2177, 0
        %2186 = vrot.lane.b32.xlu0 %v2178, 127
        %v2187 = vpop.permute.xlu0 %2186
        %2188 = vrot.lane.b32.xlu0 %v2179, 127
        %v2189 = vpop.permute.xlu0 %2188
        %2190 = vrot.lane.b32.xlu0 %v2180, 127
        %v2191 = vpop.permute.xlu0 %2190
        %2192 = vrot.lane.b32.xlu0 %v2181, 127
        %v2193 = vpop.permute.xlu0 %2192
        %v2194 = vrot.slane %v2187, 4
        %v2195 = vrot.slane %v2189, 4
        %v2196 = vrot.slane %v2191, 4
        %v2197 = vrot.slane %v2193, 4
        %v2198 = vsel %vm849, %v2194, %v2195
        %v2199 = vsel %vm1862, %v2187, %v2198
        %v2200 = vsel %vm849, %v2196, %v2197
        %v2201 = vsel %vm1862, %v2191, %v2200
        %2204 = vst [vmem:[#allocation3 + $0x70] sm:$0xff] %v2199
        %2205 = vst [vmem:[#allocation3 + $0x90] sm:$0x33] %v2201
        %v2206 = vld [vmem:[#allocation2 + $0x14] sm:$0xcc]
        %v2207 = vld [vmem:[#allocation2 + $0x1c] sm:$0xc]
        %v2208 = vld [vmem:[#allocation2 + $0x24] sm:$0xff]
        %v2209 = vld [vmem:[#allocation2 + $0x2c] sm:$0xf]
        %v2210 = vsel %vm2096, %v2206, 0
        %v2211 = vsel %vm2103, %v2207, 0
        %v2212 = vsel %vm2096, %v2208, 0
        %v2213 = vsel %vm2103, %v2209, 0
        %v2218 = vrot.slane %v2210, 6
        %v2219 = vrot.slane %v2218, 4
        %v2220 = vrot.slane %v2212, 6
        %v2221 = vsel %vm926, %v2219, %v2220
        %v2222 = vrot.slane %v2211, 6
        %v2223 = vrot.slane %v2222, 4
        %v2224 = vrot.slane %v2213, 6
        %v2225 = vsel %vm926, %v2223, %v2224
        %v2226 = vrot.slane %v2220, 4
        %v2227 = vrot.slane %v2224, 4
        %2228 = vrot.lane.b32.xlu0 %v2221, 127
        %v2229 = vpop.permute.xlu0 %2228
        %2230 = vrot.lane.b32.xlu0 %v2225, 127
        %v2231 = vpop.permute.xlu0 %2230
        %2232 = vrot.lane.b32.xlu0 %v2226, 127
        %v2233 = vpop.permute.xlu0 %2232
        %2234 = vrot.lane.b32.xlu0 %v2227, 127
        %v2235 = vpop.permute.xlu0 %2234
        %v2236 = vrot.slane %v2229, 4
        %v2237 = vrot.slane %v2231, 4
        %v2238 = vrot.slane %v2233, 4
        %v2239 = vrot.slane %v2235, 4
        %v2240 = vsel %vm849, %v2236, %v2237
        %v2241 = vsel %vm1862, %v2229, %v2240
        %v2242 = vsel %vm849, %v2238, %v2239
        %v2243 = vsel %vm1862, %v2233, %v2242
        %2246 = vst [vmem:[#allocation3 + $0x78] sm:$0xff] %v2241
        %2247 = vst [vmem:[#allocation3 + $0x98] sm:$0x33] %v2243
        %s2248 = scalar_lea.vmem %s3, 8
        %v2249 = vld [vmem:[%s2248] sm:$0xf]
        %v2250 = vld [vmem:[%s2248 + $0x4] sm:$0xf]
        %v2251 = vld [vmem:[#allocation3] sm:$0xff]
        %v2252 = vld [vmem:[#allocation3 + $0x8] sm:$0xff]
        %v2253 = vld [vmem:[#allocation3 + $0x10] sm:$0xff]
        %v2254 = vld [vmem:[#allocation3 + $0x18] sm:$0xff]
        %v2255 = vld [vmem:[#allocation3 + $0x20] sm:$0xff]
        %v2256 = vld [vmem:[#allocation3 + $0x28] sm:$0xff]
        %v2257 = vld [vmem:[#allocation3 + $0x30] sm:$0xff]
        %v2258 = vld [vmem:[#allocation3 + $0x38] sm:$0xff]
        %v2259 = vld [vmem:[#allocation3 + $0x40] sm:$0xff]
        %v2260 = vld [vmem:[#allocation3 + $0x48] sm:$0xff]
        %v2261 = vld [vmem:[#allocation3 + $0x50] sm:$0xff]
        %v2262 = vld [vmem:[#allocation3 + $0x58] sm:$0xff]
        %v2263 = vld [vmem:[#allocation3 + $0x60] sm:$0xff]
        %v2264 = vld [vmem:[#allocation3 + $0x68] sm:$0xff]
        %v2265 = vld [vmem:[#allocation3 + $0x70] sm:$0xff]
        %v2266 = vld [vmem:[#allocation3 + $0x78] sm:$0xff]
        %v2267 = vld [vmem:[#allocation3 + $0x80] sm:$0x33]
        %v2268 = vld [vmem:[#allocation3 + $0x88] sm:$0x33]
        %v2269 = vld [vmem:[#allocation3 + $0x90] sm:$0x33]
        %v2270 = vld [vmem:[#allocation3 + $0x98] sm:$0x33]
        %v2273 = vunpack.c.l.b16 %v2249
        %v2274 = vunpack.c.l.b16 %v2250
        %v2275 = vpack.c.b16 %v2274, %v2273
        %v2296 = vunpack.c.l.b16 %v2251
        %v2297 = vunpack.c.h.b16 %v2251
        %v2298 = vunpack.c.l.b16 %v2252
        %v2299 = vunpack.c.h.b16 %v2252
        %v2300 = vunpack.c.l.b16 %v2253
        %v2301 = vunpack.c.h.b16 %v2253
        %v2302 = vunpack.c.l.b16 %v2254
        %v2303 = vunpack.c.h.b16 %v2254
        %v2304 = vunpack.c.l.b16 %v2255
        %v2305 = vunpack.c.h.b16 %v2255
        %v2306 = vunpack.c.l.b16 %v2256
        %v2307 = vunpack.c.h.b16 %v2256
        %v2308 = vunpack.c.l.b16 %v2257
        %v2309 = vunpack.c.h.b16 %v2257
        %v2310 = vunpack.c.l.b16 %v2258
        %v2311 = vunpack.c.h.b16 %v2258
        %v2312 = vunpack.c.l.b16 %v2259
        %v2313 = vunpack.c.h.b16 %v2259
        %v2314 = vunpack.c.l.b16 %v2260
        %v2315 = vunpack.c.h.b16 %v2260
        %v2316 = vunpack.c.l.b16 %v2261
        %v2317 = vunpack.c.h.b16 %v2261
        %v2318 = vunpack.c.l.b16 %v2262
        %v2319 = vunpack.c.h.b16 %v2262
        %v2320 = vunpack.c.l.b16 %v2263
        %v2321 = vunpack.c.h.b16 %v2263
        %v2322 = vunpack.c.l.b16 %v2264
        %v2323 = vunpack.c.h.b16 %v2264
        %v2324 = vunpack.c.l.b16 %v2265
        %v2325 = vunpack.c.h.b16 %v2265
        %v2326 = vunpack.c.l.b16 %v2266
        %v2327 = vunpack.c.h.b16 %v2266
        %v2328 = vunpack.c.l.b16 %v2267
        %v2329 = vunpack.c.h.b16 %v2267
        %v2330 = vunpack.c.l.b16 %v2268
        %v2331 = vunpack.c.h.b16 %v2268
        %v2332 = vunpack.c.l.b16 %v2269
        %v2333 = vunpack.c.h.b16 %v2269
        %v2334 = vunpack.c.l.b16 %v2270
        %v2335 = vunpack.c.h.b16 %v2270
        %v2336 = vpack.c.b16 %v2304, %v2296
        %v2337 = vpack.c.b16 %v2305, %v2297
        %v2338 = vpack.c.b16 %v2306, %v2298
        %v2339 = vpack.c.b16 %v2307, %v2299
        %v2340 = vpack.c.b16 %v2308, %v2300
        %v2341 = vpack.c.b16 %v2309, %v2301
        %v2342 = vpack.c.b16 %v2310, %v2302
        %v2343 = vpack.c.b16 %v2311, %v2303
        %v2344 = vpack.c.b16 %v2320, %v2312
        %v2345 = vpack.c.b16 %v2321, %v2313
        %v2346 = vpack.c.b16 %v2322, %v2314
        %v2347 = vpack.c.b16 %v2323, %v2315
        %v2348 = vpack.c.b16 %v2324, %v2316
        %v2349 = vpack.c.b16 %v2325, %v2317
        %v2350 = vpack.c.b16 %v2326, %v2318
        %v2351 = vpack.c.b16 %v2327, %v2319
        %v2352 = vpack.c.b16 %v2328, %v2328
        %v2353 = vpack.c.b16 %v2329, %v2329
        %v2354 = vpack.c.b16 %v2330, %v2330
        %v2355 = vpack.c.b16 %v2331, %v2331
        %v2356 = vpack.c.b16 %v2332, %v2332
        %v2357 = vpack.c.b16 %v2333, %v2333
        %v2358 = vpack.c.b16 %v2334, %v2334
        %v2359 = vpack.c.b16 %v2335, %v2335
        %vm2376 = vcmask 293888
        %v2378 = vsel %vm2376, %v2275, 0
        %vm2380 = vcmask 1041408
        %v2382 = vsel %vm2380, %v2352, 0
        %v2385 = vsel %vm2380, %v2353, 0
        %v2388 = vsel %vm2380, %v2354, 0
        %v2391 = vsel %vm2380, %v2355, 0
        %v2394 = vsel %vm2380, %v2356, 0
        %v2397 = vsel %vm2380, %v2357, 0
        %v2400 = vsel %vm2380, %v2358, 0
        %v2403 = vsel %vm2380, %v2359, 0
        %2405 = vmatpush.bf16.msra.mxu0 0
        %2406 = vmatpush.bf16.msra.mxu0 0
        %2407 = vmatpush.bf16.msra.mxu0 0
        %2408 = vmatpush.bf16.msra.mxu0 0
        %2409 = vmatpush.bf16.msra.mxu0 0
        %2410 = vmatpush.bf16.msra.mxu0 %v2382
        %2411 = vmatpush.bf16.msra.mxu0 %v2344
        %2412 = vmatpush.bf16.msra.mxu0 %v2336
        %2413 = vmatmul.bf16.gmra.mxu0 %v2378
        %v2414 = vpop.f32.mrf.mxu0
        %v2415 = vadd.f32 0.0, %v2414
        %v2416 = vpop.f32.mrf.mxu0
        %v2417 = vadd.f32 0.0, %v2416
        %2418 = vdwg.mxu0
        %2419 = vmatpush.bf16.msra.mxu0 0
        %2420 = vmatpush.bf16.msra.mxu0 0
        %2421 = vmatpush.bf16.msra.mxu0 0
        %2422 = vmatpush.bf16.msra.mxu0 0
        %2423 = vmatpush.bf16.msra.mxu0 0
        %2424 = vmatpush.bf16.msra.mxu0 %v2385
        %2425 = vmatpush.bf16.msra.mxu0 %v2345
        %2426 = vmatpush.bf16.msra.mxu0 %v2337
        %2427 = vmatmul.bf16.gmra.mxu0 %v2378
        %v2428 = vpop.f32.mrf.mxu0
        %v2429 = vadd.f32 0.0, %v2428
        %v2430 = vpop.f32.mrf.mxu0
        %v2431 = vadd.f32 0.0, %v2430
        %2432 = vdwg.mxu0
        %2433 = vmatpush.bf16.msra.mxu0 0
        %2434 = vmatpush.bf16.msra.mxu0 0
        %2435 = vmatpush.bf16.msra.mxu0 0
        %2436 = vmatpush.bf16.msra.mxu0 0
        %2437 = vmatpush.bf16.msra.mxu0 0
        %2438 = vmatpush.bf16.msra.mxu0 %v2388
        %2439 = vmatpush.bf16.msra.mxu0 %v2346
        %2440 = vmatpush.bf16.msra.mxu0 %v2338
        %2441 = vmatmul.bf16.gmra.mxu0 %v2378
        %v2442 = vpop.f32.mrf.mxu0
        %v2443 = vadd.f32 0.0, %v2442
        %v2444 = vpop.f32.mrf.mxu0
        %v2445 = vadd.f32 0.0, %v2444
        %2446 = vdwg.mxu0
        %2447 = vmatpush.bf16.msra.mxu0 0
        %2448 = vmatpush.bf16.msra.mxu0 0
        %2449 = vmatpush.bf16.msra.mxu0 0
        %2450 = vmatpush.bf16.msra.mxu0 0
        %2451 = vmatpush.bf16.msra.mxu0 0
        %2452 = vmatpush.bf16.msra.mxu0 %v2391
        %2453 = vmatpush.bf16.msra.mxu0 %v2347
        %2454 = vmatpush.bf16.msra.mxu0 %v2339
        %2455 = vmatmul.bf16.gmra.mxu0 %v2378
        %v2456 = vpop.f32.mrf.mxu0
        %v2457 = vadd.f32 0.0, %v2456
        %v2458 = vpop.f32.mrf.mxu0
        %v2459 = vadd.f32 0.0, %v2458
        %2460 = vdwg.mxu0
        %2461 = vmatpush.bf16.msra.mxu0 0
        %2462 = vmatpush.bf16.msra.mxu0 0
        %2463 = vmatpush.bf16.msra.mxu0 0
        %2464 = vmatpush.bf16.msra.mxu0 0
        %2465 = vmatpush.bf16.msra.mxu0 0
        %2466 = vmatpush.bf16.msra.mxu0 %v2394
        %2467 = vmatpush.bf16.msra.mxu0 %v2348
        %2468 = vmatpush.bf16.msra.mxu0 %v2340
        %2469 = vmatmul.bf16.gmra.mxu0 %v2378
        %v2470 = vpop.f32.mrf.mxu0
        %v2471 = vadd.f32 0.0, %v2470
        %v2472 = vpop.f32.mrf.mxu0
        %v2473 = vadd.f32 0.0, %v2472
        %2474 = vdwg.mxu0
        %2475 = vmatpush.bf16.msra.mxu0 0
        %2476 = vmatpush.bf16.msra.mxu0 0
        %2477 = vmatpush.bf16.msra.mxu0 0
        %2478 = vmatpush.bf16.msra.mxu0 0
        %2479 = vmatpush.bf16.msra.mxu0 0
        %2480 = vmatpush.bf16.msra.mxu0 %v2397
        %2481 = vmatpush.bf16.msra.mxu0 %v2349
        %2482 = vmatpush.bf16.msra.mxu0 %v2341
        %2483 = vmatmul.bf16.gmra.mxu0 %v2378
        %v2484 = vpop.f32.mrf.mxu0
        %v2485 = vadd.f32 0.0, %v2484
        %v2486 = vpop.f32.mrf.mxu0
        %v2487 = vadd.f32 0.0, %v2486
        %2488 = vdwg.mxu0
        %2489 = vmatpush.bf16.msra.mxu0 0
        %2490 = vmatpush.bf16.msra.mxu0 0
        %2491 = vmatpush.bf16.msra.mxu0 0
        %2492 = vmatpush.bf16.msra.mxu0 0
        %2493 = vmatpush.bf16.msra.mxu0 0
        %2494 = vmatpush.bf16.msra.mxu0 %v2400
        %2495 = vmatpush.bf16.msra.mxu0 %v2350
        %2496 = vmatpush.bf16.msra.mxu0 %v2342
        %2497 = vmatmul.bf16.gmra.mxu0 %v2378
        %v2498 = vpop.f32.mrf.mxu0
        %v2499 = vadd.f32 0.0, %v2498
        %v2500 = vpop.f32.mrf.mxu0
        %v2501 = vadd.f32 0.0, %v2500
        %2502 = vdwg.mxu0
        %2503 = vmatpush.bf16.msra.mxu0 0
        %2504 = vmatpush.bf16.msra.mxu0 0
        %2505 = vmatpush.bf16.msra.mxu0 0
        %2506 = vmatpush.bf16.msra.mxu0 0
        %2507 = vmatpush.bf16.msra.mxu0 0
        %2508 = vmatpush.bf16.msra.mxu0 %v2403
        %2509 = vmatpush.bf16.msra.mxu0 %v2351
        %2510 = vmatpush.bf16.msra.mxu0 %v2343
        %2511 = vmatmul.bf16.gmra.mxu0 %v2378
        %v2512 = vpop.f32.mrf.mxu0
        %v2513 = vadd.f32 0.0, %v2512
        %v2514 = vpop.f32.mrf.mxu0
        %v2515 = vadd.f32 0.0, %v2514
        %2516 = vdwg.mxu0
        %v2537 = vunpack.c.l.b16 %v1805
        %v2538 = vunpack.c.h.b16 %v1805
        %v2539 = vunpack.c.l.b16 %v1806
        %v2540 = vunpack.c.h.b16 %v1806
        %v2541 = vunpack.c.l.b16 %v1807
        %v2542 = vunpack.c.h.b16 %v1807
        %v2543 = vunpack.c.l.b16 %v1808
        %v2544 = vunpack.c.h.b16 %v1808
        %v2545 = vunpack.c.l.b16 %v1809
        %v2546 = vunpack.c.h.b16 %v1809
        %v2547 = vunpack.c.l.b16 %v1810
        %v2548 = vunpack.c.h.b16 %v1810
        %v2549 = vunpack.c.l.b16 %v1811
        %v2550 = vunpack.c.h.b16 %v1811
        %v2551 = vunpack.c.l.b16 %v1812
        %v2552 = vunpack.c.h.b16 %v1812
        %v2553 = vunpack.c.l.b16 %v1813
        %v2554 = vunpack.c.h.b16 %v1813
        %v2555 = vunpack.c.l.b16 %v1814
        %v2556 = vunpack.c.h.b16 %v1814
        %v2557 = vunpack.c.l.b16 %v1815
        %v2558 = vunpack.c.h.b16 %v1815
        %v2559 = vunpack.c.l.b16 %v1816
        %v2560 = vunpack.c.h.b16 %v1816
        %v2561 = vunpack.c.l.b16 %v1817
        %v2562 = vunpack.c.h.b16 %v1817
        %v2563 = vunpack.c.l.b16 %v1818
        %v2564 = vunpack.c.h.b16 %v1818
        %v2565 = vunpack.c.l.b16 %v1819
        %v2566 = vunpack.c.h.b16 %v1819
        %v2567 = vunpack.c.l.b16 %v1820
        %v2568 = vunpack.c.h.b16 %v1820
        %v2569 = vunpack.c.l.b16 %v1821
        %v2570 = vunpack.c.h.b16 %v1821
        %v2571 = vunpack.c.l.b16 %v1822
        %v2572 = vunpack.c.h.b16 %v1822
        %v2573 = vunpack.c.l.b16 %v1823
        %v2574 = vunpack.c.h.b16 %v1823
        %v2575 = vunpack.c.l.b16 %v1824
        %v2576 = vunpack.c.h.b16 %v1824
        %v2577 = vpack.c.b16 %v2545, %v2537
        %v2578 = vpack.c.b16 %v2546, %v2538
        %v2579 = vpack.c.b16 %v2547, %v2539
        %v2580 = vpack.c.b16 %v2548, %v2540
        %v2581 = vpack.c.b16 %v2549, %v2541
        %v2582 = vpack.c.b16 %v2550, %v2542
        %v2583 = vpack.c.b16 %v2551, %v2543
        %v2584 = vpack.c.b16 %v2552, %v2544
        %v2585 = vpack.c.b16 %v2561, %v2553
        %v2586 = vpack.c.b16 %v2562, %v2554
        %v2587 = vpack.c.b16 %v2563, %v2555
        %v2588 = vpack.c.b16 %v2564, %v2556
        %v2589 = vpack.c.b16 %v2565, %v2557
        %v2590 = vpack.c.b16 %v2566, %v2558
        %v2591 = vpack.c.b16 %v2567, %v2559
        %v2592 = vpack.c.b16 %v2568, %v2560
        %v2593 = vpack.c.b16 %v2569, %v2569
        %v2594 = vpack.c.b16 %v2570, %v2570
        %v2595 = vpack.c.b16 %v2571, %v2571
        %v2596 = vpack.c.b16 %v2572, %v2572
        %v2597 = vpack.c.b16 %v2573, %v2573
        %v2598 = vpack.c.b16 %v2574, %v2574
        %v2599 = vpack.c.b16 %v2575, %v2575
        %v2600 = vpack.c.b16 %v2576, %v2576
        %v2618 = vsel %vm2376, %v1803, 0
        %v2621 = vsel %vm2380, %v2593, 0
        %v2624 = vsel %vm2380, %v2594, 0
        %v2627 = vsel %vm2380, %v2595, 0
        %v2630 = vsel %vm2380, %v2596, 0
        %v2633 = vsel %vm2380, %v2597, 0
        %v2636 = vsel %vm2380, %v2598, 0
        %v2639 = vsel %vm2380, %v2599, 0
        %v2642 = vsel %vm2380, %v2600, 0
        %2644 = vmatpush.bf16.msra.mxu0 0
        %2645 = vmatpush.bf16.msra.mxu0 0
        %2646 = vmatpush.bf16.msra.mxu0 0
        %2647 = vmatpush.bf16.msra.mxu0 0
        %2648 = vmatpush.bf16.msra.mxu0 0
        %2649 = vmatpush.bf16.msra.mxu0 %v2621
        %2650 = vmatpush.bf16.msra.mxu0 %v2585
        %2651 = vmatpush.bf16.msra.mxu0 %v2577
        %2652 = vmatmul.bf16.gmra.mxu0 %v2618
        %v2653 = vpop.f32.mrf.mxu0
        %v2654 = vadd.f32 %v2415, %v2653
        %v2655 = vpop.f32.mrf.mxu0
        %2656 = vdwg.mxu0
        %2657 = vmatpush.bf16.msra.mxu0 0
        %2658 = vmatpush.bf16.msra.mxu0 0
        %2659 = vmatpush.bf16.msra.mxu0 0
        %2660 = vmatpush.bf16.msra.mxu0 0
        %2661 = vmatpush.bf16.msra.mxu0 0
        %2662 = vmatpush.bf16.msra.mxu0 %v2624
        %2663 = vmatpush.bf16.msra.mxu0 %v2586
        %2664 = vmatpush.bf16.msra.mxu0 %v2578
        %2665 = vmatmul.bf16.gmra.mxu0 %v2618
        %v2666 = vpop.f32.mrf.mxu0
        %v2667 = vadd.f32 %v2429, %v2666
        %v2668 = vpop.f32.mrf.mxu0
        %2669 = vdwg.mxu0
        %2670 = vmatpush.bf16.msra.mxu0 0
        %2671 = vmatpush.bf16.msra.mxu0 0
        %2672 = vmatpush.bf16.msra.mxu0 0
        %2673 = vmatpush.bf16.msra.mxu0 0
        %2674 = vmatpush.bf16.msra.mxu0 0
        %2675 = vmatpush.bf16.msra.mxu0 %v2627
        %2676 = vmatpush.bf16.msra.mxu0 %v2587
        %2677 = vmatpush.bf16.msra.mxu0 %v2579
        %2678 = vmatmul.bf16.gmra.mxu0 %v2618
        %v2679 = vpop.f32.mrf.mxu0
        %v2680 = vadd.f32 %v2443, %v2679
        %v2681 = vpop.f32.mrf.mxu0
        %2682 = vdwg.mxu0
        %2683 = vmatpush.bf16.msra.mxu0 0
        %2684 = vmatpush.bf16.msra.mxu0 0
        %2685 = vmatpush.bf16.msra.mxu0 0
        %2686 = vmatpush.bf16.msra.mxu0 0
        %2687 = vmatpush.bf16.msra.mxu0 0
        %2688 = vmatpush.bf16.msra.mxu0 %v2630
        %2689 = vmatpush.bf16.msra.mxu0 %v2588
        %2690 = vmatpush.bf16.msra.mxu0 %v2580
        %2691 = vmatmul.bf16.gmra.mxu0 %v2618
        %v2692 = vpop.f32.mrf.mxu0
        %v2693 = vadd.f32 %v2457, %v2692
        %v2694 = vpop.f32.mrf.mxu0
        %2695 = vdwg.mxu0
        %2696 = vmatpush.bf16.msra.mxu0 0
        %2697 = vmatpush.bf16.msra.mxu0 0
        %2698 = vmatpush.bf16.msra.mxu0 0
        %2699 = vmatpush.bf16.msra.mxu0 0
        %2700 = vmatpush.bf16.msra.mxu0 0
        %2701 = vmatpush.bf16.msra.mxu0 %v2633
        %2702 = vmatpush.bf16.msra.mxu0 %v2589
        %2703 = vmatpush.bf16.msra.mxu0 %v2581
        %2704 = vmatmul.bf16.gmra.mxu0 %v2618
        %v2705 = vpop.f32.mrf.mxu0
        %v2706 = vadd.f32 %v2471, %v2705
        %v2707 = vpop.f32.mrf.mxu0
        %2708 = vdwg.mxu0
        %2709 = vmatpush.bf16.msra.mxu0 0
        %2710 = vmatpush.bf16.msra.mxu0 0
        %2711 = vmatpush.bf16.msra.mxu0 0
        %2712 = vmatpush.bf16.msra.mxu0 0
        %2713 = vmatpush.bf16.msra.mxu0 0
        %2714 = vmatpush.bf16.msra.mxu0 %v2636
        %2715 = vmatpush.bf16.msra.mxu0 %v2590
        %2716 = vmatpush.bf16.msra.mxu0 %v2582
        %2717 = vmatmul.bf16.gmra.mxu0 %v2618
        %v2718 = vpop.f32.mrf.mxu0
        %v2719 = vadd.f32 %v2485, %v2718
        %v2720 = vpop.f32.mrf.mxu0
        %2721 = vdwg.mxu0
        %2722 = vmatpush.bf16.msra.mxu0 0
        %2723 = vmatpush.bf16.msra.mxu0 0
        %2724 = vmatpush.bf16.msra.mxu0 0
        %2725 = vmatpush.bf16.msra.mxu0 0
        %2726 = vmatpush.bf16.msra.mxu0 0
        %2727 = vmatpush.bf16.msra.mxu0 %v2639
        %2728 = vmatpush.bf16.msra.mxu0 %v2591
        %2729 = vmatpush.bf16.msra.mxu0 %v2583
        %2730 = vmatmul.bf16.gmra.mxu0 %v2618
        %v2731 = vpop.f32.mrf.mxu0
        %v2732 = vadd.f32 %v2499, %v2731
        %v2733 = vpop.f32.mrf.mxu0
        %2734 = vdwg.mxu0
        %2735 = vmatpush.bf16.msra.mxu0 0
        %2736 = vmatpush.bf16.msra.mxu0 0
        %2737 = vmatpush.bf16.msra.mxu0 0
        %2738 = vmatpush.bf16.msra.mxu0 0
        %2739 = vmatpush.bf16.msra.mxu0 0
        %2740 = vmatpush.bf16.msra.mxu0 %v2642
        %2741 = vmatpush.bf16.msra.mxu0 %v2592
        %2742 = vmatpush.bf16.msra.mxu0 %v2584
        %2743 = vmatmul.bf16.gmra.mxu0 %v2618
        %v2744 = vpop.f32.mrf.mxu0
        %v2745 = vadd.f32 %v2513, %v2744
        %v2746 = vpop.f32.mrf.mxu0
        %2747 = vdwg.mxu0
        %v2768 = vunpack.c.l.b16 %v1825
        %v2769 = vunpack.c.h.b16 %v1825
        %v2770 = vunpack.c.l.b16 %v1826
        %v2771 = vunpack.c.h.b16 %v1826
        %v2772 = vunpack.c.l.b16 %v1827
        %v2773 = vunpack.c.h.b16 %v1827
        %v2774 = vunpack.c.l.b16 %v1828
        %v2775 = vunpack.c.h.b16 %v1828
        %v2776 = vunpack.c.l.b16 %v1829
        %v2777 = vunpack.c.h.b16 %v1829
        %v2778 = vunpack.c.l.b16 %v1830
        %v2779 = vunpack.c.h.b16 %v1830
        %v2780 = vunpack.c.l.b16 %v1831
        %v2781 = vunpack.c.h.b16 %v1831
        %v2782 = vunpack.c.l.b16 %v1832
        %v2783 = vunpack.c.h.b16 %v1832
        %v2784 = vunpack.c.l.b16 %v1833
        %v2785 = vunpack.c.h.b16 %v1833
        %v2786 = vunpack.c.l.b16 %v1834
        %v2787 = vunpack.c.h.b16 %v1834
        %v2788 = vunpack.c.l.b16 %v1835
        %v2789 = vunpack.c.h.b16 %v1835
        %v2790 = vunpack.c.l.b16 %v1836
        %v2791 = vunpack.c.h.b16 %v1836
        %v2792 = vunpack.c.l.b16 %v1837
        %v2793 = vunpack.c.h.b16 %v1837
        %v2794 = vunpack.c.l.b16 %v1838
        %v2795 = vunpack.c.h.b16 %v1838
        %v2796 = vunpack.c.l.b16 %v1839
        %v2797 = vunpack.c.h.b16 %v1839
        %v2798 = vunpack.c.l.b16 %v1840
        %v2799 = vunpack.c.h.b16 %v1840
        %v2800 = vunpack.c.l.b16 %v1841
        %v2801 = vunpack.c.h.b16 %v1841
        %v2802 = vunpack.c.l.b16 %v1842
        %v2803 = vunpack.c.h.b16 %v1842
        %v2804 = vunpack.c.l.b16 %v1843
        %v2805 = vunpack.c.h.b16 %v1843
        %v2806 = vunpack.c.l.b16 %v1844
        %v2807 = vunpack.c.h.b16 %v1844
        %v2808 = vpack.c.b16 %v2776, %v2768
        %v2809 = vpack.c.b16 %v2777, %v2769
        %v2810 = vpack.c.b16 %v2778, %v2770
        %v2811 = vpack.c.b16 %v2779, %v2771
        %v2812 = vpack.c.b16 %v2780, %v2772
        %v2813 = vpack.c.b16 %v2781, %v2773
        %v2814 = vpack.c.b16 %v2782, %v2774
        %v2815 = vpack.c.b16 %v2783, %v2775
        %v2816 = vpack.c.b16 %v2792, %v2784
        %v2817 = vpack.c.b16 %v2793, %v2785
        %v2818 = vpack.c.b16 %v2794, %v2786
        %v2819 = vpack.c.b16 %v2795, %v2787
        %v2820 = vpack.c.b16 %v2796, %v2788
        %v2821 = vpack.c.b16 %v2797, %v2789
        %v2822 = vpack.c.b16 %v2798, %v2790
        %v2823 = vpack.c.b16 %v2799, %v2791
        %v2824 = vpack.c.b16 %v2800, %v2800
        %v2825 = vpack.c.b16 %v2801, %v2801
        %v2826 = vpack.c.b16 %v2802, %v2802
        %v2827 = vpack.c.b16 %v2803, %v2803
        %v2828 = vpack.c.b16 %v2804, %v2804
        %v2829 = vpack.c.b16 %v2805, %v2805
        %v2830 = vpack.c.b16 %v2806, %v2806
        %v2831 = vpack.c.b16 %v2807, %v2807
        %v2849 = vsel %vm2376, %v1804, 0
        %v2852 = vsel %vm2380, %v2824, 0
        %v2855 = vsel %vm2380, %v2825, 0
        %v2858 = vsel %vm2380, %v2826, 0
        %v2861 = vsel %vm2380, %v2827, 0
        %v2864 = vsel %vm2380, %v2828, 0
        %v2867 = vsel %vm2380, %v2829, 0
        %v2870 = vsel %vm2380, %v2830, 0
        %v2873 = vsel %vm2380, %v2831, 0
        %2875 = vmatpush.bf16.msra.mxu0 0
        %2876 = vmatpush.bf16.msra.mxu0 0
        %2877 = vmatpush.bf16.msra.mxu0 0
        %2878 = vmatpush.bf16.msra.mxu0 0
        %2879 = vmatpush.bf16.msra.mxu0 0
        %2880 = vmatpush.bf16.msra.mxu0 %v2852
        %2881 = vmatpush.bf16.msra.mxu0 %v2816
        %2882 = vmatpush.bf16.msra.mxu0 %v2808
        %2883 = vmatmul.bf16.gmra.mxu0 %v2849
        %v2884 = vpop.f32.mrf.mxu0
        %v2885 = vadd.f32 %v2417, %v2884
        %v2886 = vpop.f32.mrf.mxu0
        %2887 = vdwg.mxu0
        %2888 = vmatpush.bf16.msra.mxu0 0
        %2889 = vmatpush.bf16.msra.mxu0 0
        %2890 = vmatpush.bf16.msra.mxu0 0
        %2891 = vmatpush.bf16.msra.mxu0 0
        %2892 = vmatpush.bf16.msra.mxu0 0
        %2893 = vmatpush.bf16.msra.mxu0 %v2855
        %2894 = vmatpush.bf16.msra.mxu0 %v2817
        %2895 = vmatpush.bf16.msra.mxu0 %v2809
        %2896 = vmatmul.bf16.gmra.mxu0 %v2849
        %v2897 = vpop.f32.mrf.mxu0
        %v2898 = vadd.f32 %v2431, %v2897
        %v2899 = vpop.f32.mrf.mxu0
        %2900 = vdwg.mxu0
        %2901 = vmatpush.bf16.msra.mxu0 0
        %2902 = vmatpush.bf16.msra.mxu0 0
        %2903 = vmatpush.bf16.msra.mxu0 0
        %2904 = vmatpush.bf16.msra.mxu0 0
        %2905 = vmatpush.bf16.msra.mxu0 0
        %2906 = vmatpush.bf16.msra.mxu0 %v2858
        %2907 = vmatpush.bf16.msra.mxu0 %v2818
        %2908 = vmatpush.bf16.msra.mxu0 %v2810
        %2909 = vmatmul.bf16.gmra.mxu0 %v2849
        %v2910 = vpop.f32.mrf.mxu0
        %v2911 = vadd.f32 %v2445, %v2910
        %v2912 = vpop.f32.mrf.mxu0
        %2913 = vdwg.mxu0
        %2914 = vmatpush.bf16.msra.mxu0 0
        %2915 = vmatpush.bf16.msra.mxu0 0
        %2916 = vmatpush.bf16.msra.mxu0 0
        %2917 = vmatpush.bf16.msra.mxu0 0
        %2918 = vmatpush.bf16.msra.mxu0 0
        %2919 = vmatpush.bf16.msra.mxu0 %v2861
        %2920 = vmatpush.bf16.msra.mxu0 %v2819
        %2921 = vmatpush.bf16.msra.mxu0 %v2811
        %2922 = vmatmul.bf16.gmra.mxu0 %v2849
        %v2923 = vpop.f32.mrf.mxu0
        %v2924 = vadd.f32 %v2459, %v2923
        %v2925 = vpop.f32.mrf.mxu0
        %2926 = vdwg.mxu0
        %2927 = vmatpush.bf16.msra.mxu0 0
        %2928 = vmatpush.bf16.msra.mxu0 0
        %2929 = vmatpush.bf16.msra.mxu0 0
        %2930 = vmatpush.bf16.msra.mxu0 0
        %2931 = vmatpush.bf16.msra.mxu0 0
        %2932 = vmatpush.bf16.msra.mxu0 %v2864
        %2933 = vmatpush.bf16.msra.mxu0 %v2820
        %2934 = vmatpush.bf16.msra.mxu0 %v2812
        %2935 = vmatmul.bf16.gmra.mxu0 %v2849
        %v2936 = vpop.f32.mrf.mxu0
        %v2937 = vadd.f32 %v2473, %v2936
        %v2938 = vpop.f32.mrf.mxu0
        %2939 = vdwg.mxu0
        %2940 = vmatpush.bf16.msra.mxu0 0
        %2941 = vmatpush.bf16.msra.mxu0 0
        %2942 = vmatpush.bf16.msra.mxu0 0
        %2943 = vmatpush.bf16.msra.mxu0 0
        %2944 = vmatpush.bf16.msra.mxu0 0
        %2945 = vmatpush.bf16.msra.mxu0 %v2867
        %2946 = vmatpush.bf16.msra.mxu0 %v2821
        %2947 = vmatpush.bf16.msra.mxu0 %v2813
        %2948 = vmatmul.bf16.gmra.mxu0 %v2849
        %v2949 = vpop.f32.mrf.mxu0
        %v2950 = vadd.f32 %v2487, %v2949
        %v2951 = vpop.f32.mrf.mxu0
        %2952 = vdwg.mxu0
        %2953 = vmatpush.bf16.msra.mxu0 0
        %2954 = vmatpush.bf16.msra.mxu0 0
        %2955 = vmatpush.bf16.msra.mxu0 0
        %2956 = vmatpush.bf16.msra.mxu0 0
        %2957 = vmatpush.bf16.msra.mxu0 0
        %2958 = vmatpush.bf16.msra.mxu0 %v2870
        %2959 = vmatpush.bf16.msra.mxu0 %v2822
        %2960 = vmatpush.bf16.msra.mxu0 %v2814
        %2961 = vmatmul.bf16.gmra.mxu0 %v2849
        %v2962 = vpop.f32.mrf.mxu0
        %v2963 = vadd.f32 %v2501, %v2962
        %v2964 = vpop.f32.mrf.mxu0
        %2965 = vdwg.mxu0
        %2966 = vmatpush.bf16.msra.mxu0 0
        %2967 = vmatpush.bf16.msra.mxu0 0
        %2968 = vmatpush.bf16.msra.mxu0 0
        %2969 = vmatpush.bf16.msra.mxu0 0
        %2970 = vmatpush.bf16.msra.mxu0 0
        %2971 = vmatpush.bf16.msra.mxu0 %v2873
        %2972 = vmatpush.bf16.msra.mxu0 %v2823
        %2973 = vmatpush.bf16.msra.mxu0 %v2815
        %2974 = vmatmul.bf16.gmra.mxu0 %v2849
        %v2975 = vpop.f32.mrf.mxu0
        %v2976 = vadd.f32 %v2515, %v2975
        %v2977 = vpop.f32.mrf.mxu0
        %2978 = vdwg.mxu0
        %s2979 = scalar_lea.vmem %s4, 6
        %v2980 = vld [vmem:[%s2979] ss:$8 sm:$0x3]
        %vm2981 = vcmp.gt.f32.partialorder %v2980, 0.5
        %s2982 = scalar_lea.vmem %s5, 6
        %v2983 = vld [vmem:[%s2982] ss:$8 sm:$0x3]
        %vm2984 = vcmp.gt.f32.partialorder %v2983, 0.5
        %v2985 = vld [vmem:[#allocation2 + $0x4] sm:$0xff]
        %v2986 = vld [vmem:[#allocation2 + $0xc] sm:$0xf]
        %v2987 = vld [vmem:[#allocation2 + $0x14] sm:$0x33]
        %v2988 = vld [vmem:[#allocation2 + $0x1c] sm:$0x3]
        %v2989 = vsel %vm2981, 1, 0
        %v2990 = vperm.slane %v2989, 0
        %v2991 = vperm.slane %v2989, 1
        %vm2992 = vcmp.eq.s32.totalorder %v2990, 1
        %vm2993 = vcmp.eq.s32.totalorder %v2991, 1
        %vm2994 = vmpackc.low %vm2993, %vm2992
        %v2995 = vsel %vm2994, 65537, 0
        %2996 = vrot.lane.b32.xlu0 %v2995, 15
        %v2997 = vpop.permute.xlu0 %2996
        %v2998 = vrot.slane %v2997, 4
        %v2999 = vsel %vm1522, %v2998, %v2997
        %v3000 = vunpack.c.l.b16 %v2999
        %v3001 = vunpack.c.h.b16 %v2999
        %v3002 = vunpack.c.l.b16 0
        %v3003 = vunpack.c.h.b16 0
        %vm3004 = vcmp.ne.s32.totalorder %v3000, %v3002
        %vm3005 = vcmp.ne.s32.totalorder %v3001, %v3003
        %vm3006 = vmpackc.low %vm3005, %vm3004
        %v3007 = vunpack.c.l.b16 %v2998
        %v3008 = vunpack.c.h.b16 %v2998
        %v3009 = vunpack.c.l.b16 0
        %v3010 = vunpack.c.h.b16 0
        %vm3011 = vcmp.ne.s32.totalorder %v3007, %v3009
        %vm3012 = vcmp.ne.s32.totalorder %v3008, %v3010
        %vm3013 = vmpackc.low %vm3012, %vm3011
        %v3014 = vsel %vm3006, %v2985, 0
        %v3015 = vsel %vm3013, %v2986, 0
        %v3016 = vsel %vm3006, %v2987, 0
        %v3017 = vsel %vm3013, %v2988, 0
        %3022 = vrot.lane.b32.xlu0 %v3014, 113
        %v3023 = vpop.permute.xlu0 %3022
        %3024 = vrot.lane.b32.xlu0 %v3015, 113
        %v3025 = vpop.permute.xlu0 %3024
        %3026 = vrot.lane.b32.xlu0 %v3016, 113
        %v3027 = vpop.permute.xlu0 %3026
        %3028 = vrot.lane.b32.xlu0 %v3017, 113
        %v3029 = vpop.permute.xlu0 %3028
        %v3030 = vrot.slane %v3023, 4
        %v3031 = vrot.slane %v3025, 4
        %v3032 = vrot.slane %v3027, 4
        %v3033 = vrot.slane %v3029, 4
        %v3034 = vsel %vm849, %v3030, %v3031
        %v3035 = vsel %vm1485, %v3023, %v3034
        %v3036 = vsel %vm849, %v3032, %v3033
        %v3037 = vsel %vm1485, %v3027, %v3036
        %3040 = vst [vmem:[#allocation3] sm:$0xff] %v3035
        %3041 = vst [vmem:[#allocation3 + $0x20] sm:$0x33] %v3037
        %v3042 = vsel %vm2984, 1, 0
        %v3043 = vperm.slane %v3042, 0
        %v3044 = vperm.slane %v3042, 1
        %vm3045 = vcmp.eq.s32.totalorder %v3043, 1
        %vm3046 = vcmp.eq.s32.totalorder %v3044, 1
        %vm3047 = vmpackc.low %vm3046, %vm3045
        %v3048 = vsel %vm3047, 65537, 0
        %3049 = vrot.lane.b32.xlu0 %v3048, 15
        %v3050 = vpop.permute.xlu0 %3049
        %v3051 = vrot.slane %v3050, 4
        %v3052 = vsel %vm1522, %v3051, %v3050
        %v3053 = vunpack.c.l.b16 %v3052
        %v3054 = vunpack.c.h.b16 %v3052
        %v3055 = vunpack.c.l.b16 0
        %v3056 = vunpack.c.h.b16 0
        %vm3057 = vcmp.ne.s32.totalorder %v3053, %v3055
        %vm3058 = vcmp.ne.s32.totalorder %v3054, %v3056
        %vm3059 = vmpackc.low %vm3058, %vm3057
        %v3060 = vunpack.c.l.b16 %v3051
        %v3061 = vunpack.c.h.b16 %v3051
        %v3062 = vunpack.c.l.b16 0
        %v3063 = vunpack.c.h.b16 0
        %vm3064 = vcmp.ne.s32.totalorder %v3060, %v3062
        %vm3065 = vcmp.ne.s32.totalorder %v3061, %v3063
        %vm3066 = vmpackc.low %vm3065, %vm3064
        %v3067 = vsel %vm3059, %v2985, 0
        %v3068 = vsel %vm3066, %v2986, 0
        %v3069 = vsel %vm3059, %v2987, 0
        %v3070 = vsel %vm3066, %v2988, 0
        %3075 = vrot.lane.b32.xlu0 %v3067, 113
        %v3076 = vpop.permute.xlu0 %3075
        %3077 = vrot.lane.b32.xlu0 %v3068, 113
        %v3078 = vpop.permute.xlu0 %3077
        %3079 = vrot.lane.b32.xlu0 %v3069, 113
        %v3080 = vpop.permute.xlu0 %3079
        %3081 = vrot.lane.b32.xlu0 %v3070, 113
        %v3082 = vpop.permute.xlu0 %3081
        %v3083 = vrot.slane %v3076, 4
        %v3084 = vrot.slane %v3078, 4
        %v3085 = vrot.slane %v3080, 4
        %v3086 = vrot.slane %v3082, 4
        %v3087 = vsel %vm849, %v3083, %v3084
        %v3088 = vsel %vm1485, %v3076, %v3087
        %v3089 = vsel %vm849, %v3085, %v3086
        %v3090 = vsel %vm1485, %v3080, %v3089
        %3093 = vst [vmem:[#allocation4] sm:$0xff] %v3088
        %3094 = vst [vmem:[#allocation4 + $0x20] sm:$0x33] %v3090
        %v3095 = vld [vmem:[#allocation2 + $0x4] sm:$0xcc]
        %v3096 = vld [vmem:[#allocation2 + $0xc] sm:$0xc]
        %v3097 = vld [vmem:[#allocation2 + $0x14] sm:$0xff]
        %v3098 = vld [vmem:[#allocation2 + $0x1c] sm:$0xf]
        %v3099 = vsel %vm3006, %v3095, 0
        %v3100 = vsel %vm3013, %v3096, 0
        %v3101 = vsel %vm3006, %v3097, 0
        %v3102 = vsel %vm3013, %v3098, 0
        %v3107 = vrot.slane %v3099, 6
        %v3108 = vrot.slane %v3107, 4
        %v3109 = vrot.slane %v3101, 6
        %v3110 = vsel %vm926, %v3108, %v3109
        %v3111 = vrot.slane %v3100, 6
        %v3112 = vrot.slane %v3111, 4
        %v3113 = vrot.slane %v3102, 6
        %v3114 = vsel %vm926, %v3112, %v3113
        %v3115 = vrot.slane %v3109, 4
        %v3116 = vrot.slane %v3113, 4
        %3117 = vrot.lane.b32.xlu0 %v3110, 113
        %v3118 = vpop.permute.xlu0 %3117
        %3119 = vrot.lane.b32.xlu0 %v3114, 113
        %v3120 = vpop.permute.xlu0 %3119
        %3121 = vrot.lane.b32.xlu0 %v3115, 113
        %v3122 = vpop.permute.xlu0 %3121
        %3123 = vrot.lane.b32.xlu0 %v3116, 113
        %v3124 = vpop.permute.xlu0 %3123
        %v3125 = vrot.slane %v3118, 4
        %v3126 = vrot.slane %v3120, 4
        %v3127 = vrot.slane %v3122, 4
        %v3128 = vrot.slane %v3124, 4
        %v3129 = vsel %vm849, %v3125, %v3126
        %v3130 = vsel %vm1485, %v3118, %v3129
        %v3131 = vsel %vm849, %v3127, %v3128
        %v3132 = vsel %vm1485, %v3122, %v3131
        %3135 = vst [vmem:[#allocation3 + $0x8] sm:$0xff] %v3130
        %3136 = vst [vmem:[#allocation3 + $0x28] sm:$0x33] %v3132
        %v3137 = vsel %vm3059, %v3095, 0
        %v3138 = vsel %vm3066, %v3096, 0
        %v3139 = vsel %vm3059, %v3097, 0
        %v3140 = vsel %vm3066, %v3098, 0
        %v3145 = vrot.slane %v3137, 6
        %v3146 = vrot.slane %v3145, 4
        %v3147 = vrot.slane %v3139, 6
        %v3148 = vsel %vm926, %v3146, %v3147
        %v3149 = vrot.slane %v3138, 6
        %v3150 = vrot.slane %v3149, 4
        %v3151 = vrot.slane %v3140, 6
        %v3152 = vsel %vm926, %v3150, %v3151
        %v3153 = vrot.slane %v3147, 4
        %v3154 = vrot.slane %v3151, 4
        %3155 = vrot.lane.b32.xlu0 %v3148, 113
        %v3156 = vpop.permute.xlu0 %3155
        %3157 = vrot.lane.b32.xlu0 %v3152, 113
        %v3158 = vpop.permute.xlu0 %3157
        %3159 = vrot.lane.b32.xlu0 %v3153, 113
        %v3160 = vpop.permute.xlu0 %3159
        %3161 = vrot.lane.b32.xlu0 %v3154, 113
        %v3162 = vpop.permute.xlu0 %3161
        %v3163 = vrot.slane %v3156, 4
        %v3164 = vrot.slane %v3158, 4
        %v3165 = vrot.slane %v3160, 4
        %v3166 = vrot.slane %v3162, 4
        %v3167 = vsel %vm849, %v3163, %v3164
        %v3168 = vsel %vm1485, %v3156, %v3167
        %v3169 = vsel %vm849, %v3165, %v3166
        %v3170 = vsel %vm1485, %v3160, %v3169
        %3173 = vst [vmem:[#allocation4 + $0x8] sm:$0xff] %v3168
        %3174 = vst [vmem:[#allocation4 + $0x28] sm:$0x33] %v3170
        %v3175 = vld [vmem:[#allocation2 + $0x14] sm:$0xff]
        %v3176 = vld [vmem:[#allocation2 + $0x1c] sm:$0xf]
        %v3177 = vld [vmem:[#allocation2 + $0x24] sm:$0x33]
        %v3178 = vld [vmem:[#allocation2 + $0x2c] sm:$0x3]
        %v3179 = vsel %vm3006, %v3175, 0
        %v3180 = vsel %vm3013, %v3176, 0
        %v3181 = vsel %vm3006, %v3177, 0
        %v3182 = vsel %vm3013, %v3178, 0
        %3187 = vrot.lane.b32.xlu0 %v3179, 113
        %v3188 = vpop.permute.xlu0 %3187
        %3189 = vrot.lane.b32.xlu0 %v3180, 113
        %v3190 = vpop.permute.xlu0 %3189
        %3191 = vrot.lane.b32.xlu0 %v3181, 113
        %v3192 = vpop.permute.xlu0 %3191
        %3193 = vrot.lane.b32.xlu0 %v3182, 113
        %v3194 = vpop.permute.xlu0 %3193
        %v3195 = vrot.slane %v3188, 4
        %v3196 = vrot.slane %v3190, 4
        %v3197 = vrot.slane %v3192, 4
        %v3198 = vrot.slane %v3194, 4
        %v3199 = vsel %vm849, %v3195, %v3196
        %v3200 = vsel %vm1485, %v3188, %v3199
        %v3201 = vsel %vm849, %v3197, %v3198
        %v3202 = vsel %vm1485, %v3192, %v3201
        %3205 = vst [vmem:[#allocation3 + $0x10] sm:$0xff] %v3200
        %3206 = vst [vmem:[#allocation3 + $0x30] sm:$0x33] %v3202
        %v3207 = vsel %vm3059, %v3175, 0
        %v3208 = vsel %vm3066, %v3176, 0
        %v3209 = vsel %vm3059, %v3177, 0
        %v3210 = vsel %vm3066, %v3178, 0
        %3215 = vrot.lane.b32.xlu0 %v3207, 113
        %v3216 = vpop.permute.xlu0 %3215
        %3217 = vrot.lane.b32.xlu0 %v3208, 113
        %v3218 = vpop.permute.xlu0 %3217
        %3219 = vrot.lane.b32.xlu0 %v3209, 113
        %v3220 = vpop.permute.xlu0 %3219
        %3221 = vrot.lane.b32.xlu0 %v3210, 113
        %v3222 = vpop.permute.xlu0 %3221
        %v3223 = vrot.slane %v3216, 4
        %v3224 = vrot.slane %v3218, 4
        %v3225 = vrot.slane %v3220, 4
        %v3226 = vrot.slane %v3222, 4
        %v3227 = vsel %vm849, %v3223, %v3224
        %v3228 = vsel %vm1485, %v3216, %v3227
        %v3229 = vsel %vm849, %v3225, %v3226
        %v3230 = vsel %vm1485, %v3220, %v3229
        %3233 = vst [vmem:[#allocation4 + $0x10] sm:$0xff] %v3228
        %3234 = vst [vmem:[#allocation4 + $0x30] sm:$0x33] %v3230
        %v3235 = vld [vmem:[#allocation2 + $0x14] sm:$0xcc]
        %v3236 = vld [vmem:[#allocation2 + $0x1c] sm:$0xc]
        %v3237 = vld [vmem:[#allocation2 + $0x24] sm:$0xff]
        %v3238 = vld [vmem:[#allocation2 + $0x2c] sm:$0xf]
        %v3239 = vsel %vm3006, %v3235, 0
        %v3240 = vsel %vm3013, %v3236, 0
        %v3241 = vsel %vm3006, %v3237, 0
        %v3242 = vsel %vm3013, %v3238, 0
        %v3247 = vrot.slane %v3239, 6
        %v3248 = vrot.slane %v3247, 4
        %v3249 = vrot.slane %v3241, 6
        %v3250 = vsel %vm926, %v3248, %v3249
        %v3251 = vrot.slane %v3240, 6
        %v3252 = vrot.slane %v3251, 4
        %v3253 = vrot.slane %v3242, 6
        %v3254 = vsel %vm926, %v3252, %v3253
        %v3255 = vrot.slane %v3249, 4
        %v3256 = vrot.slane %v3253, 4
        %3257 = vrot.lane.b32.xlu0 %v3250, 113
        %v3258 = vpop.permute.xlu0 %3257
        %3259 = vrot.lane.b32.xlu0 %v3254, 113
        %v3260 = vpop.permute.xlu0 %3259
        %3261 = vrot.lane.b32.xlu0 %v3255, 113
        %v3262 = vpop.permute.xlu0 %3261
        %3263 = vrot.lane.b32.xlu0 %v3256, 113
        %v3264 = vpop.permute.xlu0 %3263
        %v3265 = vrot.slane %v3258, 4
        %v3266 = vrot.slane %v3260, 4
        %v3267 = vrot.slane %v3262, 4
        %v3268 = vrot.slane %v3264, 4
        %v3269 = vsel %vm849, %v3265, %v3266
        %v3270 = vsel %vm1485, %v3258, %v3269
        %v3271 = vsel %vm849, %v3267, %v3268
        %v3272 = vsel %vm1485, %v3262, %v3271
        %3275 = vst [vmem:[#allocation3 + $0x18] sm:$0xff] %v3270
        %3276 = vst [vmem:[#allocation3 + $0x38] sm:$0x33] %v3272
        %v3277 = vsel %vm3059, %v3235, 0
        %v3278 = vsel %vm3066, %v3236, 0
        %v3279 = vsel %vm3059, %v3237, 0
        %v3280 = vsel %vm3066, %v3238, 0
        %v3285 = vrot.slane %v3277, 6
        %v3286 = vrot.slane %v3285, 4
        %v3287 = vrot.slane %v3279, 6
        %v3288 = vsel %vm926, %v3286, %v3287
        %v3289 = vrot.slane %v3278, 6
        %v3290 = vrot.slane %v3289, 4
        %v3291 = vrot.slane %v3280, 6
        %v3292 = vsel %vm926, %v3290, %v3291
        %v3293 = vrot.slane %v3287, 4
        %v3294 = vrot.slane %v3291, 4
        %3295 = vrot.lane.b32.xlu0 %v3288, 113
        %v3296 = vpop.permute.xlu0 %3295
        %3297 = vrot.lane.b32.xlu0 %v3292, 113
        %v3298 = vpop.permute.xlu0 %3297
        %3299 = vrot.lane.b32.xlu0 %v3293, 113
        %v3300 = vpop.permute.xlu0 %3299
        %3301 = vrot.lane.b32.xlu0 %v3294, 113
        %v3302 = vpop.permute.xlu0 %3301
        %v3303 = vrot.slane %v3296, 4
        %v3304 = vrot.slane %v3298, 4
        %v3305 = vrot.slane %v3300, 4
        %v3306 = vrot.slane %v3302, 4
        %v3307 = vsel %vm849, %v3303, %v3304
        %v3308 = vsel %vm1485, %v3296, %v3307
        %v3309 = vsel %vm849, %v3305, %v3306
        %v3310 = vsel %vm1485, %v3300, %v3309
        %3313 = vst [vmem:[#allocation4 + $0x18] sm:$0xff] %v3308
        %3314 = vst [vmem:[#allocation4 + $0x38] sm:$0x33] %v3310
        %s3315 = scalar_lea.vmem %s4, 7
        %v3316 = vld [vmem:[%s3315] ss:$8 sm:$0x3]
        %vm3317 = vcmp.gt.f32.partialorder %v3316, 0.5
        %s3318 = scalar_lea.vmem %s5, 7
        %v3319 = vld [vmem:[%s3318] ss:$8 sm:$0x3]
        %vm3320 = vcmp.gt.f32.partialorder %v3319, 0.5
        %v3321 = vld [vmem:[#allocation2 + $0x4] sm:$0xff]
        %v3322 = vld [vmem:[#allocation2 + $0xc] sm:$0xf]
        %v3323 = vld [vmem:[#allocation2 + $0x14] sm:$0x33]
        %v3324 = vld [vmem:[#allocation2 + $0x1c] sm:$0x3]
        %v3325 = vsel %vm3317, 1, 0
        %v3326 = vperm.slane %v3325, 0
        %v3327 = vperm.slane %v3325, 1
        %vm3328 = vcmp.eq.s32.totalorder %v3326, 1
        %vm3329 = vcmp.eq.s32.totalorder %v3327, 1
        %vm3330 = vmpackc.low %vm3329, %vm3328
        %v3331 = vsel %vm3330, 65537, 0
        %3332 = vrot.lane.b32.xlu0 %v3331, 16
        %v3333 = vpop.permute.xlu0 %3332
        %v3334 = vrot.slane %v3333, 4
        %v3335 = vsel %vm1200, %v3334, %v3333
        %v3336 = vunpack.c.l.b16 %v3335
        %v3337 = vunpack.c.h.b16 %v3335
        %v3338 = vunpack.c.l.b16 0
        %v3339 = vunpack.c.h.b16 0
        %vm3340 = vcmp.ne.s32.totalorder %v3336, %v3338
        %vm3341 = vcmp.ne.s32.totalorder %v3337, %v3339
        %vm3342 = vmpackc.low %vm3341, %vm3340
        %v3343 = vunpack.c.l.b16 %v3334
        %v3344 = vunpack.c.h.b16 %v3334
        %v3345 = vunpack.c.l.b16 0
        %v3346 = vunpack.c.h.b16 0
        %vm3347 = vcmp.ne.s32.totalorder %v3343, %v3345
        %vm3348 = vcmp.ne.s32.totalorder %v3344, %v3346
        %vm3349 = vmpackc.low %vm3348, %vm3347
        %v3350 = vsel %vm3342, %v3321, 0
        %v3351 = vsel %vm3349, %v3322, 0
        %v3352 = vsel %vm3342, %v3323, 0
        %v3353 = vsel %vm3349, %v3324, 0
        %v3358 = vrot.slane %v3350, 6
        %v3359 = vrot.slane %v3351, 6
        %v3360 = vrot.slane %v3358, 4
        %v3361 = vrot.slane %v3352, 6
        %v3362 = vsel %vm926, %v3360, %v3361
        %v3363 = vrot.slane %v3359, 4
        %v3364 = vrot.slane %v3353, 6
        %v3365 = vsel %vm926, %v3363, %v3364
        %3366 = vrot.lane.b32.xlu0 %v3358, 112
        %v3367 = vpop.permute.xlu0 %3366
        %3368 = vrot.lane.b32.xlu0 %v3359, 112
        %v3369 = vpop.permute.xlu0 %3368
        %3370 = vrot.lane.b32.xlu0 %v3362, 112
        %v3371 = vpop.permute.xlu0 %3370
        %3372 = vrot.lane.b32.xlu0 %v3365, 112
        %v3373 = vpop.permute.xlu0 %3372
        %v3374 = vrot.slane %v3367, 4
        %v3375 = vrot.slane %v3369, 4
        %v3376 = vrot.slane %v3371, 4
        %v3377 = vrot.slane %v3373, 4
        %v3378 = vsel %vm849, %v3374, %v3375
        %v3379 = vsel %vm1155, %v3367, %v3378
        %v3380 = vsel %vm849, %v3376, %v3377
        %v3381 = vsel %vm1155, %v3371, %v3380
        %3384 = vst [vmem:[#allocation3 + $0x20] sm:$0xcc] %v3379
        %3385 = vst [vmem:[#allocation3 + $0x40] sm:$0xff] %v3381
        %v3386 = vsel %vm3320, 1, 0
        %v3387 = vperm.slane %v3386, 0
        %v3388 = vperm.slane %v3386, 1
        %vm3389 = vcmp.eq.s32.totalorder %v3387, 1
        %vm3390 = vcmp.eq.s32.totalorder %v3388, 1
        %vm3391 = vmpackc.low %vm3390, %vm3389
        %v3392 = vsel %vm3391, 65537, 0
        %3393 = vrot.lane.b32.xlu0 %v3392, 16
        %v3394 = vpop.permute.xlu0 %3393
        %v3395 = vrot.slane %v3394, 4
        %v3396 = vsel %vm1200, %v3395, %v3394
        %v3397 = vunpack.c.l.b16 %v3396
        %v3398 = vunpack.c.h.b16 %v3396
        %v3399 = vunpack.c.l.b16 0
        %v3400 = vunpack.c.h.b16 0
        %vm3401 = vcmp.ne.s32.totalorder %v3397, %v3399
        %vm3402 = vcmp.ne.s32.totalorder %v3398, %v3400
        %vm3403 = vmpackc.low %vm3402, %vm3401
        %v3404 = vunpack.c.l.b16 %v3395
        %v3405 = vunpack.c.h.b16 %v3395
        %v3406 = vunpack.c.l.b16 0
        %v3407 = vunpack.c.h.b16 0
        %vm3408 = vcmp.ne.s32.totalorder %v3404, %v3406
        %vm3409 = vcmp.ne.s32.totalorder %v3405, %v3407
        %vm3410 = vmpackc.low %vm3409, %vm3408
        %v3411 = vsel %vm3403, %v3321, 0
        %v3412 = vsel %vm3410, %v3322, 0
        %v3413 = vsel %vm3403, %v3323, 0
        %v3414 = vsel %vm3410, %v3324, 0
        %v3419 = vrot.slane %v3411, 6
        %v3420 = vrot.slane %v3412, 6
        %v3421 = vrot.slane %v3419, 4
        %v3422 = vrot.slane %v3413, 6
        %v3423 = vsel %vm926, %v3421, %v3422
        %v3424 = vrot.slane %v3420, 4
        %v3425 = vrot.slane %v3414, 6
        %v3426 = vsel %vm926, %v3424, %v3425
        %3427 = vrot.lane.b32.xlu0 %v3419, 112
        %v3428 = vpop.permute.xlu0 %3427
        %3429 = vrot.lane.b32.xlu0 %v3420, 112
        %v3430 = vpop.permute.xlu0 %3429
        %3431 = vrot.lane.b32.xlu0 %v3423, 112
        %v3432 = vpop.permute.xlu0 %3431
        %3433 = vrot.lane.b32.xlu0 %v3426, 112
        %v3434 = vpop.permute.xlu0 %3433
        %v3435 = vrot.slane %v3428, 4
        %v3436 = vrot.slane %v3430, 4
        %v3437 = vrot.slane %v3432, 4
        %v3438 = vrot.slane %v3434, 4
        %v3439 = vsel %vm849, %v3435, %v3436
        %v3440 = vsel %vm1155, %v3428, %v3439
        %v3441 = vsel %vm849, %v3437, %v3438
        %v3442 = vsel %vm1155, %v3432, %v3441
        %3445 = vst [vmem:[#allocation4 + $0x20] sm:$0xcc] %v3440
        %3446 = vst [vmem:[#allocation4 + $0x40] sm:$0xff] %v3442
        %v3447 = vld [vmem:[#allocation2 + $0x4] sm:$0xcc]
        %v3448 = vld [vmem:[#allocation2 + $0xc] sm:$0xc]
        %v3449 = vld [vmem:[#allocation2 + $0x14] sm:$0xff]
        %v3450 = vld [vmem:[#allocation2 + $0x1c] sm:$0xf]
        %v3451 = vsel %vm3342, %v3447, 0
        %v3452 = vsel %vm3349, %v3448, 0
        %v3453 = vsel %vm3342, %v3449, 0
        %v3454 = vsel %vm3349, %v3450, 0
        %3459 = vrot.lane.b32.xlu0 %v3451, 112
        %v3460 = vpop.permute.xlu0 %3459
        %3461 = vrot.lane.b32.xlu0 %v3452, 112
        %v3462 = vpop.permute.xlu0 %3461
        %3463 = vrot.lane.b32.xlu0 %v3453, 112
        %v3464 = vpop.permute.xlu0 %3463
        %3465 = vrot.lane.b32.xlu0 %v3454, 112
        %v3466 = vpop.permute.xlu0 %3465
        %v3467 = vrot.slane %v3460, 4
        %v3468 = vrot.slane %v3462, 4
        %v3469 = vrot.slane %v3464, 4
        %v3470 = vrot.slane %v3466, 4
        %v3471 = vsel %vm849, %v3467, %v3468
        %v3472 = vsel %vm1155, %v3460, %v3471
        %v3473 = vsel %vm849, %v3469, %v3470
        %v3474 = vsel %vm1155, %v3464, %v3473
        %3477 = vst [vmem:[#allocation3 + $0x28] sm:$0xcc] %v3472
        %3478 = vst [vmem:[#allocation3 + $0x48] sm:$0xff] %v3474
        %v3479 = vsel %vm3403, %v3447, 0
        %v3480 = vsel %vm3410, %v3448, 0
        %v3481 = vsel %vm3403, %v3449, 0
        %v3482 = vsel %vm3410, %v3450, 0
        %3487 = vrot.lane.b32.xlu0 %v3479, 112
        %v3488 = vpop.permute.xlu0 %3487
        %3489 = vrot.lane.b32.xlu0 %v3480, 112
        %v3490 = vpop.permute.xlu0 %3489
        %3491 = vrot.lane.b32.xlu0 %v3481, 112
        %v3492 = vpop.permute.xlu0 %3491
        %3493 = vrot.lane.b32.xlu0 %v3482, 112
        %v3494 = vpop.permute.xlu0 %3493
        %v3495 = vrot.slane %v3488, 4
        %v3496 = vrot.slane %v3490, 4
        %v3497 = vrot.slane %v3492, 4
        %v3498 = vrot.slane %v3494, 4
        %v3499 = vsel %vm849, %v3495, %v3496
        %v3500 = vsel %vm1155, %v3488, %v3499
        %v3501 = vsel %vm849, %v3497, %v3498
        %v3502 = vsel %vm1155, %v3492, %v3501
        %3505 = vst [vmem:[#allocation4 + $0x28] sm:$0xcc] %v3500
        %3506 = vst [vmem:[#allocation4 + $0x48] sm:$0xff] %v3502
        %v3507 = vld [vmem:[#allocation2 + $0x14] sm:$0xff]
        %v3508 = vld [vmem:[#allocation2 + $0x1c] sm:$0xf]
        %v3509 = vld [vmem:[#allocation2 + $0x24] sm:$0x33]
        %v3510 = vld [vmem:[#allocation2 + $0x2c] sm:$0x3]
        %v3511 = vsel %vm3342, %v3507, 0
        %v3512 = vsel %vm3349, %v3508, 0
        %v3513 = vsel %vm3342, %v3509, 0
        %v3514 = vsel %vm3349, %v3510, 0
        %v3519 = vrot.slane %v3511, 6
        %v3520 = vrot.slane %v3512, 6
        %v3521 = vrot.slane %v3519, 4
        %v3522 = vrot.slane %v3513, 6
        %v3523 = vsel %vm926, %v3521, %v3522
        %v3524 = vrot.slane %v3520, 4
        %v3525 = vrot.slane %v3514, 6
        %v3526 = vsel %vm926, %v3524, %v3525
        %3527 = vrot.lane.b32.xlu0 %v3519, 112
        %v3528 = vpop.permute.xlu0 %3527
        %3529 = vrot.lane.b32.xlu0 %v3520, 112
        %v3530 = vpop.permute.xlu0 %3529
        %3531 = vrot.lane.b32.xlu0 %v3523, 112
        %v3532 = vpop.permute.xlu0 %3531
        %3533 = vrot.lane.b32.xlu0 %v3526, 112
        %v3534 = vpop.permute.xlu0 %3533
        %v3535 = vrot.slane %v3528, 4
        %v3536 = vrot.slane %v3530, 4
        %v3537 = vrot.slane %v3532, 4
        %v3538 = vrot.slane %v3534, 4
        %v3539 = vsel %vm849, %v3535, %v3536
        %v3540 = vsel %vm1155, %v3528, %v3539
        %v3541 = vsel %vm849, %v3537, %v3538
        %v3542 = vsel %vm1155, %v3532, %v3541
        %3545 = vst [vmem:[#allocation3 + $0x30] sm:$0xcc] %v3540
        %3546 = vst [vmem:[#allocation3 + $0x50] sm:$0xff] %v3542
        %v3547 = vsel %vm3403, %v3507, 0
        %v3548 = vsel %vm3410, %v3508, 0
        %v3549 = vsel %vm3403, %v3509, 0
        %v3550 = vsel %vm3410, %v3510, 0
        %v3555 = vrot.slane %v3547, 6
        %v3556 = vrot.slane %v3548, 6
        %v3557 = vrot.slane %v3555, 4
        %v3558 = vrot.slane %v3549, 6
        %v3559 = vsel %vm926, %v3557, %v3558
        %v3560 = vrot.slane %v3556, 4
        %v3561 = vrot.slane %v3550, 6
        %v3562 = vsel %vm926, %v3560, %v3561
        %3563 = vrot.lane.b32.xlu0 %v3555, 112
        %v3564 = vpop.permute.xlu0 %3563
        %3565 = vrot.lane.b32.xlu0 %v3556, 112
        %v3566 = vpop.permute.xlu0 %3565
        %3567 = vrot.lane.b32.xlu0 %v3559, 112
        %v3568 = vpop.permute.xlu0 %3567
        %3569 = vrot.lane.b32.xlu0 %v3562, 112
        %v3570 = vpop.permute.xlu0 %3569
        %v3571 = vrot.slane %v3564, 4
        %v3572 = vrot.slane %v3566, 4
        %v3573 = vrot.slane %v3568, 4
        %v3574 = vrot.slane %v3570, 4
        %v3575 = vsel %vm849, %v3571, %v3572
        %v3576 = vsel %vm1155, %v3564, %v3575
        %v3577 = vsel %vm849, %v3573, %v3574
        %v3578 = vsel %vm1155, %v3568, %v3577
        %3581 = vst [vmem:[#allocation4 + $0x30] sm:$0xcc] %v3576
        %3582 = vst [vmem:[#allocation4 + $0x50] sm:$0xff] %v3578
        %v3583 = vld [vmem:[#allocation2 + $0x14] sm:$0xcc]
        %v3584 = vld [vmem:[#allocation2 + $0x1c] sm:$0xc]
        %v3585 = vld [vmem:[#allocation2 + $0x24] sm:$0xff]
        %v3586 = vld [vmem:[#allocation2 + $0x2c] sm:$0xf]
        %v3587 = vsel %vm3342, %v3583, 0
        %v3588 = vsel %vm3349, %v3584, 0
        %v3589 = vsel %vm3342, %v3585, 0
        %v3590 = vsel %vm3349, %v3586, 0
        %3595 = vrot.lane.b32.xlu0 %v3587, 112
        %v3596 = vpop.permute.xlu0 %3595
        %3597 = vrot.lane.b32.xlu0 %v3588, 112
        %v3598 = vpop.permute.xlu0 %3597
        %3599 = vrot.lane.b32.xlu0 %v3589, 112
        %v3600 = vpop.permute.xlu0 %3599
        %3601 = vrot.lane.b32.xlu0 %v3590, 112
        %v3602 = vpop.permute.xlu0 %3601
        %v3603 = vrot.slane %v3596, 4
        %v3604 = vrot.slane %v3598, 4
        %v3605 = vrot.slane %v3600, 4
        %v3606 = vrot.slane %v3602, 4
        %v3607 = vsel %vm849, %v3603, %v3604
        %v3608 = vsel %vm1155, %v3596, %v3607
        %v3609 = vsel %vm849, %v3605, %v3606
        %v3610 = vsel %vm1155, %v3600, %v3609
        %3613 = vst [vmem:[#allocation3 + $0x38] sm:$0xcc] %v3608
        %3614 = vst [vmem:[#allocation3 + $0x58] sm:$0xff] %v3610
        %v3615 = vsel %vm3403, %v3583, 0
        %v3616 = vsel %vm3410, %v3584, 0
        %v3617 = vsel %vm3403, %v3585, 0
        %v3618 = vsel %vm3410, %v3586, 0
        %3623 = vrot.lane.b32.xlu0 %v3615, 112
        %v3624 = vpop.permute.xlu0 %3623
        %3625 = vrot.lane.b32.xlu0 %v3616, 112
        %v3626 = vpop.permute.xlu0 %3625
        %3627 = vrot.lane.b32.xlu0 %v3617, 112
        %v3628 = vpop.permute.xlu0 %3627
        %3629 = vrot.lane.b32.xlu0 %v3618, 112
        %v3630 = vpop.permute.xlu0 %3629
        %v3631 = vrot.slane %v3624, 4
        %v3632 = vrot.slane %v3626, 4
        %v3633 = vrot.slane %v3628, 4
        %v3634 = vrot.slane %v3630, 4
        %v3635 = vsel %vm849, %v3631, %v3632
        %v3636 = vsel %vm1155, %v3624, %v3635
        %v3637 = vsel %vm849, %v3633, %v3634
        %v3638 = vsel %vm1155, %v3628, %v3637
        %3641 = vst [vmem:[#allocation4 + $0x38] sm:$0xcc] %v3636
        %3642 = vst [vmem:[#allocation4 + $0x58] sm:$0xff] %v3638
        %s3643 = scalar_lea.vmem %s4, 16
        %v3644 = vld [vmem:[%s3643] ss:$8 sm:$0x3]
        %vm3645 = vcmp.gt.f32.partialorder %v3644, 0.5
        %s3646 = scalar_lea.vmem %s5, 16
        %v3647 = vld [vmem:[%s3646] ss:$8 sm:$0x3]
        %vm3648 = vcmp.gt.f32.partialorder %v3647, 0.5
        %v3649 = vld [vmem:[#allocation2 + $0x4] sm:$0xff]
        %v3650 = vld [vmem:[#allocation2 + $0xc] sm:$0xf]
        %v3651 = vld [vmem:[#allocation2 + $0x14] sm:$0x33]
        %v3652 = vld [vmem:[#allocation2 + $0x1c] sm:$0x3]
        %v3653 = vsel %vm3645, 1, 0
        %v3654 = vperm.slane %v3653, 0
        %v3655 = vperm.slane %v3653, 1
        %vm3656 = vcmp.eq.s32.totalorder %v3654, 1
        %vm3657 = vcmp.eq.s32.totalorder %v3655, 1
        %vm3658 = vmpackc.low %vm3657, %vm3656
        %v3659 = vsel %vm3658, 65537, 0
        %3660 = vrot.lane.b32.xlu0 %v3659, 17
        %v3661 = vpop.permute.xlu0 %3660
        %v3662 = vrot.slane %v3661, 4
        %v3663 = vsel %vm851, %v3662, %v3661
        %v3664 = vunpack.c.l.b16 %v3663
        %v3665 = vunpack.c.h.b16 %v3663
        %v3666 = vunpack.c.l.b16 0
        %v3667 = vunpack.c.h.b16 0
        %vm3668 = vcmp.ne.s32.totalorder %v3664, %v3666
        %vm3669 = vcmp.ne.s32.totalorder %v3665, %v3667
        %vm3670 = vmpackc.low %vm3669, %vm3668
        %v3671 = vunpack.c.l.b16 %v3662
        %v3672 = vunpack.c.h.b16 %v3662
        %v3673 = vunpack.c.l.b16 0
        %v3674 = vunpack.c.h.b16 0
        %vm3675 = vcmp.ne.s32.totalorder %v3671, %v3673
        %vm3676 = vcmp.ne.s32.totalorder %v3672, %v3674
        %vm3677 = vmpackc.low %vm3676, %vm3675
        %v3678 = vsel %vm3670, %v3649, 0
        %v3679 = vsel %vm3677, %v3650, 0
        %v3680 = vsel %vm3670, %v3651, 0
        %v3681 = vsel %vm3677, %v3652, 0
        %3686 = vrot.lane.b32.xlu0 %v3678, 111
        %v3687 = vpop.permute.xlu0 %3686
        %3688 = vrot.lane.b32.xlu0 %v3679, 111
        %v3689 = vpop.permute.xlu0 %3688
        %3690 = vrot.lane.b32.xlu0 %v3680, 111
        %v3691 = vpop.permute.xlu0 %3690
        %3692 = vrot.lane.b32.xlu0 %v3681, 111
        %v3693 = vpop.permute.xlu0 %3692
        %v3694 = vrot.slane %v3687, 4
        %v3695 = vrot.slane %v3689, 4
        %v3696 = vrot.slane %v3691, 4
        %v3697 = vrot.slane %v3693, 4
        %v3698 = vsel %vm849, %v3694, %v3695
        %v3699 = vsel %vm813, %v3687, %v3698
        %v3700 = vsel %vm849, %v3696, %v3697
        %v3701 = vsel %vm813, %v3691, %v3700
        %3704 = vst [vmem:[#allocation3 + $0x60] sm:$0xff] %v3699
        %3705 = vst [vmem:[#allocation3 + $0x80] sm:$0x33] %v3701
        %v3706 = vsel %vm3648, 1, 0
        %v3707 = vperm.slane %v3706, 0
        %v3708 = vperm.slane %v3706, 1
        %vm3709 = vcmp.eq.s32.totalorder %v3707, 1
        %vm3710 = vcmp.eq.s32.totalorder %v3708, 1
        %vm3711 = vmpackc.low %vm3710, %vm3709
        %v3712 = vsel %vm3711, 65537, 0
        %3713 = vrot.lane.b32.xlu0 %v3712, 17
        %v3714 = vpop.permute.xlu0 %3713
        %v3715 = vrot.slane %v3714, 4
        %v3716 = vsel %vm851, %v3715, %v3714
        %v3717 = vunpack.c.l.b16 %v3716
        %v3718 = vunpack.c.h.b16 %v3716
        %v3719 = vunpack.c.l.b16 0
        %v3720 = vunpack.c.h.b16 0
        %vm3721 = vcmp.ne.s32.totalorder %v3717, %v3719
        %vm3722 = vcmp.ne.s32.totalorder %v3718, %v3720
        %vm3723 = vmpackc.low %vm3722, %vm3721
        %v3724 = vunpack.c.l.b16 %v3715
        %v3725 = vunpack.c.h.b16 %v3715
        %v3726 = vunpack.c.l.b16 0
        %v3727 = vunpack.c.h.b16 0
        %vm3728 = vcmp.ne.s32.totalorder %v3724, %v3726
        %vm3729 = vcmp.ne.s32.totalorder %v3725, %v3727
        %vm3730 = vmpackc.low %vm3729, %vm3728
        %v3731 = vsel %vm3723, %v3649, 0
        %v3732 = vsel %vm3730, %v3650, 0
        %v3733 = vsel %vm3723, %v3651, 0
        %v3734 = vsel %vm3730, %v3652, 0
        %3739 = vrot.lane.b32.xlu0 %v3731, 111
        %v3740 = vpop.permute.xlu0 %3739
        %3741 = vrot.lane.b32.xlu0 %v3732, 111
        %v3742 = vpop.permute.xlu0 %3741
        %3743 = vrot.lane.b32.xlu0 %v3733, 111
        %v3744 = vpop.permute.xlu0 %3743
        %3745 = vrot.lane.b32.xlu0 %v3734, 111
        %v3746 = vpop.permute.xlu0 %3745
        %v3747 = vrot.slane %v3740, 4
        %v3748 = vrot.slane %v3742, 4
        %v3749 = vrot.slane %v3744, 4
        %v3750 = vrot.slane %v3746, 4
        %v3751 = vsel %vm849, %v3747, %v3748
        %v3752 = vsel %vm813, %v3740, %v3751
        %v3753 = vsel %vm849, %v3749, %v3750
        %v3754 = vsel %vm813, %v3744, %v3753
        %3757 = vst [vmem:[#allocation4 + $0x60] sm:$0xff] %v3752
        %3758 = vst [vmem:[#allocation4 + $0x80] sm:$0x33] %v3754
        %v3759 = vld [vmem:[#allocation2 + $0x4] sm:$0xcc]
        %v3760 = vld [vmem:[#allocation2 + $0xc] sm:$0xc]
        %v3761 = vld [vmem:[#allocation2 + $0x14] sm:$0xff]
        %v3762 = vld [vmem:[#allocation2 + $0x1c] sm:$0xf]
        %v3763 = vsel %vm3670, %v3759, 0
        %v3764 = vsel %vm3677, %v3760, 0
        %v3765 = vsel %vm3670, %v3761, 0
        %v3766 = vsel %vm3677, %v3762, 0
        %v3771 = vrot.slane %v3763, 6
        %v3772 = vrot.slane %v3771, 4
        %v3773 = vrot.slane %v3765, 6
        %v3774 = vsel %vm926, %v3772, %v3773
        %v3775 = vrot.slane %v3764, 6
        %v3776 = vrot.slane %v3775, 4
        %v3777 = vrot.slane %v3766, 6
        %v3778 = vsel %vm926, %v3776, %v3777
        %v3779 = vrot.slane %v3773, 4
        %v3780 = vrot.slane %v3777, 4
        %3781 = vrot.lane.b32.xlu0 %v3774, 111
        %v3782 = vpop.permute.xlu0 %3781
        %3783 = vrot.lane.b32.xlu0 %v3778, 111
        %v3784 = vpop.permute.xlu0 %3783
        %3785 = vrot.lane.b32.xlu0 %v3779, 111
        %v3786 = vpop.permute.xlu0 %3785
        %3787 = vrot.lane.b32.xlu0 %v3780, 111
        %v3788 = vpop.permute.xlu0 %3787
        %v3789 = vrot.slane %v3782, 4
        %v3790 = vrot.slane %v3784, 4
        %v3791 = vrot.slane %v3786, 4
        %v3792 = vrot.slane %v3788, 4
        %v3793 = vsel %vm849, %v3789, %v3790
        %v3794 = vsel %vm813, %v3782, %v3793
        %v3795 = vsel %vm849, %v3791, %v3792
        %v3796 = vsel %vm813, %v3786, %v3795
        %3799 = vst [vmem:[#allocation3 + $0x68] sm:$0xff] %v3794
        %3800 = vst [vmem:[#allocation3 + $0x88] sm:$0x33] %v3796
        %v3801 = vsel %vm3723, %v3759, 0
        %v3802 = vsel %vm3730, %v3760, 0
        %v3803 = vsel %vm3723, %v3761, 0
        %v3804 = vsel %vm3730, %v3762, 0
        %v3809 = vrot.slane %v3801, 6
        %v3810 = vrot.slane %v3809, 4
        %v3811 = vrot.slane %v3803, 6
        %v3812 = vsel %vm926, %v3810, %v3811
        %v3813 = vrot.slane %v3802, 6
        %v3814 = vrot.slane %v3813, 4
        %v3815 = vrot.slane %v3804, 6
        %v3816 = vsel %vm926, %v3814, %v3815
        %v3817 = vrot.slane %v3811, 4
        %v3818 = vrot.slane %v3815, 4
        %3819 = vrot.lane.b32.xlu0 %v3812, 111
        %v3820 = vpop.permute.xlu0 %3819
        %3821 = vrot.lane.b32.xlu0 %v3816, 111
        %v3822 = vpop.permute.xlu0 %3821
        %3823 = vrot.lane.b32.xlu0 %v3817, 111
        %v3824 = vpop.permute.xlu0 %3823
        %3825 = vrot.lane.b32.xlu0 %v3818, 111
        %v3826 = vpop.permute.xlu0 %3825
        %v3827 = vrot.slane %v3820, 4
        %v3828 = vrot.slane %v3822, 4
        %v3829 = vrot.slane %v3824, 4
        %v3830 = vrot.slane %v3826, 4
        %v3831 = vsel %vm849, %v3827, %v3828
        %v3832 = vsel %vm813, %v3820, %v3831
        %v3833 = vsel %vm849, %v3829, %v3830
        %v3834 = vsel %vm813, %v3824, %v3833
        %3837 = vst [vmem:[#allocation4 + $0x68] sm:$0xff] %v3832
        %3838 = vst [vmem:[#allocation4 + $0x88] sm:$0x33] %v3834
        %v3839 = vld [vmem:[#allocation2 + $0x14] sm:$0xff]
        %v3840 = vld [vmem:[#allocation2 + $0x1c] sm:$0xf]
        %v3841 = vld [vmem:[#allocation2 + $0x24] sm:$0x33]
        %v3842 = vld [vmem:[#allocation2 + $0x2c] sm:$0x3]
        %v3843 = vsel %vm3670, %v3839, 0
        %v3844 = vsel %vm3677, %v3840, 0
        %v3845 = vsel %vm3670, %v3841, 0
        %v3846 = vsel %vm3677, %v3842, 0
        %3851 = vrot.lane.b32.xlu0 %v3843, 111
        %v3852 = vpop.permute.xlu0 %3851
        %3853 = vrot.lane.b32.xlu0 %v3844, 111
        %v3854 = vpop.permute.xlu0 %3853
        %3855 = vrot.lane.b32.xlu0 %v3845, 111
        %v3856 = vpop.permute.xlu0 %3855
        %3857 = vrot.lane.b32.xlu0 %v3846, 111
        %v3858 = vpop.permute.xlu0 %3857
        %v3859 = vrot.slane %v3852, 4
        %v3860 = vrot.slane %v3854, 4
        %v3861 = vrot.slane %v3856, 4
        %v3862 = vrot.slane %v3858, 4
        %v3863 = vsel %vm849, %v3859, %v3860
        %v3864 = vsel %vm813, %v3852, %v3863
        %v3865 = vsel %vm849, %v3861, %v3862
        %v3866 = vsel %vm813, %v3856, %v3865
        %3869 = vst [vmem:[#allocation3 + $0x70] sm:$0xff] %v3864
        %3870 = vst [vmem:[#allocation3 + $0x90] sm:$0x33] %v3866
        %v3871 = vsel %vm3723, %v3839, 0
        %v3872 = vsel %vm3730, %v3840, 0
        %v3873 = vsel %vm3723, %v3841, 0
        %v3874 = vsel %vm3730, %v3842, 0
        %3879 = vrot.lane.b32.xlu0 %v3871, 111
        %v3880 = vpop.permute.xlu0 %3879
        %3881 = vrot.lane.b32.xlu0 %v3872, 111
        %v3882 = vpop.permute.xlu0 %3881
        %3883 = vrot.lane.b32.xlu0 %v3873, 111
        %v3884 = vpop.permute.xlu0 %3883
        %3885 = vrot.lane.b32.xlu0 %v3874, 111
        %v3886 = vpop.permute.xlu0 %3885
        %v3887 = vrot.slane %v3880, 4
        %v3888 = vrot.slane %v3882, 4
        %v3889 = vrot.slane %v3884, 4
        %v3890 = vrot.slane %v3886, 4
        %v3891 = vsel %vm849, %v3887, %v3888
        %v3892 = vsel %vm813, %v3880, %v3891
        %v3893 = vsel %vm849, %v3889, %v3890
        %v3894 = vsel %vm813, %v3884, %v3893
        %3897 = vst [vmem:[#allocation4 + $0x70] sm:$0xff] %v3892
        %3898 = vst [vmem:[#allocation4 + $0x90] sm:$0x33] %v3894
        %v3899 = vld [vmem:[#allocation2 + $0x14] sm:$0xcc]
        %v3900 = vld [vmem:[#allocation2 + $0x1c] sm:$0xc]
        %v3901 = vld [vmem:[#allocation2 + $0x24] sm:$0xff]
        %v3902 = vld [vmem:[#allocation2 + $0x2c] sm:$0xf]
        %v3903 = vsel %vm3670, %v3899, 0
        %v3904 = vsel %vm3677, %v3900, 0
        %v3905 = vsel %vm3670, %v3901, 0
        %v3906 = vsel %vm3677, %v3902, 0
        %v3911 = vrot.slane %v3903, 6
        %v3912 = vrot.slane %v3911, 4
        %v3913 = vrot.slane %v3905, 6
        %v3914 = vsel %vm926, %v3912, %v3913
        %v3915 = vrot.slane %v3904, 6
        %v3916 = vrot.slane %v3915, 4
        %v3917 = vrot.slane %v3906, 6
        %v3918 = vsel %vm926, %v3916, %v3917
        %v3919 = vrot.slane %v3913, 4
        %v3920 = vrot.slane %v3917, 4
        %3921 = vrot.lane.b32.xlu0 %v3914, 111
        %v3922 = vpop.permute.xlu0 %3921
        %3923 = vrot.lane.b32.xlu0 %v3918, 111
        %v3924 = vpop.permute.xlu0 %3923
        %3925 = vrot.lane.b32.xlu0 %v3919, 111
        %v3926 = vpop.permute.xlu0 %3925
        %3927 = vrot.lane.b32.xlu0 %v3920, 111
        %v3928 = vpop.permute.xlu0 %3927
        %v3929 = vrot.slane %v3922, 4
        %v3930 = vrot.slane %v3924, 4
        %v3931 = vrot.slane %v3926, 4
        %v3932 = vrot.slane %v3928, 4
        %v3933 = vsel %vm849, %v3929, %v3930
        %v3934 = vsel %vm813, %v3922, %v3933
        %v3935 = vsel %vm849, %v3931, %v3932
        %v3936 = vsel %vm813, %v3926, %v3935
        %3939 = vst [vmem:[#allocation3 + $0x78] sm:$0xff] %v3934
        %3940 = vst [vmem:[#allocation3 + $0x98] sm:$0x33] %v3936
        %v3941 = vsel %vm3723, %v3899, 0
        %v3942 = vsel %vm3730, %v3900, 0
        %v3943 = vsel %vm3723, %v3901, 0
        %v3944 = vsel %vm3730, %v3902, 0
        %v3949 = vrot.slane %v3941, 6
        %v3950 = vrot.slane %v3949, 4
        %v3951 = vrot.slane %v3943, 6
        %v3952 = vsel %vm926, %v3950, %v3951
        %v3953 = vrot.slane %v3942, 6
        %v3954 = vrot.slane %v3953, 4
        %v3955 = vrot.slane %v3944, 6
        %v3956 = vsel %vm926, %v3954, %v3955
        %v3957 = vrot.slane %v3951, 4
        %v3958 = vrot.slane %v3955, 4
        %3959 = vrot.lane.b32.xlu0 %v3952, 111
        %v3960 = vpop.permute.xlu0 %3959
        %3961 = vrot.lane.b32.xlu0 %v3956, 111
        %v3962 = vpop.permute.xlu0 %3961
        %3963 = vrot.lane.b32.xlu0 %v3957, 111
        %v3964 = vpop.permute.xlu0 %3963
        %3965 = vrot.lane.b32.xlu0 %v3958, 111
        %v3966 = vpop.permute.xlu0 %3965
        %v3967 = vrot.slane %v3960, 4
        %v3968 = vrot.slane %v3962, 4
        %v3969 = vrot.slane %v3964, 4
        %v3970 = vrot.slane %v3966, 4
        %v3971 = vsel %vm849, %v3967, %v3968
        %v3972 = vsel %vm813, %v3960, %v3971
        %v3973 = vsel %vm849, %v3969, %v3970
        %v3974 = vsel %vm813, %v3964, %v3973
        %3977 = vst [vmem:[#allocation4 + $0x78] sm:$0xff] %v3972
        %3978 = vst [vmem:[#allocation4 + $0x98] sm:$0x33] %v3974
        %s3979 = scalar_lea.vmem %s3, 16
        %v3980 = vld [vmem:[%s3979] sm:$0xf]
        %v3981 = vld [vmem:[%s3979 + $0x4] sm:$0xf]
        %v3982 = vld [vmem:[#allocation3] sm:$0xff]
        %v3983 = vld [vmem:[#allocation3 + $0x8] sm:$0xff]
        %v3984 = vld [vmem:[#allocation3 + $0x10] sm:$0xff]
        %v3985 = vld [vmem:[#allocation3 + $0x18] sm:$0xff]
        %v3986 = vld [vmem:[#allocation3 + $0x20] sm:$0xff]
        %v3987 = vld [vmem:[#allocation3 + $0x28] sm:$0xff]
        %v3988 = vld [vmem:[#allocation3 + $0x30] sm:$0xff]
        %v3989 = vld [vmem:[#allocation3 + $0x38] sm:$0xff]
        %v3990 = vld [vmem:[#allocation3 + $0x40] sm:$0xff]
        %v3991 = vld [vmem:[#allocation3 + $0x48] sm:$0xff]
        %v3992 = vld [vmem:[#allocation3 + $0x50] sm:$0xff]
        %v3993 = vld [vmem:[#allocation3 + $0x58] sm:$0xff]
        %v3994 = vld [vmem:[#allocation3 + $0x60] sm:$0xff]
        %v3995 = vld [vmem:[#allocation3 + $0x68] sm:$0xff]
        %v3996 = vld [vmem:[#allocation3 + $0x70] sm:$0xff]
        %v3997 = vld [vmem:[#allocation3 + $0x78] sm:$0xff]
        %v3998 = vld [vmem:[#allocation3 + $0x80] sm:$0x33]
        %v3999 = vld [vmem:[#allocation3 + $0x88] sm:$0x33]
        %v4000 = vld [vmem:[#allocation3 + $0x90] sm:$0x33]
        %v4001 = vld [vmem:[#allocation3 + $0x98] sm:$0x33]
        %v4022 = vunpack.c.l.b16 %v3982
        %v4023 = vunpack.c.h.b16 %v3982
        %v4024 = vunpack.c.l.b16 %v3983
        %v4025 = vunpack.c.h.b16 %v3983
        %v4026 = vunpack.c.l.b16 %v3984
        %v4027 = vunpack.c.h.b16 %v3984
        %v4028 = vunpack.c.l.b16 %v3985
        %v4029 = vunpack.c.h.b16 %v3985
        %v4030 = vunpack.c.l.b16 %v3986
        %v4031 = vunpack.c.h.b16 %v3986
        %v4032 = vunpack.c.l.b16 %v3987
        %v4033 = vunpack.c.h.b16 %v3987
        %v4034 = vunpack.c.l.b16 %v3988
        %v4035 = vunpack.c.h.b16 %v3988
        %v4036 = vunpack.c.l.b16 %v3989
        %v4037 = vunpack.c.h.b16 %v3989
        %v4038 = vunpack.c.l.b16 %v3990
        %v4039 = vunpack.c.h.b16 %v3990
        %v4040 = vunpack.c.l.b16 %v3991
        %v4041 = vunpack.c.h.b16 %v3991
        %v4042 = vunpack.c.l.b16 %v3992
        %v4043 = vunpack.c.h.b16 %v3992
        %v4044 = vunpack.c.l.b16 %v3993
        %v4045 = vunpack.c.h.b16 %v3993
        %v4046 = vunpack.c.l.b16 %v3994
        %v4047 = vunpack.c.h.b16 %v3994
        %v4048 = vunpack.c.l.b16 %v3995
        %v4049 = vunpack.c.h.b16 %v3995
        %v4050 = vunpack.c.l.b16 %v3996
        %v4051 = vunpack.c.h.b16 %v3996
        %v4052 = vunpack.c.l.b16 %v3997
        %v4053 = vunpack.c.h.b16 %v3997
        %v4054 = vunpack.c.l.b16 %v3998
        %v4055 = vunpack.c.h.b16 %v3998
        %v4056 = vunpack.c.l.b16 %v3999
        %v4057 = vunpack.c.h.b16 %v3999
        %v4058 = vunpack.c.l.b16 %v4000
        %v4059 = vunpack.c.h.b16 %v4000
        %v4060 = vunpack.c.l.b16 %v4001
        %v4061 = vunpack.c.h.b16 %v4001
        %v4062 = vpack.c.b16 %v4030, %v4022
        %v4063 = vpack.c.b16 %v4031, %v4023
        %v4064 = vpack.c.b16 %v4032, %v4024
        %v4065 = vpack.c.b16 %v4033, %v4025
        %v4066 = vpack.c.b16 %v4034, %v4026
        %v4067 = vpack.c.b16 %v4035, %v4027
        %v4068 = vpack.c.b16 %v4036, %v4028
        %v4069 = vpack.c.b16 %v4037, %v4029
        %v4070 = vpack.c.b16 %v4046, %v4038
        %v4071 = vpack.c.b16 %v4047, %v4039
        %v4072 = vpack.c.b16 %v4048, %v4040
        %v4073 = vpack.c.b16 %v4049, %v4041
        %v4074 = vpack.c.b16 %v4050, %v4042
        %v4075 = vpack.c.b16 %v4051, %v4043
        %v4076 = vpack.c.b16 %v4052, %v4044
        %v4077 = vpack.c.b16 %v4053, %v4045
        %v4078 = vpack.c.b16 %v4054, %v4054
        %v4079 = vpack.c.b16 %v4055, %v4055
        %v4080 = vpack.c.b16 %v4056, %v4056
        %v4081 = vpack.c.b16 %v4057, %v4057
        %v4082 = vpack.c.b16 %v4058, %v4058
        %v4083 = vpack.c.b16 %v4059, %v4059
        %v4084 = vpack.c.b16 %v4060, %v4060
        %v4085 = vpack.c.b16 %v4061, %v4061
        %v4103 = vsel %vm2376, %v3980, 0
        %v4106 = vsel %vm2380, %v4078, 0
        %v4109 = vsel %vm2380, %v4079, 0
        %v4112 = vsel %vm2380, %v4080, 0
        %v4115 = vsel %vm2380, %v4081, 0
        %v4118 = vsel %vm2380, %v4082, 0
        %v4121 = vsel %vm2380, %v4083, 0
        %v4124 = vsel %vm2380, %v4084, 0
        %v4127 = vsel %vm2380, %v4085, 0
        %4129 = vmatpush.bf16.msra.mxu0 0
        %4130 = vmatpush.bf16.msra.mxu0 0
        %4131 = vmatpush.bf16.msra.mxu0 0
        %4132 = vmatpush.bf16.msra.mxu0 0
        %4133 = vmatpush.bf16.msra.mxu0 0
        %4134 = vmatpush.bf16.msra.mxu0 %v4106
        %4135 = vmatpush.bf16.msra.mxu0 %v4070
        %4136 = vmatpush.bf16.msra.mxu0 %v4062
        %4137 = vmatmul.bf16.gmra.mxu0 %v4103
        %v4138 = vpop.f32.mrf.mxu0
        %v4139 = vadd.f32 0.0, %v4138
        %v4140 = vpop.f32.mrf.mxu0
        %4141 = vdwg.mxu0
        %4142 = vmatpush.bf16.msra.mxu0 0
        %4143 = vmatpush.bf16.msra.mxu0 0
        %4144 = vmatpush.bf16.msra.mxu0 0
        %4145 = vmatpush.bf16.msra.mxu0 0
        %4146 = vmatpush.bf16.msra.mxu0 0
        %4147 = vmatpush.bf16.msra.mxu0 %v4109
        %4148 = vmatpush.bf16.msra.mxu0 %v4071
        %4149 = vmatpush.bf16.msra.mxu0 %v4063
        %4150 = vmatmul.bf16.gmra.mxu0 %v4103
        %v4151 = vpop.f32.mrf.mxu0
        %v4152 = vadd.f32 0.0, %v4151
        %v4153 = vpop.f32.mrf.mxu0
        %4154 = vdwg.mxu0
        %4155 = vmatpush.bf16.msra.mxu0 0
        %4156 = vmatpush.bf16.msra.mxu0 0
        %4157 = vmatpush.bf16.msra.mxu0 0
        %4158 = vmatpush.bf16.msra.mxu0 0
        %4159 = vmatpush.bf16.msra.mxu0 0
        %4160 = vmatpush.bf16.msra.mxu0 %v4112
        %4161 = vmatpush.bf16.msra.mxu0 %v4072
        %4162 = vmatpush.bf16.msra.mxu0 %v4064
        %4163 = vmatmul.bf16.gmra.mxu0 %v4103
        %v4164 = vpop.f32.mrf.mxu0
        %v4165 = vadd.f32 0.0, %v4164
        %v4166 = vpop.f32.mrf.mxu0
        %4167 = vdwg.mxu0
        %4168 = vmatpush.bf16.msra.mxu0 0
        %4169 = vmatpush.bf16.msra.mxu0 0
        %4170 = vmatpush.bf16.msra.mxu0 0
        %4171 = vmatpush.bf16.msra.mxu0 0
        %4172 = vmatpush.bf16.msra.mxu0 0
        %4173 = vmatpush.bf16.msra.mxu0 %v4115
        %4174 = vmatpush.bf16.msra.mxu0 %v4073
        %4175 = vmatpush.bf16.msra.mxu0 %v4065
        %4176 = vmatmul.bf16.gmra.mxu0 %v4103
        %v4177 = vpop.f32.mrf.mxu0
        %v4178 = vadd.f32 0.0, %v4177
        %v4179 = vpop.f32.mrf.mxu0
        %4180 = vdwg.mxu0
        %4181 = vmatpush.bf16.msra.mxu0 0
        %4182 = vmatpush.bf16.msra.mxu0 0
        %4183 = vmatpush.bf16.msra.mxu0 0
        %4184 = vmatpush.bf16.msra.mxu0 0
        %4185 = vmatpush.bf16.msra.mxu0 0
        %4186 = vmatpush.bf16.msra.mxu0 %v4118
        %4187 = vmatpush.bf16.msra.mxu0 %v4074
        %4188 = vmatpush.bf16.msra.mxu0 %v4066
        %4189 = vmatmul.bf16.gmra.mxu0 %v4103
        %v4190 = vpop.f32.mrf.mxu0
        %v4191 = vadd.f32 0.0, %v4190
        %v4192 = vpop.f32.mrf.mxu0
        %4193 = vdwg.mxu0
        %4194 = vmatpush.bf16.msra.mxu0 0
        %4195 = vmatpush.bf16.msra.mxu0 0
        %4196 = vmatpush.bf16.msra.mxu0 0
        %4197 = vmatpush.bf16.msra.mxu0 0
        %4198 = vmatpush.bf16.msra.mxu0 0
        %4199 = vmatpush.bf16.msra.mxu0 %v4121
        %4200 = vmatpush.bf16.msra.mxu0 %v4075
        %4201 = vmatpush.bf16.msra.mxu0 %v4067
        %4202 = vmatmul.bf16.gmra.mxu0 %v4103
        %v4203 = vpop.f32.mrf.mxu0
        %v4204 = vadd.f32 0.0, %v4203
        %v4205 = vpop.f32.mrf.mxu0
        %4206 = vdwg.mxu0
        %4207 = vmatpush.bf16.msra.mxu0 0
        %4208 = vmatpush.bf16.msra.mxu0 0
        %4209 = vmatpush.bf16.msra.mxu0 0
        %4210 = vmatpush.bf16.msra.mxu0 0
        %4211 = vmatpush.bf16.msra.mxu0 0
        %4212 = vmatpush.bf16.msra.mxu0 %v4124
        %4213 = vmatpush.bf16.msra.mxu0 %v4076
        %4214 = vmatpush.bf16.msra.mxu0 %v4068
        %4215 = vmatmul.bf16.gmra.mxu0 %v4103
        %v4216 = vpop.f32.mrf.mxu0
        %v4217 = vadd.f32 0.0, %v4216
        %v4218 = vpop.f32.mrf.mxu0
        %4219 = vdwg.mxu0
        %4220 = vmatpush.bf16.msra.mxu0 0
        %4221 = vmatpush.bf16.msra.mxu0 0
        %4222 = vmatpush.bf16.msra.mxu0 0
        %4223 = vmatpush.bf16.msra.mxu0 0
        %4224 = vmatpush.bf16.msra.mxu0 0
        %4225 = vmatpush.bf16.msra.mxu0 %v4127
        %4226 = vmatpush.bf16.msra.mxu0 %v4077
        %4227 = vmatpush.bf16.msra.mxu0 %v4069
        %4228 = vmatmul.bf16.gmra.mxu0 %v4103
        %v4229 = vpop.f32.mrf.mxu0
        %v4230 = vadd.f32 0.0, %v4229
        %v4231 = vpop.f32.mrf.mxu0
        %4232 = vdwg.mxu0
        %v4233 = vld [vmem:[#allocation4] sm:$0xff]
        %v4234 = vld [vmem:[#allocation4 + $0x8] sm:$0xff]
        %v4235 = vld [vmem:[#allocation4 + $0x10] sm:$0xff]
        %v4236 = vld [vmem:[#allocation4 + $0x18] sm:$0xff]
        %v4237 = vld [vmem:[#allocation4 + $0x20] sm:$0xff]
        %v4238 = vld [vmem:[#allocation4 + $0x28] sm:$0xff]
        %v4239 = vld [vmem:[#allocation4 + $0x30] sm:$0xff]
        %v4240 = vld [vmem:[#allocation4 + $0x38] sm:$0xff]
        %v4241 = vld [vmem:[#allocation4 + $0x40] sm:$0xff]
        %v4242 = vld [vmem:[#allocation4 + $0x48] sm:$0xff]
        %v4243 = vld [vmem:[#allocation4 + $0x50] sm:$0xff]
        %v4244 = vld [vmem:[#allocation4 + $0x58] sm:$0xff]
        %v4245 = vld [vmem:[#allocation4 + $0x60] sm:$0xff]
        %v4246 = vld [vmem:[#allocation4 + $0x68] sm:$0xff]
        %v4247 = vld [vmem:[#allocation4 + $0x70] sm:$0xff]
        %v4248 = vld [vmem:[#allocation4 + $0x78] sm:$0xff]
        %v4249 = vld [vmem:[#allocation4 + $0x80] sm:$0x33]
        %v4250 = vld [vmem:[#allocation4 + $0x88] sm:$0x33]
        %v4251 = vld [vmem:[#allocation4 + $0x90] sm:$0x33]
        %v4252 = vld [vmem:[#allocation4 + $0x98] sm:$0x33]
        %v4273 = vunpack.c.l.b16 %v4233
        %v4274 = vunpack.c.h.b16 %v4233
        %v4275 = vunpack.c.l.b16 %v4234
        %v4276 = vunpack.c.h.b16 %v4234
        %v4277 = vunpack.c.l.b16 %v4235
        %v4278 = vunpack.c.h.b16 %v4235
        %v4279 = vunpack.c.l.b16 %v4236
        %v4280 = vunpack.c.h.b16 %v4236
        %v4281 = vunpack.c.l.b16 %v4237
        %v4282 = vunpack.c.h.b16 %v4237
        %v4283 = vunpack.c.l.b16 %v4238
        %v4284 = vunpack.c.h.b16 %v4238
        %v4285 = vunpack.c.l.b16 %v4239
        %v4286 = vunpack.c.h.b16 %v4239
        %v4287 = vunpack.c.l.b16 %v4240
        %v4288 = vunpack.c.h.b16 %v4240
        %v4289 = vunpack.c.l.b16 %v4241
        %v4290 = vunpack.c.h.b16 %v4241
        %v4291 = vunpack.c.l.b16 %v4242
        %v4292 = vunpack.c.h.b16 %v4242
        %v4293 = vunpack.c.l.b16 %v4243
        %v4294 = vunpack.c.h.b16 %v4243
        %v4295 = vunpack.c.l.b16 %v4244
        %v4296 = vunpack.c.h.b16 %v4244
        %v4297 = vunpack.c.l.b16 %v4245
        %v4298 = vunpack.c.h.b16 %v4245
        %v4299 = vunpack.c.l.b16 %v4246
        %v4300 = vunpack.c.h.b16 %v4246
        %v4301 = vunpack.c.l.b16 %v4247
        %v4302 = vunpack.c.h.b16 %v4247
        %v4303 = vunpack.c.l.b16 %v4248
        %v4304 = vunpack.c.h.b16 %v4248
        %v4305 = vunpack.c.l.b16 %v4249
        %v4306 = vunpack.c.h.b16 %v4249
        %v4307 = vunpack.c.l.b16 %v4250
        %v4308 = vunpack.c.h.b16 %v4250
        %v4309 = vunpack.c.l.b16 %v4251
        %v4310 = vunpack.c.h.b16 %v4251
        %v4311 = vunpack.c.l.b16 %v4252
        %v4312 = vunpack.c.h.b16 %v4252
        %v4313 = vpack.c.b16 %v4281, %v4273
        %v4314 = vpack.c.b16 %v4282, %v4274
        %v4315 = vpack.c.b16 %v4283, %v4275
        %v4316 = vpack.c.b16 %v4284, %v4276
        %v4317 = vpack.c.b16 %v4285, %v4277
        %v4318 = vpack.c.b16 %v4286, %v4278
        %v4319 = vpack.c.b16 %v4287, %v4279
        %v4320 = vpack.c.b16 %v4288, %v4280
        %v4321 = vpack.c.b16 %v4297, %v4289
        %v4322 = vpack.c.b16 %v4298, %v4290
        %v4323 = vpack.c.b16 %v4299, %v4291
        %v4324 = vpack.c.b16 %v4300, %v4292
        %v4325 = vpack.c.b16 %v4301, %v4293
        %v4326 = vpack.c.b16 %v4302, %v4294
        %v4327 = vpack.c.b16 %v4303, %v4295
        %v4328 = vpack.c.b16 %v4304, %v4296
        %v4329 = vpack.c.b16 %v4305, %v4305
        %v4330 = vpack.c.b16 %v4306, %v4306
        %v4331 = vpack.c.b16 %v4307, %v4307
        %v4332 = vpack.c.b16 %v4308, %v4308
        %v4333 = vpack.c.b16 %v4309, %v4309
        %v4334 = vpack.c.b16 %v4310, %v4310
        %v4335 = vpack.c.b16 %v4311, %v4311
        %v4336 = vpack.c.b16 %v4312, %v4312
        %v4354 = vsel %vm2376, %v3981, 0
        %v4357 = vsel %vm2380, %v4329, 0
        %v4360 = vsel %vm2380, %v4330, 0
        %v4363 = vsel %vm2380, %v4331, 0
        %v4366 = vsel %vm2380, %v4332, 0
        %v4369 = vsel %vm2380, %v4333, 0
        %v4372 = vsel %vm2380, %v4334, 0
        %v4375 = vsel %vm2380, %v4335, 0
        %v4378 = vsel %vm2380, %v4336, 0
        %4380 = vmatpush.bf16.msra.mxu0 0
        %4381 = vmatpush.bf16.msra.mxu0 0
        %4382 = vmatpush.bf16.msra.mxu0 0
        %4383 = vmatpush.bf16.msra.mxu0 0
        %4384 = vmatpush.bf16.msra.mxu0 0
        %4385 = vmatpush.bf16.msra.mxu0 %v4357
        %4386 = vmatpush.bf16.msra.mxu0 %v4321
        %4387 = vmatpush.bf16.msra.mxu0 %v4313
        %4388 = vmatmul.bf16.gmra.mxu0 %v4354
        %v4389 = vpop.f32.mrf.mxu0
        %v4390 = vadd.f32 0.0, %v4389
        %v4391 = vpop.f32.mrf.mxu0
        %4392 = vdwg.mxu0
        %4393 = vmatpush.bf16.msra.mxu0 0
        %4394 = vmatpush.bf16.msra.mxu0 0
        %4395 = vmatpush.bf16.msra.mxu0 0
        %4396 = vmatpush.bf16.msra.mxu0 0
        %4397 = vmatpush.bf16.msra.mxu0 0
        %4398 = vmatpush.bf16.msra.mxu0 %v4360
        %4399 = vmatpush.bf16.msra.mxu0 %v4322
        %4400 = vmatpush.bf16.msra.mxu0 %v4314
        %4401 = vmatmul.bf16.gmra.mxu0 %v4354
        %v4402 = vpop.f32.mrf.mxu0
        %v4403 = vadd.f32 0.0, %v4402
        %v4404 = vpop.f32.mrf.mxu0
        %4405 = vdwg.mxu0
        %4406 = vmatpush.bf16.msra.mxu0 0
        %4407 = vmatpush.bf16.msra.mxu0 0
        %4408 = vmatpush.bf16.msra.mxu0 0
        %4409 = vmatpush.bf16.msra.mxu0 0
        %4410 = vmatpush.bf16.msra.mxu0 0
        %4411 = vmatpush.bf16.msra.mxu0 %v4363
        %4412 = vmatpush.bf16.msra.mxu0 %v4323
        %4413 = vmatpush.bf16.msra.mxu0 %v4315
        %4414 = vmatmul.bf16.gmra.mxu0 %v4354
        %v4415 = vpop.f32.mrf.mxu0
        %v4416 = vadd.f32 0.0, %v4415
        %v4417 = vpop.f32.mrf.mxu0
        %4418 = vdwg.mxu0
        %4419 = vmatpush.bf16.msra.mxu0 0
        %4420 = vmatpush.bf16.msra.mxu0 0
        %4421 = vmatpush.bf16.msra.mxu0 0
        %4422 = vmatpush.bf16.msra.mxu0 0
        %4423 = vmatpush.bf16.msra.mxu0 0
        %4424 = vmatpush.bf16.msra.mxu0 %v4366
        %4425 = vmatpush.bf16.msra.mxu0 %v4324
        %4426 = vmatpush.bf16.msra.mxu0 %v4316
        %4427 = vmatmul.bf16.gmra.mxu0 %v4354
        %v4428 = vpop.f32.mrf.mxu0
        %v4429 = vadd.f32 0.0, %v4428
        %v4430 = vpop.f32.mrf.mxu0
        %4431 = vdwg.mxu0
        %4432 = vmatpush.bf16.msra.mxu0 0
        %4433 = vmatpush.bf16.msra.mxu0 0
        %4434 = vmatpush.bf16.msra.mxu0 0
        %4435 = vmatpush.bf16.msra.mxu0 0
        %4436 = vmatpush.bf16.msra.mxu0 0
        %4437 = vmatpush.bf16.msra.mxu0 %v4369
        %4438 = vmatpush.bf16.msra.mxu0 %v4325
        %4439 = vmatpush.bf16.msra.mxu0 %v4317
        %4440 = vmatmul.bf16.gmra.mxu0 %v4354
        %v4441 = vpop.f32.mrf.mxu0
        %v4442 = vadd.f32 0.0, %v4441
        %v4443 = vpop.f32.mrf.mxu0
        %4444 = vdwg.mxu0
        %4445 = vmatpush.bf16.msra.mxu0 0
        %4446 = vmatpush.bf16.msra.mxu0 0
        %4447 = vmatpush.bf16.msra.mxu0 0
        %4448 = vmatpush.bf16.msra.mxu0 0
        %4449 = vmatpush.bf16.msra.mxu0 0
        %4450 = vmatpush.bf16.msra.mxu0 %v4372
        %4451 = vmatpush.bf16.msra.mxu0 %v4326
        %4452 = vmatpush.bf16.msra.mxu0 %v4318
        %4453 = vmatmul.bf16.gmra.mxu0 %v4354
        %v4454 = vpop.f32.mrf.mxu0
        %v4455 = vadd.f32 0.0, %v4454
        %v4456 = vpop.f32.mrf.mxu0
        %4457 = vdwg.mxu0
        %4458 = vmatpush.bf16.msra.mxu0 0
        %4459 = vmatpush.bf16.msra.mxu0 0
        %4460 = vmatpush.bf16.msra.mxu0 0
        %4461 = vmatpush.bf16.msra.mxu0 0
        %4462 = vmatpush.bf16.msra.mxu0 0
        %4463 = vmatpush.bf16.msra.mxu0 %v4375
        %4464 = vmatpush.bf16.msra.mxu0 %v4327
        %4465 = vmatpush.bf16.msra.mxu0 %v4319
        %4466 = vmatmul.bf16.gmra.mxu0 %v4354
        %v4467 = vpop.f32.mrf.mxu0
        %v4468 = vadd.f32 0.0, %v4467
        %v4469 = vpop.f32.mrf.mxu0
        %4470 = vdwg.mxu0
        %4471 = vmatpush.bf16.msra.mxu0 0
        %4472 = vmatpush.bf16.msra.mxu0 0
        %4473 = vmatpush.bf16.msra.mxu0 0
        %4474 = vmatpush.bf16.msra.mxu0 0
        %4475 = vmatpush.bf16.msra.mxu0 0
        %4476 = vmatpush.bf16.msra.mxu0 %v4378
        %4477 = vmatpush.bf16.msra.mxu0 %v4328
        %4478 = vmatpush.bf16.msra.mxu0 %v4320
        %4479 = vmatmul.bf16.gmra.mxu0 %v4354
        %v4480 = vpop.f32.mrf.mxu0
        %v4481 = vadd.f32 0.0, %v4480
        %v4482 = vpop.f32.mrf.mxu0
        %4483 = vdwg.mxu0
        %v4484 = vadd.f32 %v2654, %v4139
        %v4485 = vadd.f32 %v2667, %v4152
        %v4486 = vadd.f32 %v2680, %v4165
        %v4487 = vadd.f32 %v2693, %v4178
        %v4488 = vadd.f32 %v2706, %v4191
        %v4489 = vadd.f32 %v2719, %v4204
        %v4490 = vadd.f32 %v2732, %v4217
        %v4491 = vadd.f32 %v2745, %v4230
        %v4492 = vadd.f32 %v2885, %v4390
        %v4493 = vadd.f32 %v2898, %v4403
        %v4494 = vadd.f32 %v2911, %v4416
        %v4495 = vadd.f32 %v2924, %v4429
        %v4496 = vadd.f32 %v2937, %v4442
        %v4497 = vadd.f32 %v2950, %v4455
        %v4498 = vadd.f32 %v2963, %v4468
        %v4499 = vadd.f32 %v2976, %v4481
        %vm4500 = vcmp.ge.f32.partialorder %v4484, 0.0
        %vm4501 = vcmp.ge.f32.partialorder %v4485, 0.0
        %vm4502 = vcmp.ge.f32.partialorder %v4486, 0.0
        %vm4503 = vcmp.ge.f32.partialorder %v4487, 0.0
        %vm4504 = vcmp.ge.f32.partialorder %v4488, 0.0
        %vm4505 = vcmp.ge.f32.partialorder %v4489, 0.0
        %vm4506 = vcmp.ge.f32.partialorder %v4490, 0.0
        %vm4507 = vcmp.ge.f32.partialorder %v4491, 0.0
        %v4508 = vmul.f32 %v4484, 0.01
        %v4509 = vmul.f32 %v4485, 0.01
        %v4510 = vmul.f32 %v4486, 0.01
        %v4511 = vmul.f32 %v4487, 0.01
        %v4512 = vmul.f32 %v4488, 0.01
        %v4513 = vmul.f32 %v4489, 0.01
        %v4514 = vmul.f32 %v4490, 0.01
        %v4515 = vmul.f32 %v4491, 0.01
        %v4516 = vsel %vm4500, %v4484, %v4508
        %v4517 = vsel %vm4501, %v4485, %v4509
        %v4518 = vsel %vm4502, %v4486, %v4510
        %v4519 = vsel %vm4503, %v4487, %v4511
        %v4520 = vsel %vm4504, %v4488, %v4512
        %v4521 = vsel %vm4505, %v4489, %v4513
        %v4522 = vsel %vm4506, %v4490, %v4514
        %v4523 = vsel %vm4507, %v4491, %v4515
        %vm4524 = vcmp.ge.f32.partialorder %v4492, 0.0
        %vm4525 = vcmp.ge.f32.partialorder %v4493, 0.0
        %vm4526 = vcmp.ge.f32.partialorder %v4494, 0.0
        %vm4527 = vcmp.ge.f32.partialorder %v4495, 0.0
        %vm4528 = vcmp.ge.f32.partialorder %v4496, 0.0
        %vm4529 = vcmp.ge.f32.partialorder %v4497, 0.0
        %vm4530 = vcmp.ge.f32.partialorder %v4498, 0.0
        %vm4531 = vcmp.ge.f32.partialorder %v4499, 0.0
        %v4532 = vmul.f32 %v4492, 0.01
        %v4533 = vmul.f32 %v4493, 0.01
        %v4534 = vmul.f32 %v4494, 0.01
        %v4535 = vmul.f32 %v4495, 0.01
        %v4536 = vmul.f32 %v4496, 0.01
        %v4537 = vmul.f32 %v4497, 0.01
        %v4538 = vmul.f32 %v4498, 0.01
        %v4539 = vmul.f32 %v4499, 0.01
        %v4540 = vsel %vm4524, %v4492, %v4532
        %v4541 = vsel %vm4525, %v4493, %v4533
        %v4542 = vsel %vm4526, %v4494, %v4534
        %v4543 = vsel %vm4527, %v4495, %v4535
        %v4544 = vsel %vm4528, %v4496, %v4536
        %v4545 = vsel %vm4529, %v4497, %v4537
        %v4546 = vsel %vm4530, %v4498, %v4538
        %v4547 = vsel %vm4531, %v4499, %v4539
        %v4548 = vadd.f32 %v4516, %v4540
        %v4549 = vadd.f32 %v4517, %v4541
        %v4550 = vadd.f32 %v4518, %v4542
        %v4551 = vadd.f32 %v4519, %v4543
        %v4552 = vadd.f32 %v4520, %v4544
        %v4553 = vadd.f32 %v4521, %v4545
        %v4554 = vadd.f32 %v4522, %v4546
        %v4555 = vadd.f32 %v4523, %v4547
        %v4556 = vpack.c.bf16 %v4549, %v4548
        %v4557 = vpack.c.bf16 %v4551, %v4550
        %v4558 = vpack.c.bf16 %v4553, %v4552
        %v4559 = vpack.c.bf16 %v4555, %v4554
        %v4564 = vrot.slane %v4556, 3
        %v4565 = vrot.slane %v4557, 6
        %v4566 = vrot.slane %v4557, 1
        %v4567 = vrot.slane %v4558, 4
        %v4568 = vrot.slane %v4558, 7
        %v4569 = vrot.slane %v4559, 2
        %v4570 = vrot.slane %v4559, 5
        %vm4571 = vcmask 1040384
        %v4574 = vsel %vm4571, %v4556, %v4564
        %v4577 = vsel %vm585, %v4565, %v4566
        %v4578 = vsel %vm2380, %v4574, %v4577
        %vm4579 = vcmask 1044484
        %v4582 = vsel %vm4579, %v4567, %v4568
        %v4585 = vsel %vm538, %v4569, %v4570
        %vm4586 = vcmask 1045508
        %v4587 = vsel %vm4586, %v4582, %v4585
        %vm4588 = vcmask 1043456
        %v4589 = vsel %vm4588, %v4578, %v4587
        %v4591 = vsel %vm582, %v4556, %v4564
        %v4592 = vsel %vm588, %v4565, %v4566
        %vm4593 = vcmask 1042433
        %v4594 = vsel %vm4593, %v4591, %v4592
        %v4595 = vsel %vm535, %v4567, %v4568
        %vm4596 = vcmask 1046528
        %v4597 = vsel %vm4596, %v4570, %v4569
        %vm4598 = vcmask 1046533
        %v4599 = vsel %vm4598, %v4595, %v4597
        %vm4600 = vcmask 1044481
        %v4601 = vsel %vm4600, %v4594, %v4599
        %v4603 = vrot.slane %v4601, 1
        %v4604 = vsel %vm585, %v4556, %v4564
        %v4605 = vsel %vm4579, %v4565, %v4566
        %vm4606 = vcmask 1043458
        %v4607 = vsel %vm4606, %v4604, %v4605
        %v4608 = vsel %vm538, %v4567, %v4568
        %v4609 = vsel %vm4571, %v4569, %v4570
        %vm4610 = vcmask 1045504
        %v4611 = vsel %vm4610, %v4609, %v4608
        %vm4612 = vcmask 1045506
        %v4613 = vsel %vm4612, %v4607, %v4611
        %v4615 = vrot.slane %v4613, 2
        %v4616 = vsel %vm588, %v4556, %v4564
        %v4617 = vsel %vm535, %v4565, %v4566
        %vm4618 = vcmask 1044483
        %v4619 = vsel %vm4618, %v4616, %v4617
        %v4620 = vsel %vm4596, %v4568, %v4567
        %v4621 = vsel %vm582, %v4569, %v4570
        %vm4622 = vcmask 1046529
        %v4623 = vsel %vm4622, %v4621, %v4620
        %vm4624 = vcmask 1046531
        %v4625 = vsel %vm4624, %v4619, %v4623
        %v4627 = vrot.slane %v4625, 3
        %v4628 = vunpack.i.l.s16 %v4589
        %v4629 = vunpack.i.h.s16 %v4589
        %v4630 = vunpack.i.l.s16 %v4603
        %v4631 = vunpack.i.h.s16 %v4603
        %v4632 = vunpack.i.l.s16 %v4615
        %v4633 = vunpack.i.h.s16 %v4615
        %v4634 = vunpack.i.l.s16 %v4627
        %v4635 = vunpack.i.h.s16 %v4627
        %v4636 = vpack.i.b16 %v4628, %v4628
        %v4637 = vpack.i.b16 %v4629, %v4629
        %v4638 = vpack.i.b16 %v4630, %v4630
        %v4639 = vpack.i.b16 %v4631, %v4631
        %v4640 = vpack.i.b16 %v4632, %v4632
        %v4641 = vpack.i.b16 %v4633, %v4633
        %v4642 = vpack.i.b16 %v4634, %v4634
        %v4643 = vpack.i.b16 %v4635, %v4635
        %vm4652 = vcmask 1040384
        %vm4653 = vsmask.f32 256
        %vm4654 = vmand %vm4652, %vm4653
        %vm4655 = vcmask 1041409
        %vm4656 = vsmask.f32 1280
        %vm4657 = vmand %vm4655, %vm4656
        %vm4658 = vmor %vm4657, %vm4654
        %vm4659 = vcmask 1042434
        %vm4660 = vsmask.f32 2304
        %vm4661 = vmand %vm4659, %vm4660
        %vm4662 = vmor %vm4661, %vm4658
        %vm4663 = vcmask 1043459
        %vm4664 = vsmask.f32 3328
        %vm4665 = vmand %vm4663, %vm4664
        %vm4666 = vmor %vm4665, %vm4662
        %vm4667 = vcmask 1044484
        %vm4668 = vsmask.f32 4352
        %vm4669 = vmand %vm4667, %vm4668
        %vm4670 = vmor %vm4669, %vm4666
        %vm4671 = vcmask 1045509
        %vm4672 = vsmask.f32 5376
        %vm4673 = vmand %vm4671, %vm4672
        %vm4674 = vmor %vm4673, %vm4670
        %vm4675 = vcmask 1046534
        %vm4676 = vsmask.f32 6400
        %vm4677 = vmand %vm4675, %vm4676
        %vm4678 = vmor %vm4677, %vm4674
        %vm4679 = vcmask 1047559
        %vm4680 = vsmask.f32 7424
        %vm4681 = vmand %vm4679, %vm4680
        %vm4682 = vmor %vm4681, %vm4678
        %v4683 = vld [vmem:[%s492] sm:$0xff]
        %v4684 = vsel %vm4682, %v4636, %v4683
        %4685 = vst [vmem:[%s492] sm:$0xff] %v4684
        %v4686 = vld [vmem:[%s492 + $0x8] sm:$0xff]
        %v4687 = vsel %vm4682, %v4637, %v4686
        %4688 = vst [vmem:[%s492 + $0x8] sm:$0xff] %v4687
        %v4689 = vld [vmem:[%s492 + $0x10] sm:$0xff]
        %v4690 = vsel %vm4682, %v4638, %v4689
        %4691 = vst [vmem:[%s492 + $0x10] sm:$0xff] %v4690
        %v4692 = vld [vmem:[%s492 + $0x18] sm:$0xff]
        %v4693 = vsel %vm4682, %v4639, %v4692
        %4694 = vst [vmem:[%s492 + $0x18] sm:$0xff] %v4693
        %v4695 = vld [vmem:[%s492 + $0x20] sm:$0xff]
        %v4696 = vsel %vm4682, %v4640, %v4695
        %4697 = vst [vmem:[%s492 + $0x20] sm:$0xff] %v4696
        %v4698 = vld [vmem:[%s492 + $0x28] sm:$0xff]
        %v4699 = vsel %vm4682, %v4641, %v4698
        %4700 = vst [vmem:[%s492 + $0x28] sm:$0xff] %v4699
        %v4701 = vld [vmem:[%s492 + $0x30] sm:$0xff]
        %v4702 = vsel %vm4682, %v4642, %v4701
        %4703 = vst [vmem:[%s492 + $0x30] sm:$0xff] %v4702
        %v4704 = vld [vmem:[%s492 + $0x38] sm:$0xff]
        %v4705 = vsel %vm4682, %v4643, %v4704
        %4706 = vst [vmem:[%s492 + $0x38] sm:$0xff] %v4705
        %s4707 = sand.u32 %s202, 1
        %s4708 = sand.u32 %s202, 1
        %s4709 = smul.addr %s4708, 64
        %s4710 = scalar_lea.vmem [#allocation8], %s4709
        // Predicated region
        $region181: #{glconv_forward.1} parent=151 // pred_check
          %p4711 = pneg %p212
        $region182: #{glconv_forward.1} parent=151 // pred_check_branch
          %4713 = sbr.rel (%p4711) target = $region184
        $region183: #{glconv_forward.1} parent=151 // pred_region
          %s4714 = smul.addr %s22, 8
          %s4715 = smul.addr %s21, 192
          %s4716 = sadd.s32 %s4714, %s4715
          %s4717 = scalar_lea.vmem %s6, %s4716
          // Predicated region
          $region185: #{glconv_forward.1} parent=183 // pred_check
            _
          $region186: #{glconv_forward.1} parent=183 // pred_check_branch
            %4719 = sbr.rel (0) target = $region188
          $region187: #{glconv_forward.1} parent=183 // pred_region
            // Predicated region
            $region189: #{glconv_forward.1} parent=187 // pred_check
              _
            $region190: #{glconv_forward.1} parent=187 // pred_check_branch
              %4721 = sbr.rel (0) target = $region192
            $region191: #{glconv_forward.1} parent=187 // pred_region
              // Predicated region
              $region204: #{glconv_forward.1} parent=191 // pred_check
                _
              $region205: #{glconv_forward.1} parent=191 // pred_check_branch
                %4751 = sbr.rel (0) target = $region207
              $region206: #{glconv_forward.1} parent=191 // pred_region
                loop: start=0, step=1, limit=1
                $region208: #{glconv_forward.1} parent=206 // loop_pre_header
                  _
                $region209: #{glconv_forward.1} parent=206 // loop_header
                  %s4753 = sphi 0, %s4757
                  %p4754 = scmp.ge.s32.totalorder %s4753, 1
                  %s4758 = sphi %s4710, %s4710
                  %s4759 = sphi %s4717, %s4717
                $region210: #{glconv_forward.1} parent=206 // loop_header_branch
                  %4756 = sbr.rel (%p4754) target = $region214
                $region211: #{glconv_forward.1} parent=206 // loop_body
                  %v4760 = vld [vmem:[%s4758] sm:$0xff]
                  %4761 = vst [vmem:[%s4759] sm:$0xff] %v4760
                  %v4762 = vld [vmem:[%s4758 + $0x8] sm:$0xff]
                  %4763 = vst [vmem:[%s4759 + $0x18] sm:$0xff] %v4762
                  %v4764 = vld [vmem:[%s4758 + $0x10] sm:$0xff]
                  %4765 = vst [vmem:[%s4759 + $0x30] sm:$0xff] %v4764
                  %v4766 = vld [vmem:[%s4758 + $0x18] sm:$0xff]
                  %4767 = vst [vmem:[%s4759 + $0x48] sm:$0xff] %v4766
                  %v4768 = vld [vmem:[%s4758 + $0x20] sm:$0xff]
                  %4769 = vst [vmem:[%s4759 + $0x60] sm:$0xff] %v4768
                  %v4770 = vld [vmem:[%s4758 + $0x28] sm:$0xff]
                  %4771 = vst [vmem:[%s4759 + $0x78] sm:$0xff] %v4770
                  %v4772 = vld [vmem:[%s4758 + $0x30] sm:$0xff]
                  %4773 = vst [vmem:[%s4759 + $0x90] sm:$0xff] %v4772
                  %v4774 = vld [vmem:[%s4758 + $0x38] sm:$0xff]
                  %4775 = vst [vmem:[%s4759 + $0xa8] sm:$0xff] %v4774
                $region212: #{glconv_forward.1} parent=206 // loop_footer
                  %s4757 = sadd.s32 1, %s4753
                $region213: #{glconv_forward.1} parent=206 // loop_footer_branch
                  %4752 = sbr.rel target = $region209
                $region214: #{glconv_forward.1} parent=206 // loop_exit
                  _
              $region207: #{glconv_forward.1} parent=191 // pred_fallthru
                _
              // Predicated region
              $region215: #{glconv_forward.1} parent=191 // pred_check
                _
              $region216: #{glconv_forward.1} parent=191 // pred_check_branch
                %4777 = sbr.rel target = $region218
              $region217: #{glconv_forward.1} parent=191 // pred_region
                _
              $region218: #{glconv_forward.1} parent=191 // pred_fallthru
                _
            $region192: #{glconv_forward.1} parent=187 // pred_fallthru
              _
            // Predicated region
            $region193: #{glconv_forward.1} parent=187 // pred_check
              _
            $region194: #{glconv_forward.1} parent=187 // pred_check_branch
              %4723 = sbr.rel target = $region196
            $region195: #{glconv_forward.1} parent=187 // pred_region
              %s4725 = ssub.s32 256, 1
              loop: start=0, step=1, limit=1
              $region197: #{glconv_forward.1} parent=195 // loop_pre_header
                _
              $region198: #{glconv_forward.1} parent=195 // loop_header
                %s4727 = sphi 0, %s4731
                %p4728 = scmp.ge.s32.totalorder %s4727, 1
                %s4732 = sphi %s4710, %s4710
                %s4733 = sphi %s4717, %s4717
              $region199: #{glconv_forward.1} parent=195 // loop_header_branch
                %4730 = sbr.rel (%p4728) target = $region203
              $region200: #{glconv_forward.1} parent=195 // loop_body
                %v4734 = vld [vmem:[%s4732] sm:%s4725]
                %4735 = vst [vmem:[%s4733] sm:%s4725] %v4734
                %v4736 = vld [vmem:[%s4732 + $0x8] sm:%s4725]
                %4737 = vst [vmem:[%s4733 + $0x18] sm:%s4725] %v4736
                %v4738 = vld [vmem:[%s4732 + $0x10] sm:%s4725]
                %4739 = vst [vmem:[%s4733 + $0x30] sm:%s4725] %v4738
                %v4740 = vld [vmem:[%s4732 + $0x18] sm:%s4725]
                %4741 = vst [vmem:[%s4733 + $0x48] sm:%s4725] %v4740
                %v4742 = vld [vmem:[%s4732 + $0x20] sm:%s4725]
                %4743 = vst [vmem:[%s4733 + $0x60] sm:%s4725] %v4742
                %v4744 = vld [vmem:[%s4732 + $0x28] sm:%s4725]
                %4745 = vst [vmem:[%s4733 + $0x78] sm:%s4725] %v4744
                %v4746 = vld [vmem:[%s4732 + $0x30] sm:%s4725]
                %4747 = vst [vmem:[%s4733 + $0x90] sm:%s4725] %v4746
                %v4748 = vld [vmem:[%s4732 + $0x38] sm:%s4725]
                %4749 = vst [vmem:[%s4733 + $0xa8] sm:%s4725] %v4748
              $region201: #{glconv_forward.1} parent=195 // loop_footer
                %s4731 = sadd.s32 1, %s4727
              $region202: #{glconv_forward.1} parent=195 // loop_footer_branch
                %4726 = sbr.rel target = $region198
              $region203: #{glconv_forward.1} parent=195 // loop_exit
                _
            $region196: #{glconv_forward.1} parent=187 // pred_fallthru
              _
          $region188: #{glconv_forward.1} parent=183 // pred_fallthru
            _
          %4778 = vnop
        $region184: #{glconv_forward.1} parent=151 // pred_fallthru
          _
      $region152: #{glconv_forward.1} parent=5 // pred_fallthru
        _
      %p4779 = scmp.le.s32.totalorder 2, %s12
      // Predicated region
      $region219: #{glconv_forward.1} parent=5 // pred_check
        %p4780 = pneg %p4779
      $region220: #{glconv_forward.1} parent=5 // pred_check_branch
        %4782 = sbr.rel (%p4780) target = $region222
      $region221: #{glconv_forward.1} parent=5 // pred_region
        %s4783 = ssub.s32 %s12, 2
        // Predicated region
        $region223: #{glconv_forward.1} parent=221 // pred_check
          %p4784 = pneg %p218
        $region224: #{glconv_forward.1} parent=221 // pred_check_branch
          %4786 = sbr.rel (%p4784) target = $region226
        $region225: #{glconv_forward.1} parent=221 // pred_region
          %s4787 = sand.u32 %s203, 1
          %s4788 = sand.u32 %s203, 1
          %s4789 = smul.addr %s4788, 64
          %s4790 = scalar_lea.vmem [#allocation8], %s4789
        $region226: #{glconv_forward.1} parent=221 // pred_fallthru
          _
      $region222: #{glconv_forward.1} parent=5 // pred_fallthru
        _
    $region6: #{glconv_forward.1} parent=1 // loop_footer
      %s16 = sadd.s32 1, %s12
    $region7: #{glconv_forward.1} parent=1 // loop_footer_branch
      %11 = sbr.rel target = $region3
    $region8: #{glconv_forward.1} parent=1 // loop_exit
      _

</llo_original>
